<compile_context>
chip_gen: v7x
topology: tpu7x:2x2x1
jax: 0.10.0
libtpu: 0.0.40
codegen_flags: <defaults>
</compile_context>

<pallas_src>
import functools

import jax
import jax.numpy as jnp
from jax.experimental import pallas as pl
from jax.experimental.pallas import tpu as pltpu

LANES = 128
SUBLANES = 8  # f32 sublane count; narrower dtypes pack 16/32 rows per vreg.


def _sumsq_kernel(rows, block_rows, total_blocks, need_mask,
                  x_ref, o_ref, acc_ref):
    """Per-slice sum of squares.

    Grid: (slices, inner).  acc_ref is an (8, 128) f32 VMEM accumulator that
    persists across the inner ("arbitrary") reduction axis; the single
    cross-lane reduce happens once per slice in the last inner step.
    """
    c = pl.program_id(0)
    i = pl.program_id(1)
    inner = pl.num_programs(1)

    @pl.when(i == 0)
    def _():
        acc_ref[...] = jnp.zeros_like(acc_ref)

    x = x_ref[...].astype(jnp.float32)

    def fold(v):
        # (block_rows, 128) -> (8, 128): pure vreg-wise VPU adds (no XLU).
        return jnp.sum(v.reshape(block_rows // SUBLANES, SUBLANES, LANES),
                       axis=0)

    if need_mask:
        b = c * inner + i
        # Only the ragged last real block and clamped duplicate blocks need
        # the iota+select; every other step takes the unmasked fast path.
        is_edge = b >= total_blocks - 1

        @pl.when(jnp.logical_not(is_edge))
        def _():
            acc_ref[...] += fold(x * x)

        @pl.when(is_edge)
        def _():
            # Rows at or beyond `rows` are boundary padding (undefined) or a
            # duplicated clamped block -> zero them before squaring.
            valid = jnp.clip(rows - b * block_rows, 0, block_rows)
            row_ids = jax.lax.broadcasted_iota(jnp.int32, x.shape, 0)
            xm = jnp.where(row_ids < valid, x, 0.0)
            acc_ref[...] += fold(xm * xm)
    else:
        acc_ref[...] += fold(x * x)

    @pl.when(i == inner - 1)
    def _():
        o_ref[0, 0] = jnp.sum(acc_ref[...])


def _chip_defaults():
    """Returns (num_slices, target_block_bytes) for the local TPU generation."""
    try:
        kind = jax.devices()[0].device_kind.lower()
    except Exception:
        kind = ""
    if "v7" in kind:
        # 2 TensorCores/chip; 32 MiB scoped / 64 MiB physical VMEM.
        return 2, 8 * 1024 * 1024
    if "v6" in kind:
        # Single TC; 32 MiB scoped-VMEM default.
        return 1, 8 * 1024 * 1024
    # v5e / unknown: 16 MiB scoped-VMEM default -> keep blocks at ~4 MiB.
    return 1, 4 * 1024 * 1024


def l2_loss(x, loss_weight=1.0, num_slices=None, target_block_bytes=None,
            min_pallas_bytes=256 * 1024):
    """Computes loss_weight * ||x||_2 (Frobenius norm over all elements)."""
    # TODO(synk): forward-only; training use would need a custom_vjp
    # (grad = loss_weight * x / ||x||_2) since pallas_call is not
    # differentiable by default.
    x = jnp.asarray(x)
    n = x.size
    itemsize = jnp.dtype(x.dtype).itemsize
    w = jnp.asarray(loss_weight, jnp.float32)

    if n == 0:
        return w * jnp.float32(0.0)

    # dtype-aware sublane pack: 8 for f32, 16 for bf16/f16, 32 for int8/fp8.
    pack = max(SUBLANES, 32 // itemsize)
    unit = pack * LANES

    # Tiny inputs: pallas_call launch overhead dominates -> plain XLA.
    if n * itemsize < min_pallas_bytes or n < unit:
        return w * jnp.sqrt(jnp.sum(jnp.square(x.astype(jnp.float32))))

    def_slices, def_block_bytes = _chip_defaults()
    if num_slices is None:
        num_slices = def_slices
    if target_block_bytes is None:
        target_block_bytes = def_block_bytes

    flat = x.reshape(-1)
    main_elems = (n // unit) * unit

    # Ragged tail (< pack*128 elems): handled in plain JAX -- no padded
    # full-tensor rebuild; zeros never enter the kernel.
    tail_sumsq = jnp.float32(0.0)
    if main_elems < n:
        tail = jax.lax.slice(flat, (main_elems,), (n,))
        tail_sumsq = jnp.sum(jnp.square(tail.astype(jnp.float32)))

    # Prefix slice (offset 0) of the flat view; avoids writing a padded copy.
    main = flat if main_elems == n else jax.lax.slice(flat, (0,), (main_elems,))
    rows = main_elems // LANES                  # multiple of `pack`
    x2d = main.reshape(rows, LANES)             # lane-dense, native dtype

    # Block size: as big as the per-generation VMEM budget allows, rounded to
    # the dtype's sublane pack so (block_rows, 128) respects the min tile.
    block_rows = (target_block_bytes // (LANES * itemsize)) // pack * pack
    block_rows = max(pack, min(block_rows, rows))
    total_blocks = pl.cdiv(rows, block_rows)
    slices = num_slices if total_blocks >= num_slices else 1
    inner = pl.cdiv(total_blocks, slices)
    need_mask = (rows % block_rows != 0) or (total_blocks % slices != 0)

    def x_map(c, i):
        b = c * inner + i
        # Clamp padded logical blocks onto the last real block; their
        # contribution is zeroed by the in-kernel edge mask.
        return (jnp.minimum(b, total_blocks - 1), 0)

    if slices > 1 and def_slices > 1:
        dim0 = pltpu.CORE_PARALLEL        # genuinely shard across v7x's 2 TCs
    elif slices > 1:
        dim0 = pltpu.PARALLEL
    else:
        dim0 = pltpu.ARBITRARY
    dim_sems = (dim0, pltpu.ARBITRARY)

    block_bytes = block_rows * LANES * itemsize
    vmem_limit = min(2 * block_bytes + 8 * 1024 * 1024, 128 * 1024 * 1024)

    partials = pl.pallas_call(
        functools.partial(_sumsq_kernel, rows, block_rows, total_blocks,
                          need_mask),
        out_shape=jax.ShapeDtypeStruct((slices, 1), jnp.float32),
        grid_spec=pltpu.PrefetchScalarGridSpec(
            num_scalar_prefetch=0,
            grid=(slices, inner),
            in_specs=[pl.BlockSpec((block_rows, LANES), x_map)],
            out_specs=pl.BlockSpec(
                (1, 1), lambda c, i: (c, 0), memory_space=pltpu.SMEM),
            scratch_shapes=[pltpu.VMEM((SUBLANES, LANES), jnp.float32)],
        ),
        compiler_params=pltpu.CompilerParams(
            dimension_semantics=dim_sems,
            vmem_limit_bytes=int(vmem_limit),
        ),
        cost_estimate=pl.CostEstimate(
            flops=2 * main_elems,
            transcendentals=0,
            bytes_accessed=main_elems * itemsize + slices * 4,
        ),
    )(x2d)

    sumsq = jnp.sum(partials) + tail_sumsq
    # Weight + sqrt outside the kernel -> no recompile per loss_weight.
    return w * jnp.sqrt(sumsq)


if __name__ == "__main__":
    key = jax.random.PRNGKey(0)
    k1, k2, k3 = jax.random.split(key, 3)

    def ref_norm(v):
        return jnp.sqrt(jnp.sum(jnp.square(v.astype(jnp.float32))))

    # Spec-shaped small input (2, 4, 16, 16): wrapper fast path.
    x_small = jax.random.normal(k1, (2, 4, 16, 16), dtype=jnp.float32)
    out_small = jax.block_until_ready(l2_loss(x_small, loss_weight=1.0))
    assert jnp.allclose(out_small, ref_norm(x_small), rtol=1e-6, atol=1e-6), (
        out_small, ref_norm(x_small))

    # Larger aligned input: exercises the Pallas kernel path.
    x_big = jax.random.normal(k2, (64, 64, 256), dtype=jnp.float32)  # 4 MiB
    out_big = jax.block_until_ready(l2_loss(x_big, loss_weight=0.5))
    ref_big = jnp.float32(0.5) * ref_norm(x_big)
    assert jnp.allclose(out_big, ref_big, rtol=1e-5, atol=1e-5), (out_big, ref_big)

    # Ragged input with a forced small block: exercises the gated edge mask
    # and the pure-JAX tail path (no pad copy).
    x_rag = jax.random.normal(k3, (33, 129, 257), dtype=jnp.float32)
    out_rag = jax.block_until_ready(
        l2_loss(x_rag, loss_weight=1.0, target_block_bytes=1 * 1024 * 1024))
    assert jnp.allclose(out_rag, ref_norm(x_rag), rtol=1e-5, atol=1e-5), (
        out_rag, ref_norm(x_rag))

    print("KERNEL_OK")
</pallas_src>

<mosaic_0001>
module attributes {stable_mosaic.version = 11 : i64} {
  func.func @_sumsq_kernel(%arg0: i32, %arg1: i32, %arg2: memref<8192x128xf32, #tpu.memory_space<vmem>>, %arg3: memref<1x1xf32, #tpu.memory_space<smem>>, %arg4: memref<8x128xf32, #tpu.memory_space<vmem>>) attributes {dimension_semantics = [#tpu.dimension_semantics<arbitrary>, #tpu.dimension_semantics<arbitrary>], iteration_bounds = array<i64: 1, 1>, scalar_prefetch = 0 : i64, scratch_operands = 1 : i64, tpu.core_type = #tpu.core_type<tc>, window_params = [{transform_indices = @transform_0, window_bounds = array<i64: 8192, 128>}, {transform_indices = @transform_1, window_bounds = array<i64: 1, 1>}]} {
    %c0_i32 = arith.constant 0 : i32
    %0 = arith.cmpi eq, %arg1, %c0_i32 : i32
    %1 = arith.extui %0 : i1 to i32
    %c0_i32_0 = arith.constant 0 : i32
    %2 = arith.cmpi ne, %1, %c0_i32_0 : i32
    scf.if %2 {
      %cst_8 = arith.constant 0.000000e+00 : f32
      %13 = vector.broadcast %cst_8 : f32 to vector<8x128xf32>
      %c0_9 = arith.constant 0 : index
      %c0_10 = arith.constant 0 : index
      %14 = vector.load %arg4[%c0_9, %c0_10] : memref<8x128xf32, #tpu.memory_space<vmem>>, vector<8x128xf32>
      tpu.vector_store %arg4[%c0_9, %c0_10], %13 {strides = array<i32>} : memref<8x128xf32, #tpu.memory_space<vmem>>, vector<8x128xf32>,
    } else {
    }
    %c0 = arith.constant 0 : index
    %c0_1 = arith.constant 0 : index
    %3 = vector.load %arg2[%c0, %c0_1] : memref<8192x128xf32, #tpu.memory_space<vmem>>, vector<8192x128xf32>
    %c0_2 = arith.constant 0 : index
    %c0_3 = arith.constant 0 : index
    %4 = vector.load %arg4[%c0_2, %c0_3] : memref<8x128xf32, #tpu.memory_space<vmem>>, vector<8x128xf32>
    %5 = arith.mulf %3, %3 : vector<8192x128xf32>
    %6 = vector.shape_cast %5 : vector<8192x128xf32> to vector<1024x8x128xf32>
    %cst = arith.constant dense<0.000000e+00> : vector<8x128xf32>
    %7 = vector.multi_reduction <add>, %6, %cst [0] : vector<1024x8x128xf32> to vector<8x128xf32>
    %8 = arith.addf %4, %7 : vector<8x128xf32>
    %c0_4 = arith.constant 0 : index
    %c0_5 = arith.constant 0 : index
    %9 = vector.load %arg4[%c0_4, %c0_5] : memref<8x128xf32, #tpu.memory_space<vmem>>, vector<8x128xf32>
    tpu.vector_store %arg4[%c0_4, %c0_5], %8 {strides = array<i32>} : memref<8x128xf32, #tpu.memory_space<vmem>>, vector<8x128xf32>,
    %c0_i32_6 = arith.constant 0 : i32
    %10 = arith.cmpi eq, %arg1, %c0_i32_6 : i32
    %11 = arith.extui %10 : i1 to i32
    %c0_i32_7 = arith.constant 0 : i32
    %12 = arith.cmpi ne, %11, %c0_i32_7 : i32
    scf.if %12 {
      %c0_8 = arith.constant 0 : index
      %c0_9 = arith.constant 0 : index
      %13 = vector.load %arg4[%c0_8, %c0_9] : memref<8x128xf32, #tpu.memory_space<vmem>>, vector<8x128xf32>
      %14 = vector.shape_cast %13 : vector<8x128xf32> to vector<1x8x128xf32>
      %cst_10 = arith.constant dense<0.000000e+00> : vector<1xf32>
      %15 = vector.multi_reduction <add>, %14, %cst_10 [1, 2] : vector<1x8x128xf32> to vector<1xf32>
      %16 = vector.shape_cast %15 : vector<1xf32> to vector<1x1x1xf32>
      %17 = vector.extract %16[0, 0, 0] : f32 from vector<1x1x1xf32>
      %c0_11 = arith.constant 0 : index
      %c0_12 = arith.constant 0 : index
      %18 = memref.load %arg3[%c0_11, %c0_12] : memref<1x1xf32, #tpu.memory_space<smem>>
      memref.store %17, %arg3[%c0_11, %c0_12] : memref<1x1xf32, #tpu.memory_space<smem>>
    } else {
    }
    return
  }
  func.func @transform_0(%arg0: i32, %arg1: i32) -> (i32, i32) {
    %c1_i32 = arith.constant 1 : i32
    %0 = arith.muli %arg0, %c1_i32 : i32
    %1 = arith.addi %0, %arg1 : i32
    %c0_i32 = arith.constant 0 : i32
    %2 = arith.minsi %1, %c0_i32 : i32
    %c0_i32_0 = arith.constant 0 : i32
    %c0_i32_1 = arith.constant 0 : i32
    return %2, %c0_i32_0 : i32, i32
  }
  func.func @transform_1(%arg0: i32, %arg1: i32) -> (i32, i32) {
    %c0_i32 = arith.constant 0 : i32
    %c0_i32_0 = arith.constant 0 : i32
    return %arg0, %c0_i32 : i32, i32
  }
}

</mosaic_0001>

<llo_original>
// kernel: tpu_custom_call.1
$region0: #{tpu_custom_call.1}
  #allocation0 [shape = 'u32[]', space=smem, size = 0x4, offset = 0x4, fixed_abs, tag = 'smem constant byte address 0x4 - core index']
  #allocation1 [shape = 'u32[144,128]{1,0:T(1,128)}', space=vmem, size = 0x12000, scoped, tag = 'internal scratch']
  #allocation2 [shape = 'f32[8,128]{1,0:T(8,128)}', space=vmem, size = 0x1000, scoped, tag = 'scratch operand']
  %s0 = inlined_call_operand.hbm [shape: f32[8192,128], index: 0, kind: input, shape index: {}]
  %s1 = inlined_call_operand.hbm [shape: f32[1,1], index: 1, kind: output, shape index: {}]
  %s2 = sld [smem:[#allocation0]]
  $region26: #{tpu_custom_call.1} parent=0
    _
  %s4 = ssub.s32 1, %s2
  %s5 = scalar_select 0, %s4, %s2
  $region1: #{tpu_custom_call.1} parent=0
    #allocation3 [shape = 'u8[4194304]{0}', space=vmem, size = 0x400000, scoped, tag = 'input window, operand 0, single buffered']
    #allocation4 [shape = 's32[1]{0}', space=sflag, size = 0x4, scoped, tag = 'scoped memory for tpu_custom_call.1']
    #allocation5 [shape = 's32[1]{0}', space=sflag, size = 0x4, scoped, tag = 'scoped memory for tpu_custom_call.1']
    #allocation6 [shape = 'u8[512]{0}', space=smem, size = 0x200, scoped, tag = 'output window, operand 0, single buffered']
    %6 = vsyncpa [#allocation4], 0
    %7 = vsyncpa [#allocation5], 0
    // Predicated region
    $region2: #{tpu_custom_call.1} parent=1 // pred_check
      _
    $region3: #{tpu_custom_call.1} parent=1 // pred_check_branch
      %9 = sbr.rel (0) target = $region5
    $region4: #{tpu_custom_call.1} parent=1 // pred_region
      %s10 = sadd.s32 0, 0
      %p11 = scmp.lt.s32.totalorder %s10, 0
      %s12 = scalar_select %p11, %s10, 0
      %s13 = smul.u32 1024, %s12
      %s15 = ssub.s32 131072, 131072
      %16 = vsyncadd [#allocation4], %s15
      %s17 = smul.addr %s13, 128
      %s18 = scalar_lea.hbm %s0, %s17
      %s19 = sshll.u32 [#allocation3], 4
      %s20 = int_to_ptr.vmem [resolvable:$true] %s19
      %25 = dma.hbm_to_vmem [thread:$0]  %s18, 131072, %s20, [#allocation4], 128, 128, 8
    $region5: #{tpu_custom_call.1} parent=1 // pred_fallthru
      _
    // Predicated region
    $region6: #{tpu_custom_call.1} parent=1 // pred_check
      _
    $region7: #{tpu_custom_call.1} parent=1 // pred_check_branch
      %27 = sbr.rel (0) target = $region9
    $region8: #{tpu_custom_call.1} parent=1 // pred_region
      %28 = dma.done [#allocation4], 131072
    $region9: #{tpu_custom_call.1} parent=1 // pred_fallthru
      _
    %s29 = sadd.s32 0, 0
    %p30 = scmp.lt.s32.totalorder %s29, 0
    %s31 = scalar_select %p30, %s29, 0
    %s32 = smul.u32 1024, %s31
    %p33 = scmp.eq.s32.totalorder 0, 0
    // Predicated region
    $region10: #{tpu_custom_call.1} parent=1 // pred_check
      %p34 = pneg %p33
    $region11: #{tpu_custom_call.1} parent=1 // pred_check_branch
      %36 = sbr.rel (%p34) target = $region13
    $region12: #{tpu_custom_call.1} parent=1 // pred_region
      %37 = vst [vmem:[#allocation2] sm:$0xff] 0.0
    $region13: #{tpu_custom_call.1} parent=1 // pred_fallthru
      _
    %v38 = vld [vmem:[#allocation3] sm:$0xff]
    %v39 = vld [vmem:[#allocation3 + $0x8] sm:$0xff]
    %v40 = vld [vmem:[#allocation3 + $0x10] sm:$0xff]
    %v41 = vld [vmem:[#allocation3 + $0x18] sm:$0xff]
    %v42 = vld [vmem:[#allocation3 + $0x20] sm:$0xff]
    %v43 = vld [vmem:[#allocation3 + $0x28] sm:$0xff]
    %v44 = vld [vmem:[#allocation3 + $0x30] sm:$0xff]
    %v45 = vld [vmem:[#allocation3 + $0x38] sm:$0xff]
    %v46 = vld [vmem:[#allocation3 + $0x40] sm:$0xff]
    %v47 = vld [vmem:[#allocation3 + $0x48] sm:$0xff]
    %v48 = vld [vmem:[#allocation3 + $0x50] sm:$0xff]
    %v49 = vld [vmem:[#allocation3 + $0x58] sm:$0xff]
    %v50 = vld [vmem:[#allocation3 + $0x60] sm:$0xff]
    %v51 = vld [vmem:[#allocation3 + $0x68] sm:$0xff]
    %v52 = vld [vmem:[#allocation3 + $0x70] sm:$0xff]
    %v53 = vld [vmem:[#allocation3 + $0x78] sm:$0xff]
    %v54 = vld [vmem:[#allocation3 + $0x80] sm:$0xff]
    %v55 = vld [vmem:[#allocation3 + $0x88] sm:$0xff]
    %v56 = vld [vmem:[#allocation3 + $0x90] sm:$0xff]
    %v57 = vld [vmem:[#allocation3 + $0x98] sm:$0xff]
    %v58 = vld [vmem:[#allocation3 + $0xa0] sm:$0xff]
    %v59 = vld [vmem:[#allocation3 + $0xa8] sm:$0xff]
    %v60 = vld [vmem:[#allocation3 + $0xb0] sm:$0xff]
    %v61 = vld [vmem:[#allocation3 + $0xb8] sm:$0xff]
    %v62 = vld [vmem:[#allocation3 + $0xc0] sm:$0xff]
    %v63 = vld [vmem:[#allocation3 + $0xc8] sm:$0xff]
    %v64 = vld [vmem:[#allocation3 + $0xd0] sm:$0xff]
    %v65 = vld [vmem:[#allocation3 + $0xd8] sm:$0xff]
    %v66 = vld [vmem:[#allocation3 + $0xe0] sm:$0xff]
    %v67 = vld [vmem:[#allocation3 + $0xe8] sm:$0xff]
    %v68 = vld [vmem:[#allocation3 + $0xf0] sm:$0xff]
    %v69 = vld [vmem:[#allocation3 + $0xf8] sm:$0xff]
    %v70 = vld [vmem:[#allocation3 + $0x100] sm:$0xff]
    %v71 = vld [vmem:[#allocation3 + $0x108] sm:$0xff]
    %v72 = vld [vmem:[#allocation3 + $0x110] sm:$0xff]
    %v73 = vld [vmem:[#allocation3 + $0x118] sm:$0xff]
    %v74 = vld [vmem:[#allocation3 + $0x120] sm:$0xff]
    %v75 = vld [vmem:[#allocation3 + $0x128] sm:$0xff]
    %v76 = vld [vmem:[#allocation3 + $0x130] sm:$0xff]
    %v77 = vld [vmem:[#allocation3 + $0x138] sm:$0xff]
    %v78 = vld [vmem:[#allocation3 + $0x140] sm:$0xff]
    %v79 = vld [vmem:[#allocation3 + $0x148] sm:$0xff]
    %v80 = vld [vmem:[#allocation3 + $0x150] sm:$0xff]
    %v81 = vld [vmem:[#allocation3 + $0x158] sm:$0xff]
    %v82 = vld [vmem:[#allocation3 + $0x160] sm:$0xff]
    %v83 = vld [vmem:[#allocation3 + $0x168] sm:$0xff]
    %v84 = vld [vmem:[#allocation3 + $0x170] sm:$0xff]
    %v85 = vld [vmem:[#allocation3 + $0x178] sm:$0xff]
    %v86 = vld [vmem:[#allocation3 + $0x180] sm:$0xff]
    %v87 = vld [vmem:[#allocation3 + $0x188] sm:$0xff]
    %v88 = vld [vmem:[#allocation3 + $0x190] sm:$0xff]
    %v89 = vld [vmem:[#allocation3 + $0x198] sm:$0xff]
    %v90 = vld [vmem:[#allocation3 + $0x1a0] sm:$0xff]
    %v91 = vld [vmem:[#allocation3 + $0x1a8] sm:$0xff]
    %v92 = vld [vmem:[#allocation3 + $0x1b0] sm:$0xff]
    %v93 = vld [vmem:[#allocation3 + $0x1b8] sm:$0xff]
    %v94 = vld [vmem:[#allocation3 + $0x1c0] sm:$0xff]
    %v95 = vld [vmem:[#allocation3 + $0x1c8] sm:$0xff]
    %v96 = vld [vmem:[#allocation3 + $0x1d0] sm:$0xff]
    %v97 = vld [vmem:[#allocation3 + $0x1d8] sm:$0xff]
    %v98 = vld [vmem:[#allocation3 + $0x1e0] sm:$0xff]
    %v99 = vld [vmem:[#allocation3 + $0x1e8] sm:$0xff]
    %v100 = vld [vmem:[#allocation3 + $0x1f0] sm:$0xff]
    %v101 = vld [vmem:[#allocation3 + $0x1f8] sm:$0xff]
    %v102 = vld [vmem:[#allocation3 + $0x200] sm:$0xff]
    %v103 = vld [vmem:[#allocation3 + $0x208] sm:$0xff]
    %v104 = vld [vmem:[#allocation3 + $0x210] sm:$0xff]
    %v105 = vld [vmem:[#allocation3 + $0x218] sm:$0xff]
    %v106 = vld [vmem:[#allocation3 + $0x220] sm:$0xff]
    %v107 = vld [vmem:[#allocation3 + $0x228] sm:$0xff]
    %v108 = vld [vmem:[#allocation3 + $0x230] sm:$0xff]
    %v109 = vld [vmem:[#allocation3 + $0x238] sm:$0xff]
    %v110 = vld [vmem:[#allocation3 + $0x240] sm:$0xff]
    %v111 = vld [vmem:[#allocation3 + $0x248] sm:$0xff]
    %v112 = vld [vmem:[#allocation3 + $0x250] sm:$0xff]
    %v113 = vld [vmem:[#allocation3 + $0x258] sm:$0xff]
    %v114 = vld [vmem:[#allocation3 + $0x260] sm:$0xff]
    %v115 = vld [vmem:[#allocation3 + $0x268] sm:$0xff]
    %v116 = vld [vmem:[#allocation3 + $0x270] sm:$0xff]
    %v117 = vld [vmem:[#allocation3 + $0x278] sm:$0xff]
    %v118 = vld [vmem:[#allocation3 + $0x280] sm:$0xff]
    %v119 = vld [vmem:[#allocation3 + $0x288] sm:$0xff]
    %v120 = vld [vmem:[#allocation3 + $0x290] sm:$0xff]
    %v121 = vld [vmem:[#allocation3 + $0x298] sm:$0xff]
    %v122 = vld [vmem:[#allocation3 + $0x2a0] sm:$0xff]
    %v123 = vld [vmem:[#allocation3 + $0x2a8] sm:$0xff]
    %v124 = vld [vmem:[#allocation3 + $0x2b0] sm:$0xff]
    %v125 = vld [vmem:[#allocation3 + $0x2b8] sm:$0xff]
    %v126 = vld [vmem:[#allocation3 + $0x2c0] sm:$0xff]
    %v127 = vld [vmem:[#allocation3 + $0x2c8] sm:$0xff]
    %v128 = vld [vmem:[#allocation3 + $0x2d0] sm:$0xff]
    %v129 = vld [vmem:[#allocation3 + $0x2d8] sm:$0xff]
    %v130 = vld [vmem:[#allocation3 + $0x2e0] sm:$0xff]
    %v131 = vld [vmem:[#allocation3 + $0x2e8] sm:$0xff]
    %v132 = vld [vmem:[#allocation3 + $0x2f0] sm:$0xff]
    %v133 = vld [vmem:[#allocation3 + $0x2f8] sm:$0xff]
    %v134 = vld [vmem:[#allocation3 + $0x300] sm:$0xff]
    %v135 = vld [vmem:[#allocation3 + $0x308] sm:$0xff]
    %v136 = vld [vmem:[#allocation3 + $0x310] sm:$0xff]
    %v137 = vld [vmem:[#allocation3 + $0x318] sm:$0xff]
    %v138 = vld [vmem:[#allocation3 + $0x320] sm:$0xff]
    %v139 = vld [vmem:[#allocation3 + $0x328] sm:$0xff]
    %v140 = vld [vmem:[#allocation3 + $0x330] sm:$0xff]
    %v141 = vld [vmem:[#allocation3 + $0x338] sm:$0xff]
    %v142 = vld [vmem:[#allocation3 + $0x340] sm:$0xff]
    %v143 = vld [vmem:[#allocation3 + $0x348] sm:$0xff]
    %v144 = vld [vmem:[#allocation3 + $0x350] sm:$0xff]
    %v145 = vld [vmem:[#allocation3 + $0x358] sm:$0xff]
    %v146 = vld [vmem:[#allocation3 + $0x360] sm:$0xff]
    %v147 = vld [vmem:[#allocation3 + $0x368] sm:$0xff]
    %v148 = vld [vmem:[#allocation3 + $0x370] sm:$0xff]
    %v149 = vld [vmem:[#allocation3 + $0x378] sm:$0xff]
    %v150 = vld [vmem:[#allocation3 + $0x380] sm:$0xff]
    %v151 = vld [vmem:[#allocation3 + $0x388] sm:$0xff]
    %v152 = vld [vmem:[#allocation3 + $0x390] sm:$0xff]
    %v153 = vld [vmem:[#allocation3 + $0x398] sm:$0xff]
    %v154 = vld [vmem:[#allocation3 + $0x3a0] sm:$0xff]
    %v155 = vld [vmem:[#allocation3 + $0x3a8] sm:$0xff]
    %v156 = vld [vmem:[#allocation3 + $0x3b0] sm:$0xff]
    %v157 = vld [vmem:[#allocation3 + $0x3b8] sm:$0xff]
    %v158 = vld [vmem:[#allocation3 + $0x3c0] sm:$0xff]
    %v159 = vld [vmem:[#allocation3 + $0x3c8] sm:$0xff]
    %v160 = vld [vmem:[#allocation3 + $0x3d0] sm:$0xff]
    %v161 = vld [vmem:[#allocation3 + $0x3d8] sm:$0xff]
    %v162 = vld [vmem:[#allocation3 + $0x3e0] sm:$0xff]
    %v163 = vld [vmem:[#allocation3 + $0x3e8] sm:$0xff]
    %v164 = vld [vmem:[#allocation3 + $0x3f0] sm:$0xff]
    %v165 = vld [vmem:[#allocation3 + $0x3f8] sm:$0xff]
    %v166 = vld [vmem:[#allocation3 + $0x400] sm:$0xff]
    %v167 = vld [vmem:[#allocation3 + $0x408] sm:$0xff]
    %v168 = vld [vmem:[#allocation3 + $0x410] sm:$0xff]
    %v169 = vld [vmem:[#allocation3 + $0x418] sm:$0xff]
    %v170 = vld [vmem:[#allocation3 + $0x420] sm:$0xff]
    %v171 = vld [vmem:[#allocation3 + $0x428] sm:$0xff]
    %v172 = vld [vmem:[#allocation3 + $0x430] sm:$0xff]
    %v173 = vld [vmem:[#allocation3 + $0x438] sm:$0xff]
    %v174 = vld [vmem:[#allocation3 + $0x440] sm:$0xff]
    %v175 = vld [vmem:[#allocation3 + $0x448] sm:$0xff]
    %v176 = vld [vmem:[#allocation3 + $0x450] sm:$0xff]
    %v177 = vld [vmem:[#allocation3 + $0x458] sm:$0xff]
    %v178 = vld [vmem:[#allocation3 + $0x460] sm:$0xff]
    %v179 = vld [vmem:[#allocation3 + $0x468] sm:$0xff]
    %v180 = vld [vmem:[#allocation3 + $0x470] sm:$0xff]
    %v181 = vld [vmem:[#allocation3 + $0x478] sm:$0xff]
    %v182 = vld [vmem:[#allocation3 + $0x480] sm:$0xff]
    %v183 = vld [vmem:[#allocation3 + $0x488] sm:$0xff]
    %v184 = vld [vmem:[#allocation3 + $0x490] sm:$0xff]
    %v185 = vld [vmem:[#allocation3 + $0x498] sm:$0xff]
    %v186 = vld [vmem:[#allocation3 + $0x4a0] sm:$0xff]
    %v187 = vld [vmem:[#allocation3 + $0x4a8] sm:$0xff]
    %v188 = vld [vmem:[#allocation3 + $0x4b0] sm:$0xff]
    %v189 = vld [vmem:[#allocation3 + $0x4b8] sm:$0xff]
    %v190 = vld [vmem:[#allocation3 + $0x4c0] sm:$0xff]
    %v191 = vld [vmem:[#allocation3 + $0x4c8] sm:$0xff]
    %v192 = vld [vmem:[#allocation3 + $0x4d0] sm:$0xff]
    %v193 = vld [vmem:[#allocation3 + $0x4d8] sm:$0xff]
    %v194 = vld [vmem:[#allocation3 + $0x4e0] sm:$0xff]
    %v195 = vld [vmem:[#allocation3 + $0x4e8] sm:$0xff]
    %v196 = vld [vmem:[#allocation3 + $0x4f0] sm:$0xff]
    %v197 = vld [vmem:[#allocation3 + $0x4f8] sm:$0xff]
    %v198 = vld [vmem:[#allocation3 + $0x500] sm:$0xff]
    %v199 = vld [vmem:[#allocation3 + $0x508] sm:$0xff]
    %v200 = vld [vmem:[#allocation3 + $0x510] sm:$0xff]
    %v201 = vld [vmem:[#allocation3 + $0x518] sm:$0xff]
    %v202 = vld [vmem:[#allocation3 + $0x520] sm:$0xff]
    %v203 = vld [vmem:[#allocation3 + $0x528] sm:$0xff]
    %v204 = vld [vmem:[#allocation3 + $0x530] sm:$0xff]
    %v205 = vld [vmem:[#allocation3 + $0x538] sm:$0xff]
    %v206 = vld [vmem:[#allocation3 + $0x540] sm:$0xff]
    %v207 = vld [vmem:[#allocation3 + $0x548] sm:$0xff]
    %v208 = vld [vmem:[#allocation3 + $0x550] sm:$0xff]
    %v209 = vld [vmem:[#allocation3 + $0x558] sm:$0xff]
    %v210 = vld [vmem:[#allocation3 + $0x560] sm:$0xff]
    %v211 = vld [vmem:[#allocation3 + $0x568] sm:$0xff]
    %v212 = vld [vmem:[#allocation3 + $0x570] sm:$0xff]
    %v213 = vld [vmem:[#allocation3 + $0x578] sm:$0xff]
    %v214 = vld [vmem:[#allocation3 + $0x580] sm:$0xff]
    %v215 = vld [vmem:[#allocation3 + $0x588] sm:$0xff]
    %v216 = vld [vmem:[#allocation3 + $0x590] sm:$0xff]
    %v217 = vld [vmem:[#allocation3 + $0x598] sm:$0xff]
    %v218 = vld [vmem:[#allocation3 + $0x5a0] sm:$0xff]
    %v219 = vld [vmem:[#allocation3 + $0x5a8] sm:$0xff]
    %v220 = vld [vmem:[#allocation3 + $0x5b0] sm:$0xff]
    %v221 = vld [vmem:[#allocation3 + $0x5b8] sm:$0xff]
    %v222 = vld [vmem:[#allocation3 + $0x5c0] sm:$0xff]
    %v223 = vld [vmem:[#allocation3 + $0x5c8] sm:$0xff]
    %v224 = vld [vmem:[#allocation3 + $0x5d0] sm:$0xff]
    %v225 = vld [vmem:[#allocation3 + $0x5d8] sm:$0xff]
    %v226 = vld [vmem:[#allocation3 + $0x5e0] sm:$0xff]
    %v227 = vld [vmem:[#allocation3 + $0x5e8] sm:$0xff]
    %v228 = vld [vmem:[#allocation3 + $0x5f0] sm:$0xff]
    %v229 = vld [vmem:[#allocation3 + $0x5f8] sm:$0xff]
    %v230 = vld [vmem:[#allocation3 + $0x600] sm:$0xff]
    %v231 = vld [vmem:[#allocation3 + $0x608] sm:$0xff]
    %v232 = vld [vmem:[#allocation3 + $0x610] sm:$0xff]
    %v233 = vld [vmem:[#allocation3 + $0x618] sm:$0xff]
    %v234 = vld [vmem:[#allocation3 + $0x620] sm:$0xff]
    %v235 = vld [vmem:[#allocation3 + $0x628] sm:$0xff]
    %v236 = vld [vmem:[#allocation3 + $0x630] sm:$0xff]
    %v237 = vld [vmem:[#allocation3 + $0x638] sm:$0xff]
    %v238 = vld [vmem:[#allocation3 + $0x640] sm:$0xff]
    %v239 = vld [vmem:[#allocation3 + $0x648] sm:$0xff]
    %v240 = vld [vmem:[#allocation3 + $0x650] sm:$0xff]
    %v241 = vld [vmem:[#allocation3 + $0x658] sm:$0xff]
    %v242 = vld [vmem:[#allocation3 + $0x660] sm:$0xff]
    %v243 = vld [vmem:[#allocation3 + $0x668] sm:$0xff]
    %v244 = vld [vmem:[#allocation3 + $0x670] sm:$0xff]
    %v245 = vld [vmem:[#allocation3 + $0x678] sm:$0xff]
    %v246 = vld [vmem:[#allocation3 + $0x680] sm:$0xff]
    %v247 = vld [vmem:[#allocation3 + $0x688] sm:$0xff]
    %v248 = vld [vmem:[#allocation3 + $0x690] sm:$0xff]
    %v249 = vld [vmem:[#allocation3 + $0x698] sm:$0xff]
    %v250 = vld [vmem:[#allocation3 + $0x6a0] sm:$0xff]
    %v251 = vld [vmem:[#allocation3 + $0x6a8] sm:$0xff]
    %v252 = vld [vmem:[#allocation3 + $0x6b0] sm:$0xff]
    %v253 = vld [vmem:[#allocation3 + $0x6b8] sm:$0xff]
    %v254 = vld [vmem:[#allocation3 + $0x6c0] sm:$0xff]
    %v255 = vld [vmem:[#allocation3 + $0x6c8] sm:$0xff]
    %v256 = vld [vmem:[#allocation3 + $0x6d0] sm:$0xff]
    %v257 = vld [vmem:[#allocation3 + $0x6d8] sm:$0xff]
    %v258 = vld [vmem:[#allocation3 + $0x6e0] sm:$0xff]
    %v259 = vld [vmem:[#allocation3 + $0x6e8] sm:$0xff]
    %v260 = vld [vmem:[#allocation3 + $0x6f0] sm:$0xff]
    %v261 = vld [vmem:[#allocation3 + $0x6f8] sm:$0xff]
    %v262 = vld [vmem:[#allocation3 + $0x700] sm:$0xff]
    %v263 = vld [vmem:[#allocation3 + $0x708] sm:$0xff]
    %v264 = vld [vmem:[#allocation3 + $0x710] sm:$0xff]
    %v265 = vld [vmem:[#allocation3 + $0x718] sm:$0xff]
    %v266 = vld [vmem:[#allocation3 + $0x720] sm:$0xff]
    %v267 = vld [vmem:[#allocation3 + $0x728] sm:$0xff]
    %v268 = vld [vmem:[#allocation3 + $0x730] sm:$0xff]
    %v269 = vld [vmem:[#allocation3 + $0x738] sm:$0xff]
    %v270 = vld [vmem:[#allocation3 + $0x740] sm:$0xff]
    %v271 = vld [vmem:[#allocation3 + $0x748] sm:$0xff]
    %v272 = vld [vmem:[#allocation3 + $0x750] sm:$0xff]
    %v273 = vld [vmem:[#allocation3 + $0x758] sm:$0xff]
    %v274 = vld [vmem:[#allocation3 + $0x760] sm:$0xff]
    %v275 = vld [vmem:[#allocation3 + $0x768] sm:$0xff]
    %v276 = vld [vmem:[#allocation3 + $0x770] sm:$0xff]
    %v277 = vld [vmem:[#allocation3 + $0x778] sm:$0xff]
    %v278 = vld [vmem:[#allocation3 + $0x780] sm:$0xff]
    %v279 = vld [vmem:[#allocation3 + $0x788] sm:$0xff]
    %v280 = vld [vmem:[#allocation3 + $0x790] sm:$0xff]
    %v281 = vld [vmem:[#allocation3 + $0x798] sm:$0xff]
    %v282 = vld [vmem:[#allocation3 + $0x7a0] sm:$0xff]
    %v283 = vld [vmem:[#allocation3 + $0x7a8] sm:$0xff]
    %v284 = vld [vmem:[#allocation3 + $0x7b0] sm:$0xff]
    %v285 = vld [vmem:[#allocation3 + $0x7b8] sm:$0xff]
    %v286 = vld [vmem:[#allocation3 + $0x7c0] sm:$0xff]
    %v287 = vld [vmem:[#allocation3 + $0x7c8] sm:$0xff]
    %v288 = vld [vmem:[#allocation3 + $0x7d0] sm:$0xff]
    %v289 = vld [vmem:[#allocation3 + $0x7d8] sm:$0xff]
    %v290 = vld [vmem:[#allocation3 + $0x7e0] sm:$0xff]
    %v291 = vld [vmem:[#allocation3 + $0x7e8] sm:$0xff]
    %v292 = vld [vmem:[#allocation3 + $0x7f0] sm:$0xff]
    %v293 = vld [vmem:[#allocation3 + $0x7f8] sm:$0xff]
    %v294 = vld [vmem:[#allocation3 + $0x800] sm:$0xff]
    %v295 = vld [vmem:[#allocation3 + $0x808] sm:$0xff]
    %v296 = vld [vmem:[#allocation3 + $0x810] sm:$0xff]
    %v297 = vld [vmem:[#allocation3 + $0x818] sm:$0xff]
    %v298 = vld [vmem:[#allocation3 + $0x820] sm:$0xff]
    %v299 = vld [vmem:[#allocation3 + $0x828] sm:$0xff]
    %v300 = vld [vmem:[#allocation3 + $0x830] sm:$0xff]
    %v301 = vld [vmem:[#allocation3 + $0x838] sm:$0xff]
    %v302 = vld [vmem:[#allocation3 + $0x840] sm:$0xff]
    %v303 = vld [vmem:[#allocation3 + $0x848] sm:$0xff]
    %v304 = vld [vmem:[#allocation3 + $0x850] sm:$0xff]
    %v305 = vld [vmem:[#allocation3 + $0x858] sm:$0xff]
    %v306 = vld [vmem:[#allocation3 + $0x860] sm:$0xff]
    %v307 = vld [vmem:[#allocation3 + $0x868] sm:$0xff]
    %v308 = vld [vmem:[#allocation3 + $0x870] sm:$0xff]
    %v309 = vld [vmem:[#allocation3 + $0x878] sm:$0xff]
    %v310 = vld [vmem:[#allocation3 + $0x880] sm:$0xff]
    %v311 = vld [vmem:[#allocation3 + $0x888] sm:$0xff]
    %v312 = vld [vmem:[#allocation3 + $0x890] sm:$0xff]
    %v313 = vld [vmem:[#allocation3 + $0x898] sm:$0xff]
    %v314 = vld [vmem:[#allocation3 + $0x8a0] sm:$0xff]
    %v315 = vld [vmem:[#allocation3 + $0x8a8] sm:$0xff]
    %v316 = vld [vmem:[#allocation3 + $0x8b0] sm:$0xff]
    %v317 = vld [vmem:[#allocation3 + $0x8b8] sm:$0xff]
    %v318 = vld [vmem:[#allocation3 + $0x8c0] sm:$0xff]
    %v319 = vld [vmem:[#allocation3 + $0x8c8] sm:$0xff]
    %v320 = vld [vmem:[#allocation3 + $0x8d0] sm:$0xff]
    %v321 = vld [vmem:[#allocation3 + $0x8d8] sm:$0xff]
    %v322 = vld [vmem:[#allocation3 + $0x8e0] sm:$0xff]
    %v323 = vld [vmem:[#allocation3 + $0x8e8] sm:$0xff]
    %v324 = vld [vmem:[#allocation3 + $0x8f0] sm:$0xff]
    %v325 = vld [vmem:[#allocation3 + $0x8f8] sm:$0xff]
    %v326 = vld [vmem:[#allocation3 + $0x900] sm:$0xff]
    %v327 = vld [vmem:[#allocation3 + $0x908] sm:$0xff]
    %v328 = vld [vmem:[#allocation3 + $0x910] sm:$0xff]
    %v329 = vld [vmem:[#allocation3 + $0x918] sm:$0xff]
    %v330 = vld [vmem:[#allocation3 + $0x920] sm:$0xff]
    %v331 = vld [vmem:[#allocation3 + $0x928] sm:$0xff]
    %v332 = vld [vmem:[#allocation3 + $0x930] sm:$0xff]
    %v333 = vld [vmem:[#allocation3 + $0x938] sm:$0xff]
    %v334 = vld [vmem:[#allocation3 + $0x940] sm:$0xff]
    %v335 = vld [vmem:[#allocation3 + $0x948] sm:$0xff]
    %v336 = vld [vmem:[#allocation3 + $0x950] sm:$0xff]
    %v337 = vld [vmem:[#allocation3 + $0x958] sm:$0xff]
    %v338 = vld [vmem:[#allocation3 + $0x960] sm:$0xff]
    %v339 = vld [vmem:[#allocation3 + $0x968] sm:$0xff]
    %v340 = vld [vmem:[#allocation3 + $0x970] sm:$0xff]
    %v341 = vld [vmem:[#allocation3 + $0x978] sm:$0xff]
    %v342 = vld [vmem:[#allocation3 + $0x980] sm:$0xff]
    %v343 = vld [vmem:[#allocation3 + $0x988] sm:$0xff]
    %v344 = vld [vmem:[#allocation3 + $0x990] sm:$0xff]
    %v345 = vld [vmem:[#allocation3 + $0x998] sm:$0xff]
    %v346 = vld [vmem:[#allocation3 + $0x9a0] sm:$0xff]
    %v347 = vld [vmem:[#allocation3 + $0x9a8] sm:$0xff]
    %v348 = vld [vmem:[#allocation3 + $0x9b0] sm:$0xff]
    %v349 = vld [vmem:[#allocation3 + $0x9b8] sm:$0xff]
    %v350 = vld [vmem:[#allocation3 + $0x9c0] sm:$0xff]
    %v351 = vld [vmem:[#allocation3 + $0x9c8] sm:$0xff]
    %v352 = vld [vmem:[#allocation3 + $0x9d0] sm:$0xff]
    %v353 = vld [vmem:[#allocation3 + $0x9d8] sm:$0xff]
    %v354 = vld [vmem:[#allocation3 + $0x9e0] sm:$0xff]
    %v355 = vld [vmem:[#allocation3 + $0x9e8] sm:$0xff]
    %v356 = vld [vmem:[#allocation3 + $0x9f0] sm:$0xff]
    %v357 = vld [vmem:[#allocation3 + $0x9f8] sm:$0xff]
    %v358 = vld [vmem:[#allocation3 + $0xa00] sm:$0xff]
    %v359 = vld [vmem:[#allocation3 + $0xa08] sm:$0xff]
    %v360 = vld [vmem:[#allocation3 + $0xa10] sm:$0xff]
    %v361 = vld [vmem:[#allocation3 + $0xa18] sm:$0xff]
    %v362 = vld [vmem:[#allocation3 + $0xa20] sm:$0xff]
    %v363 = vld [vmem:[#allocation3 + $0xa28] sm:$0xff]
    %v364 = vld [vmem:[#allocation3 + $0xa30] sm:$0xff]
    %v365 = vld [vmem:[#allocation3 + $0xa38] sm:$0xff]
    %v366 = vld [vmem:[#allocation3 + $0xa40] sm:$0xff]
    %v367 = vld [vmem:[#allocation3 + $0xa48] sm:$0xff]
    %v368 = vld [vmem:[#allocation3 + $0xa50] sm:$0xff]
    %v369 = vld [vmem:[#allocation3 + $0xa58] sm:$0xff]
    %v370 = vld [vmem:[#allocation3 + $0xa60] sm:$0xff]
    %v371 = vld [vmem:[#allocation3 + $0xa68] sm:$0xff]
    %v372 = vld [vmem:[#allocation3 + $0xa70] sm:$0xff]
    %v373 = vld [vmem:[#allocation3 + $0xa78] sm:$0xff]
    %v374 = vld [vmem:[#allocation3 + $0xa80] sm:$0xff]
    %v375 = vld [vmem:[#allocation3 + $0xa88] sm:$0xff]
    %v376 = vld [vmem:[#allocation3 + $0xa90] sm:$0xff]
    %v377 = vld [vmem:[#allocation3 + $0xa98] sm:$0xff]
    %v378 = vld [vmem:[#allocation3 + $0xaa0] sm:$0xff]
    %v379 = vld [vmem:[#allocation3 + $0xaa8] sm:$0xff]
    %v380 = vld [vmem:[#allocation3 + $0xab0] sm:$0xff]
    %v381 = vld [vmem:[#allocation3 + $0xab8] sm:$0xff]
    %v382 = vld [vmem:[#allocation3 + $0xac0] sm:$0xff]
    %v383 = vld [vmem:[#allocation3 + $0xac8] sm:$0xff]
    %v384 = vld [vmem:[#allocation3 + $0xad0] sm:$0xff]
    %v385 = vld [vmem:[#allocation3 + $0xad8] sm:$0xff]
    %v386 = vld [vmem:[#allocation3 + $0xae0] sm:$0xff]
    %v387 = vld [vmem:[#allocation3 + $0xae8] sm:$0xff]
    %v388 = vld [vmem:[#allocation3 + $0xaf0] sm:$0xff]
    %v389 = vld [vmem:[#allocation3 + $0xaf8] sm:$0xff]
    %v390 = vld [vmem:[#allocation3 + $0xb00] sm:$0xff]
    %v391 = vld [vmem:[#allocation3 + $0xb08] sm:$0xff]
    %v392 = vld [vmem:[#allocation3 + $0xb10] sm:$0xff]
    %v393 = vld [vmem:[#allocation3 + $0xb18] sm:$0xff]
    %v394 = vld [vmem:[#allocation3 + $0xb20] sm:$0xff]
    %v395 = vld [vmem:[#allocation3 + $0xb28] sm:$0xff]
    %v396 = vld [vmem:[#allocation3 + $0xb30] sm:$0xff]
    %v397 = vld [vmem:[#allocation3 + $0xb38] sm:$0xff]
    %v398 = vld [vmem:[#allocation3 + $0xb40] sm:$0xff]
    %v399 = vld [vmem:[#allocation3 + $0xb48] sm:$0xff]
    %v400 = vld [vmem:[#allocation3 + $0xb50] sm:$0xff]
    %v401 = vld [vmem:[#allocation3 + $0xb58] sm:$0xff]
    %v402 = vld [vmem:[#allocation3 + $0xb60] sm:$0xff]
    %v403 = vld [vmem:[#allocation3 + $0xb68] sm:$0xff]
    %v404 = vld [vmem:[#allocation3 + $0xb70] sm:$0xff]
    %v405 = vld [vmem:[#allocation3 + $0xb78] sm:$0xff]
    %v406 = vld [vmem:[#allocation3 + $0xb80] sm:$0xff]
    %v407 = vld [vmem:[#allocation3 + $0xb88] sm:$0xff]
    %v408 = vld [vmem:[#allocation3 + $0xb90] sm:$0xff]
    %v409 = vld [vmem:[#allocation3 + $0xb98] sm:$0xff]
    %v410 = vld [vmem:[#allocation3 + $0xba0] sm:$0xff]
    %v411 = vld [vmem:[#allocation3 + $0xba8] sm:$0xff]
    %v412 = vld [vmem:[#allocation3 + $0xbb0] sm:$0xff]
    %v413 = vld [vmem:[#allocation3 + $0xbb8] sm:$0xff]
    %v414 = vld [vmem:[#allocation3 + $0xbc0] sm:$0xff]
    %v415 = vld [vmem:[#allocation3 + $0xbc8] sm:$0xff]
    %v416 = vld [vmem:[#allocation3 + $0xbd0] sm:$0xff]
    %v417 = vld [vmem:[#allocation3 + $0xbd8] sm:$0xff]
    %v418 = vld [vmem:[#allocation3 + $0xbe0] sm:$0xff]
    %v419 = vld [vmem:[#allocation3 + $0xbe8] sm:$0xff]
    %v420 = vld [vmem:[#allocation3 + $0xbf0] sm:$0xff]
    %v421 = vld [vmem:[#allocation3 + $0xbf8] sm:$0xff]
    %v422 = vld [vmem:[#allocation3 + $0xc00] sm:$0xff]
    %v423 = vld [vmem:[#allocation3 + $0xc08] sm:$0xff]
    %v424 = vld [vmem:[#allocation3 + $0xc10] sm:$0xff]
    %v425 = vld [vmem:[#allocation3 + $0xc18] sm:$0xff]
    %v426 = vld [vmem:[#allocation3 + $0xc20] sm:$0xff]
    %v427 = vld [vmem:[#allocation3 + $0xc28] sm:$0xff]
    %v428 = vld [vmem:[#allocation3 + $0xc30] sm:$0xff]
    %v429 = vld [vmem:[#allocation3 + $0xc38] sm:$0xff]
    %v430 = vld [vmem:[#allocation3 + $0xc40] sm:$0xff]
    %v431 = vld [vmem:[#allocation3 + $0xc48] sm:$0xff]
    %v432 = vld [vmem:[#allocation3 + $0xc50] sm:$0xff]
    %v433 = vld [vmem:[#allocation3 + $0xc58] sm:$0xff]
    %v434 = vld [vmem:[#allocation3 + $0xc60] sm:$0xff]
    %v435 = vld [vmem:[#allocation3 + $0xc68] sm:$0xff]
    %v436 = vld [vmem:[#allocation3 + $0xc70] sm:$0xff]
    %v437 = vld [vmem:[#allocation3 + $0xc78] sm:$0xff]
    %v438 = vld [vmem:[#allocation3 + $0xc80] sm:$0xff]
    %v439 = vld [vmem:[#allocation3 + $0xc88] sm:$0xff]
    %v440 = vld [vmem:[#allocation3 + $0xc90] sm:$0xff]
    %v441 = vld [vmem:[#allocation3 + $0xc98] sm:$0xff]
    %v442 = vld [vmem:[#allocation3 + $0xca0] sm:$0xff]
    %v443 = vld [vmem:[#allocation3 + $0xca8] sm:$0xff]
    %v444 = vld [vmem:[#allocation3 + $0xcb0] sm:$0xff]
    %v445 = vld [vmem:[#allocation3 + $0xcb8] sm:$0xff]
    %v446 = vld [vmem:[#allocation3 + $0xcc0] sm:$0xff]
    %v447 = vld [vmem:[#allocation3 + $0xcc8] sm:$0xff]
    %v448 = vld [vmem:[#allocation3 + $0xcd0] sm:$0xff]
    %v449 = vld [vmem:[#allocation3 + $0xcd8] sm:$0xff]
    %v450 = vld [vmem:[#allocation3 + $0xce0] sm:$0xff]
    %v451 = vld [vmem:[#allocation3 + $0xce8] sm:$0xff]
    %v452 = vld [vmem:[#allocation3 + $0xcf0] sm:$0xff]
    %v453 = vld [vmem:[#allocation3 + $0xcf8] sm:$0xff]
    %v454 = vld [vmem:[#allocation3 + $0xd00] sm:$0xff]
    %v455 = vld [vmem:[#allocation3 + $0xd08] sm:$0xff]
    %v456 = vld [vmem:[#allocation3 + $0xd10] sm:$0xff]
    %v457 = vld [vmem:[#allocation3 + $0xd18] sm:$0xff]
    %v458 = vld [vmem:[#allocation3 + $0xd20] sm:$0xff]
    %v459 = vld [vmem:[#allocation3 + $0xd28] sm:$0xff]
    %v460 = vld [vmem:[#allocation3 + $0xd30] sm:$0xff]
    %v461 = vld [vmem:[#allocation3 + $0xd38] sm:$0xff]
    %v462 = vld [vmem:[#allocation3 + $0xd40] sm:$0xff]
    %v463 = vld [vmem:[#allocation3 + $0xd48] sm:$0xff]
    %v464 = vld [vmem:[#allocation3 + $0xd50] sm:$0xff]
    %v465 = vld [vmem:[#allocation3 + $0xd58] sm:$0xff]
    %v466 = vld [vmem:[#allocation3 + $0xd60] sm:$0xff]
    %v467 = vld [vmem:[#allocation3 + $0xd68] sm:$0xff]
    %v468 = vld [vmem:[#allocation3 + $0xd70] sm:$0xff]
    %v469 = vld [vmem:[#allocation3 + $0xd78] sm:$0xff]
    %v470 = vld [vmem:[#allocation3 + $0xd80] sm:$0xff]
    %v471 = vld [vmem:[#allocation3 + $0xd88] sm:$0xff]
    %v472 = vld [vmem:[#allocation3 + $0xd90] sm:$0xff]
    %v473 = vld [vmem:[#allocation3 + $0xd98] sm:$0xff]
    %v474 = vld [vmem:[#allocation3 + $0xda0] sm:$0xff]
    %v475 = vld [vmem:[#allocation3 + $0xda8] sm:$0xff]
    %v476 = vld [vmem:[#allocation3 + $0xdb0] sm:$0xff]
    %v477 = vld [vmem:[#allocation3 + $0xdb8] sm:$0xff]
    %v478 = vld [vmem:[#allocation3 + $0xdc0] sm:$0xff]
    %v479 = vld [vmem:[#allocation3 + $0xdc8] sm:$0xff]
    %v480 = vld [vmem:[#allocation3 + $0xdd0] sm:$0xff]
    %v481 = vld [vmem:[#allocation3 + $0xdd8] sm:$0xff]
    %v482 = vld [vmem:[#allocation3 + $0xde0] sm:$0xff]
    %v483 = vld [vmem:[#allocation3 + $0xde8] sm:$0xff]
    %v484 = vld [vmem:[#allocation3 + $0xdf0] sm:$0xff]
    %v485 = vld [vmem:[#allocation3 + $0xdf8] sm:$0xff]
    %v486 = vld [vmem:[#allocation3 + $0xe00] sm:$0xff]
    %v487 = vld [vmem:[#allocation3 + $0xe08] sm:$0xff]
    %v488 = vld [vmem:[#allocation3 + $0xe10] sm:$0xff]
    %v489 = vld [vmem:[#allocation3 + $0xe18] sm:$0xff]
    %v490 = vld [vmem:[#allocation3 + $0xe20] sm:$0xff]
    %v491 = vld [vmem:[#allocation3 + $0xe28] sm:$0xff]
    %v492 = vld [vmem:[#allocation3 + $0xe30] sm:$0xff]
    %v493 = vld [vmem:[#allocation3 + $0xe38] sm:$0xff]
    %v494 = vld [vmem:[#allocation3 + $0xe40] sm:$0xff]
    %v495 = vld [vmem:[#allocation3 + $0xe48] sm:$0xff]
    %v496 = vld [vmem:[#allocation3 + $0xe50] sm:$0xff]
    %v497 = vld [vmem:[#allocation3 + $0xe58] sm:$0xff]
    %v498 = vld [vmem:[#allocation3 + $0xe60] sm:$0xff]
    %v499 = vld [vmem:[#allocation3 + $0xe68] sm:$0xff]
    %v500 = vld [vmem:[#allocation3 + $0xe70] sm:$0xff]
    %v501 = vld [vmem:[#allocation3 + $0xe78] sm:$0xff]
    %v502 = vld [vmem:[#allocation3 + $0xe80] sm:$0xff]
    %v503 = vld [vmem:[#allocation3 + $0xe88] sm:$0xff]
    %v504 = vld [vmem:[#allocation3 + $0xe90] sm:$0xff]
    %v505 = vld [vmem:[#allocation3 + $0xe98] sm:$0xff]
    %v506 = vld [vmem:[#allocation3 + $0xea0] sm:$0xff]
    %v507 = vld [vmem:[#allocation3 + $0xea8] sm:$0xff]
    %v508 = vld [vmem:[#allocation3 + $0xeb0] sm:$0xff]
    %v509 = vld [vmem:[#allocation3 + $0xeb8] sm:$0xff]
    %v510 = vld [vmem:[#allocation3 + $0xec0] sm:$0xff]
    %v511 = vld [vmem:[#allocation3 + $0xec8] sm:$0xff]
    %v512 = vld [vmem:[#allocation3 + $0xed0] sm:$0xff]
    %v513 = vld [vmem:[#allocation3 + $0xed8] sm:$0xff]
    %v514 = vld [vmem:[#allocation3 + $0xee0] sm:$0xff]
    %v515 = vld [vmem:[#allocation3 + $0xee8] sm:$0xff]
    %v516 = vld [vmem:[#allocation3 + $0xef0] sm:$0xff]
    %v517 = vld [vmem:[#allocation3 + $0xef8] sm:$0xff]
    %v518 = vld [vmem:[#allocation3 + $0xf00] sm:$0xff]
    %v519 = vld [vmem:[#allocation3 + $0xf08] sm:$0xff]
    %v520 = vld [vmem:[#allocation3 + $0xf10] sm:$0xff]
    %v521 = vld [vmem:[#allocation3 + $0xf18] sm:$0xff]
    %v522 = vld [vmem:[#allocation3 + $0xf20] sm:$0xff]
    %v523 = vld [vmem:[#allocation3 + $0xf28] sm:$0xff]
    %v524 = vld [vmem:[#allocation3 + $0xf30] sm:$0xff]
    %v525 = vld [vmem:[#allocation3 + $0xf38] sm:$0xff]
    %v526 = vld [vmem:[#allocation3 + $0xf40] sm:$0xff]
    %v527 = vld [vmem:[#allocation3 + $0xf48] sm:$0xff]
    %v528 = vld [vmem:[#allocation3 + $0xf50] sm:$0xff]
    %v529 = vld [vmem:[#allocation3 + $0xf58] sm:$0xff]
    %v530 = vld [vmem:[#allocation3 + $0xf60] sm:$0xff]
    %v531 = vld [vmem:[#allocation3 + $0xf68] sm:$0xff]
    %v532 = vld [vmem:[#allocation3 + $0xf70] sm:$0xff]
    %v533 = vld [vmem:[#allocation3 + $0xf78] sm:$0xff]
    %v534 = vld [vmem:[#allocation3 + $0xf80] sm:$0xff]
    %v535 = vld [vmem:[#allocation3 + $0xf88] sm:$0xff]
    %v536 = vld [vmem:[#allocation3 + $0xf90] sm:$0xff]
    %v537 = vld [vmem:[#allocation3 + $0xf98] sm:$0xff]
    %v538 = vld [vmem:[#allocation3 + $0xfa0] sm:$0xff]
    %v539 = vld [vmem:[#allocation3 + $0xfa8] sm:$0xff]
    %v540 = vld [vmem:[#allocation3 + $0xfb0] sm:$0xff]
    %v541 = vld [vmem:[#allocation3 + $0xfb8] sm:$0xff]
    %v542 = vld [vmem:[#allocation3 + $0xfc0] sm:$0xff]
    %v543 = vld [vmem:[#allocation3 + $0xfc8] sm:$0xff]
    %v544 = vld [vmem:[#allocation3 + $0xfd0] sm:$0xff]
    %v545 = vld [vmem:[#allocation3 + $0xfd8] sm:$0xff]
    %v546 = vld [vmem:[#allocation3 + $0xfe0] sm:$0xff]
    %v547 = vld [vmem:[#allocation3 + $0xfe8] sm:$0xff]
    %v548 = vld [vmem:[#allocation3 + $0xff0] sm:$0xff]
    %v549 = vld [vmem:[#allocation3 + $0xff8] sm:$0xff]
    %v550 = vld [vmem:[#allocation3 + $0x1000] sm:$0xff]
    %v551 = vld [vmem:[#allocation3 + $0x1008] sm:$0xff]
    %v552 = vld [vmem:[#allocation3 + $0x1010] sm:$0xff]
    %v553 = vld [vmem:[#allocation3 + $0x1018] sm:$0xff]
    %v554 = vld [vmem:[#allocation3 + $0x1020] sm:$0xff]
    %v555 = vld [vmem:[#allocation3 + $0x1028] sm:$0xff]
    %v556 = vld [vmem:[#allocation3 + $0x1030] sm:$0xff]
    %v557 = vld [vmem:[#allocation3 + $0x1038] sm:$0xff]
    %v558 = vld [vmem:[#allocation3 + $0x1040] sm:$0xff]
    %v559 = vld [vmem:[#allocation3 + $0x1048] sm:$0xff]
    %v560 = vld [vmem:[#allocation3 + $0x1050] sm:$0xff]
    %v561 = vld [vmem:[#allocation3 + $0x1058] sm:$0xff]
    %v562 = vld [vmem:[#allocation3 + $0x1060] sm:$0xff]
    %v563 = vld [vmem:[#allocation3 + $0x1068] sm:$0xff]
    %v564 = vld [vmem:[#allocation3 + $0x1070] sm:$0xff]
    %v565 = vld [vmem:[#allocation3 + $0x1078] sm:$0xff]
    %v566 = vld [vmem:[#allocation3 + $0x1080] sm:$0xff]
    %v567 = vld [vmem:[#allocation3 + $0x1088] sm:$0xff]
    %v568 = vld [vmem:[#allocation3 + $0x1090] sm:$0xff]
    %v569 = vld [vmem:[#allocation3 + $0x1098] sm:$0xff]
    %v570 = vld [vmem:[#allocation3 + $0x10a0] sm:$0xff]
    %v571 = vld [vmem:[#allocation3 + $0x10a8] sm:$0xff]
    %v572 = vld [vmem:[#allocation3 + $0x10b0] sm:$0xff]
    %v573 = vld [vmem:[#allocation3 + $0x10b8] sm:$0xff]
    %v574 = vld [vmem:[#allocation3 + $0x10c0] sm:$0xff]
    %v575 = vld [vmem:[#allocation3 + $0x10c8] sm:$0xff]
    %v576 = vld [vmem:[#allocation3 + $0x10d0] sm:$0xff]
    %v577 = vld [vmem:[#allocation3 + $0x10d8] sm:$0xff]
    %v578 = vld [vmem:[#allocation3 + $0x10e0] sm:$0xff]
    %v579 = vld [vmem:[#allocation3 + $0x10e8] sm:$0xff]
    %v580 = vld [vmem:[#allocation3 + $0x10f0] sm:$0xff]
    %v581 = vld [vmem:[#allocation3 + $0x10f8] sm:$0xff]
    %v582 = vld [vmem:[#allocation3 + $0x1100] sm:$0xff]
    %v583 = vld [vmem:[#allocation3 + $0x1108] sm:$0xff]
    %v584 = vld [vmem:[#allocation3 + $0x1110] sm:$0xff]
    %v585 = vld [vmem:[#allocation3 + $0x1118] sm:$0xff]
    %v586 = vld [vmem:[#allocation3 + $0x1120] sm:$0xff]
    %v587 = vld [vmem:[#allocation3 + $0x1128] sm:$0xff]
    %v588 = vld [vmem:[#allocation3 + $0x1130] sm:$0xff]
    %v589 = vld [vmem:[#allocation3 + $0x1138] sm:$0xff]
    %v590 = vld [vmem:[#allocation3 + $0x1140] sm:$0xff]
    %v591 = vld [vmem:[#allocation3 + $0x1148] sm:$0xff]
    %v592 = vld [vmem:[#allocation3 + $0x1150] sm:$0xff]
    %v593 = vld [vmem:[#allocation3 + $0x1158] sm:$0xff]
    %v594 = vld [vmem:[#allocation3 + $0x1160] sm:$0xff]
    %v595 = vld [vmem:[#allocation3 + $0x1168] sm:$0xff]
    %v596 = vld [vmem:[#allocation3 + $0x1170] sm:$0xff]
    %v597 = vld [vmem:[#allocation3 + $0x1178] sm:$0xff]
    %v598 = vld [vmem:[#allocation3 + $0x1180] sm:$0xff]
    %v599 = vld [vmem:[#allocation3 + $0x1188] sm:$0xff]
    %v600 = vld [vmem:[#allocation3 + $0x1190] sm:$0xff]
    %v601 = vld [vmem:[#allocation3 + $0x1198] sm:$0xff]
    %v602 = vld [vmem:[#allocation3 + $0x11a0] sm:$0xff]
    %v603 = vld [vmem:[#allocation3 + $0x11a8] sm:$0xff]
    %v604 = vld [vmem:[#allocation3 + $0x11b0] sm:$0xff]
    %v605 = vld [vmem:[#allocation3 + $0x11b8] sm:$0xff]
    %v606 = vld [vmem:[#allocation3 + $0x11c0] sm:$0xff]
    %v607 = vld [vmem:[#allocation3 + $0x11c8] sm:$0xff]
    %v608 = vld [vmem:[#allocation3 + $0x11d0] sm:$0xff]
    %v609 = vld [vmem:[#allocation3 + $0x11d8] sm:$0xff]
    %v610 = vld [vmem:[#allocation3 + $0x11e0] sm:$0xff]
    %v611 = vld [vmem:[#allocation3 + $0x11e8] sm:$0xff]
    %v612 = vld [vmem:[#allocation3 + $0x11f0] sm:$0xff]
    %v613 = vld [vmem:[#allocation3 + $0x11f8] sm:$0xff]
    %v614 = vld [vmem:[#allocation3 + $0x1200] sm:$0xff]
    %v615 = vld [vmem:[#allocation3 + $0x1208] sm:$0xff]
    %v616 = vld [vmem:[#allocation3 + $0x1210] sm:$0xff]
    %v617 = vld [vmem:[#allocation3 + $0x1218] sm:$0xff]
    %v618 = vld [vmem:[#allocation3 + $0x1220] sm:$0xff]
    %v619 = vld [vmem:[#allocation3 + $0x1228] sm:$0xff]
    %v620 = vld [vmem:[#allocation3 + $0x1230] sm:$0xff]
    %v621 = vld [vmem:[#allocation3 + $0x1238] sm:$0xff]
    %v622 = vld [vmem:[#allocation3 + $0x1240] sm:$0xff]
    %v623 = vld [vmem:[#allocation3 + $0x1248] sm:$0xff]
    %v624 = vld [vmem:[#allocation3 + $0x1250] sm:$0xff]
    %v625 = vld [vmem:[#allocation3 + $0x1258] sm:$0xff]
    %v626 = vld [vmem:[#allocation3 + $0x1260] sm:$0xff]
    %v627 = vld [vmem:[#allocation3 + $0x1268] sm:$0xff]
    %v628 = vld [vmem:[#allocation3 + $0x1270] sm:$0xff]
    %v629 = vld [vmem:[#allocation3 + $0x1278] sm:$0xff]
    %v630 = vld [vmem:[#allocation3 + $0x1280] sm:$0xff]
    %v631 = vld [vmem:[#allocation3 + $0x1288] sm:$0xff]
    %v632 = vld [vmem:[#allocation3 + $0x1290] sm:$0xff]
    %v633 = vld [vmem:[#allocation3 + $0x1298] sm:$0xff]
    %v634 = vld [vmem:[#allocation3 + $0x12a0] sm:$0xff]
    %v635 = vld [vmem:[#allocation3 + $0x12a8] sm:$0xff]
    %v636 = vld [vmem:[#allocation3 + $0x12b0] sm:$0xff]
    %v637 = vld [vmem:[#allocation3 + $0x12b8] sm:$0xff]
    %v638 = vld [vmem:[#allocation3 + $0x12c0] sm:$0xff]
    %v639 = vld [vmem:[#allocation3 + $0x12c8] sm:$0xff]
    %v640 = vld [vmem:[#allocation3 + $0x12d0] sm:$0xff]
    %v641 = vld [vmem:[#allocation3 + $0x12d8] sm:$0xff]
    %v642 = vld [vmem:[#allocation3 + $0x12e0] sm:$0xff]
    %v643 = vld [vmem:[#allocation3 + $0x12e8] sm:$0xff]
    %v644 = vld [vmem:[#allocation3 + $0x12f0] sm:$0xff]
    %v645 = vld [vmem:[#allocation3 + $0x12f8] sm:$0xff]
    %v646 = vld [vmem:[#allocation3 + $0x1300] sm:$0xff]
    %v647 = vld [vmem:[#allocation3 + $0x1308] sm:$0xff]
    %v648 = vld [vmem:[#allocation3 + $0x1310] sm:$0xff]
    %v649 = vld [vmem:[#allocation3 + $0x1318] sm:$0xff]
    %v650 = vld [vmem:[#allocation3 + $0x1320] sm:$0xff]
    %v651 = vld [vmem:[#allocation3 + $0x1328] sm:$0xff]
    %v652 = vld [vmem:[#allocation3 + $0x1330] sm:$0xff]
    %v653 = vld [vmem:[#allocation3 + $0x1338] sm:$0xff]
    %v654 = vld [vmem:[#allocation3 + $0x1340] sm:$0xff]
    %v655 = vld [vmem:[#allocation3 + $0x1348] sm:$0xff]
    %v656 = vld [vmem:[#allocation3 + $0x1350] sm:$0xff]
    %v657 = vld [vmem:[#allocation3 + $0x1358] sm:$0xff]
    %v658 = vld [vmem:[#allocation3 + $0x1360] sm:$0xff]
    %v659 = vld [vmem:[#allocation3 + $0x1368] sm:$0xff]
    %v660 = vld [vmem:[#allocation3 + $0x1370] sm:$0xff]
    %v661 = vld [vmem:[#allocation3 + $0x1378] sm:$0xff]
    %v662 = vld [vmem:[#allocation3 + $0x1380] sm:$0xff]
    %v663 = vld [vmem:[#allocation3 + $0x1388] sm:$0xff]
    %v664 = vld [vmem:[#allocation3 + $0x1390] sm:$0xff]
    %v665 = vld [vmem:[#allocation3 + $0x1398] sm:$0xff]
    %v666 = vld [vmem:[#allocation3 + $0x13a0] sm:$0xff]
    %v667 = vld [vmem:[#allocation3 + $0x13a8] sm:$0xff]
    %v668 = vld [vmem:[#allocation3 + $0x13b0] sm:$0xff]
    %v669 = vld [vmem:[#allocation3 + $0x13b8] sm:$0xff]
    %v670 = vld [vmem:[#allocation3 + $0x13c0] sm:$0xff]
    %v671 = vld [vmem:[#allocation3 + $0x13c8] sm:$0xff]
    %v672 = vld [vmem:[#allocation3 + $0x13d0] sm:$0xff]
    %v673 = vld [vmem:[#allocation3 + $0x13d8] sm:$0xff]
    %v674 = vld [vmem:[#allocation3 + $0x13e0] sm:$0xff]
    %v675 = vld [vmem:[#allocation3 + $0x13e8] sm:$0xff]
    %v676 = vld [vmem:[#allocation3 + $0x13f0] sm:$0xff]
    %v677 = vld [vmem:[#allocation3 + $0x13f8] sm:$0xff]
    %v678 = vld [vmem:[#allocation3 + $0x1400] sm:$0xff]
    %v679 = vld [vmem:[#allocation3 + $0x1408] sm:$0xff]
    %v680 = vld [vmem:[#allocation3 + $0x1410] sm:$0xff]
    %v681 = vld [vmem:[#allocation3 + $0x1418] sm:$0xff]
    %v682 = vld [vmem:[#allocation3 + $0x1420] sm:$0xff]
    %v683 = vld [vmem:[#allocation3 + $0x1428] sm:$0xff]
    %v684 = vld [vmem:[#allocation3 + $0x1430] sm:$0xff]
    %v685 = vld [vmem:[#allocation3 + $0x1438] sm:$0xff]
    %v686 = vld [vmem:[#allocation3 + $0x1440] sm:$0xff]
    %v687 = vld [vmem:[#allocation3 + $0x1448] sm:$0xff]
    %v688 = vld [vmem:[#allocation3 + $0x1450] sm:$0xff]
    %v689 = vld [vmem:[#allocation3 + $0x1458] sm:$0xff]
    %v690 = vld [vmem:[#allocation3 + $0x1460] sm:$0xff]
    %v691 = vld [vmem:[#allocation3 + $0x1468] sm:$0xff]
    %v692 = vld [vmem:[#allocation3 + $0x1470] sm:$0xff]
    %v693 = vld [vmem:[#allocation3 + $0x1478] sm:$0xff]
    %v694 = vld [vmem:[#allocation3 + $0x1480] sm:$0xff]
    %v695 = vld [vmem:[#allocation3 + $0x1488] sm:$0xff]
    %v696 = vld [vmem:[#allocation3 + $0x1490] sm:$0xff]
    %v697 = vld [vmem:[#allocation3 + $0x1498] sm:$0xff]
    %v698 = vld [vmem:[#allocation3 + $0x14a0] sm:$0xff]
    %v699 = vld [vmem:[#allocation3 + $0x14a8] sm:$0xff]
    %v700 = vld [vmem:[#allocation3 + $0x14b0] sm:$0xff]
    %v701 = vld [vmem:[#allocation3 + $0x14b8] sm:$0xff]
    %v702 = vld [vmem:[#allocation3 + $0x14c0] sm:$0xff]
    %v703 = vld [vmem:[#allocation3 + $0x14c8] sm:$0xff]
    %v704 = vld [vmem:[#allocation3 + $0x14d0] sm:$0xff]
    %v705 = vld [vmem:[#allocation3 + $0x14d8] sm:$0xff]
    %v706 = vld [vmem:[#allocation3 + $0x14e0] sm:$0xff]
    %v707 = vld [vmem:[#allocation3 + $0x14e8] sm:$0xff]
    %v708 = vld [vmem:[#allocation3 + $0x14f0] sm:$0xff]
    %v709 = vld [vmem:[#allocation3 + $0x14f8] sm:$0xff]
    %v710 = vld [vmem:[#allocation3 + $0x1500] sm:$0xff]
    %v711 = vld [vmem:[#allocation3 + $0x1508] sm:$0xff]
    %v712 = vld [vmem:[#allocation3 + $0x1510] sm:$0xff]
    %v713 = vld [vmem:[#allocation3 + $0x1518] sm:$0xff]
    %v714 = vld [vmem:[#allocation3 + $0x1520] sm:$0xff]
    %v715 = vld [vmem:[#allocation3 + $0x1528] sm:$0xff]
    %v716 = vld [vmem:[#allocation3 + $0x1530] sm:$0xff]
    %v717 = vld [vmem:[#allocation3 + $0x1538] sm:$0xff]
    %v718 = vld [vmem:[#allocation3 + $0x1540] sm:$0xff]
    %v719 = vld [vmem:[#allocation3 + $0x1548] sm:$0xff]
    %v720 = vld [vmem:[#allocation3 + $0x1550] sm:$0xff]
    %v721 = vld [vmem:[#allocation3 + $0x1558] sm:$0xff]
    %v722 = vld [vmem:[#allocation3 + $0x1560] sm:$0xff]
    %v723 = vld [vmem:[#allocation3 + $0x1568] sm:$0xff]
    %v724 = vld [vmem:[#allocation3 + $0x1570] sm:$0xff]
    %v725 = vld [vmem:[#allocation3 + $0x1578] sm:$0xff]
    %v726 = vld [vmem:[#allocation3 + $0x1580] sm:$0xff]
    %v727 = vld [vmem:[#allocation3 + $0x1588] sm:$0xff]
    %v728 = vld [vmem:[#allocation3 + $0x1590] sm:$0xff]
    %v729 = vld [vmem:[#allocation3 + $0x1598] sm:$0xff]
    %v730 = vld [vmem:[#allocation3 + $0x15a0] sm:$0xff]
    %v731 = vld [vmem:[#allocation3 + $0x15a8] sm:$0xff]
    %v732 = vld [vmem:[#allocation3 + $0x15b0] sm:$0xff]
    %v733 = vld [vmem:[#allocation3 + $0x15b8] sm:$0xff]
    %v734 = vld [vmem:[#allocation3 + $0x15c0] sm:$0xff]
    %v735 = vld [vmem:[#allocation3 + $0x15c8] sm:$0xff]
    %v736 = vld [vmem:[#allocation3 + $0x15d0] sm:$0xff]
    %v737 = vld [vmem:[#allocation3 + $0x15d8] sm:$0xff]
    %v738 = vld [vmem:[#allocation3 + $0x15e0] sm:$0xff]
    %v739 = vld [vmem:[#allocation3 + $0x15e8] sm:$0xff]
    %v740 = vld [vmem:[#allocation3 + $0x15f0] sm:$0xff]
    %v741 = vld [vmem:[#allocation3 + $0x15f8] sm:$0xff]
    %v742 = vld [vmem:[#allocation3 + $0x1600] sm:$0xff]
    %v743 = vld [vmem:[#allocation3 + $0x1608] sm:$0xff]
    %v744 = vld [vmem:[#allocation3 + $0x1610] sm:$0xff]
    %v745 = vld [vmem:[#allocation3 + $0x1618] sm:$0xff]
    %v746 = vld [vmem:[#allocation3 + $0x1620] sm:$0xff]
    %v747 = vld [vmem:[#allocation3 + $0x1628] sm:$0xff]
    %v748 = vld [vmem:[#allocation3 + $0x1630] sm:$0xff]
    %v749 = vld [vmem:[#allocation3 + $0x1638] sm:$0xff]
    %v750 = vld [vmem:[#allocation3 + $0x1640] sm:$0xff]
    %v751 = vld [vmem:[#allocation3 + $0x1648] sm:$0xff]
    %v752 = vld [vmem:[#allocation3 + $0x1650] sm:$0xff]
    %v753 = vld [vmem:[#allocation3 + $0x1658] sm:$0xff]
    %v754 = vld [vmem:[#allocation3 + $0x1660] sm:$0xff]
    %v755 = vld [vmem:[#allocation3 + $0x1668] sm:$0xff]
    %v756 = vld [vmem:[#allocation3 + $0x1670] sm:$0xff]
    %v757 = vld [vmem:[#allocation3 + $0x1678] sm:$0xff]
    %v758 = vld [vmem:[#allocation3 + $0x1680] sm:$0xff]
    %v759 = vld [vmem:[#allocation3 + $0x1688] sm:$0xff]
    %v760 = vld [vmem:[#allocation3 + $0x1690] sm:$0xff]
    %v761 = vld [vmem:[#allocation3 + $0x1698] sm:$0xff]
    %v762 = vld [vmem:[#allocation3 + $0x16a0] sm:$0xff]
    %v763 = vld [vmem:[#allocation3 + $0x16a8] sm:$0xff]
    %v764 = vld [vmem:[#allocation3 + $0x16b0] sm:$0xff]
    %v765 = vld [vmem:[#allocation3 + $0x16b8] sm:$0xff]
    %v766 = vld [vmem:[#allocation3 + $0x16c0] sm:$0xff]
    %v767 = vld [vmem:[#allocation3 + $0x16c8] sm:$0xff]
    %v768 = vld [vmem:[#allocation3 + $0x16d0] sm:$0xff]
    %v769 = vld [vmem:[#allocation3 + $0x16d8] sm:$0xff]
    %v770 = vld [vmem:[#allocation3 + $0x16e0] sm:$0xff]
    %v771 = vld [vmem:[#allocation3 + $0x16e8] sm:$0xff]
    %v772 = vld [vmem:[#allocation3 + $0x16f0] sm:$0xff]
    %v773 = vld [vmem:[#allocation3 + $0x16f8] sm:$0xff]
    %v774 = vld [vmem:[#allocation3 + $0x1700] sm:$0xff]
    %v775 = vld [vmem:[#allocation3 + $0x1708] sm:$0xff]
    %v776 = vld [vmem:[#allocation3 + $0x1710] sm:$0xff]
    %v777 = vld [vmem:[#allocation3 + $0x1718] sm:$0xff]
    %v778 = vld [vmem:[#allocation3 + $0x1720] sm:$0xff]
    %v779 = vld [vmem:[#allocation3 + $0x1728] sm:$0xff]
    %v780 = vld [vmem:[#allocation3 + $0x1730] sm:$0xff]
    %v781 = vld [vmem:[#allocation3 + $0x1738] sm:$0xff]
    %v782 = vld [vmem:[#allocation3 + $0x1740] sm:$0xff]
    %v783 = vld [vmem:[#allocation3 + $0x1748] sm:$0xff]
    %v784 = vld [vmem:[#allocation3 + $0x1750] sm:$0xff]
    %v785 = vld [vmem:[#allocation3 + $0x1758] sm:$0xff]
    %v786 = vld [vmem:[#allocation3 + $0x1760] sm:$0xff]
    %v787 = vld [vmem:[#allocation3 + $0x1768] sm:$0xff]
    %v788 = vld [vmem:[#allocation3 + $0x1770] sm:$0xff]
    %v789 = vld [vmem:[#allocation3 + $0x1778] sm:$0xff]
    %v790 = vld [vmem:[#allocation3 + $0x1780] sm:$0xff]
    %v791 = vld [vmem:[#allocation3 + $0x1788] sm:$0xff]
    %v792 = vld [vmem:[#allocation3 + $0x1790] sm:$0xff]
    %v793 = vld [vmem:[#allocation3 + $0x1798] sm:$0xff]
    %v794 = vld [vmem:[#allocation3 + $0x17a0] sm:$0xff]
    %v795 = vld [vmem:[#allocation3 + $0x17a8] sm:$0xff]
    %v796 = vld [vmem:[#allocation3 + $0x17b0] sm:$0xff]
    %v797 = vld [vmem:[#allocation3 + $0x17b8] sm:$0xff]
    %v798 = vld [vmem:[#allocation3 + $0x17c0] sm:$0xff]
    %v799 = vld [vmem:[#allocation3 + $0x17c8] sm:$0xff]
    %v800 = vld [vmem:[#allocation3 + $0x17d0] sm:$0xff]
    %v801 = vld [vmem:[#allocation3 + $0x17d8] sm:$0xff]
    %v802 = vld [vmem:[#allocation3 + $0x17e0] sm:$0xff]
    %v803 = vld [vmem:[#allocation3 + $0x17e8] sm:$0xff]
    %v804 = vld [vmem:[#allocation3 + $0x17f0] sm:$0xff]
    %v805 = vld [vmem:[#allocation3 + $0x17f8] sm:$0xff]
    %v806 = vld [vmem:[#allocation3 + $0x1800] sm:$0xff]
    %v807 = vld [vmem:[#allocation3 + $0x1808] sm:$0xff]
    %v808 = vld [vmem:[#allocation3 + $0x1810] sm:$0xff]
    %v809 = vld [vmem:[#allocation3 + $0x1818] sm:$0xff]
    %v810 = vld [vmem:[#allocation3 + $0x1820] sm:$0xff]
    %v811 = vld [vmem:[#allocation3 + $0x1828] sm:$0xff]
    %v812 = vld [vmem:[#allocation3 + $0x1830] sm:$0xff]
    %v813 = vld [vmem:[#allocation3 + $0x1838] sm:$0xff]
    %v814 = vld [vmem:[#allocation3 + $0x1840] sm:$0xff]
    %v815 = vld [vmem:[#allocation3 + $0x1848] sm:$0xff]
    %v816 = vld [vmem:[#allocation3 + $0x1850] sm:$0xff]
    %v817 = vld [vmem:[#allocation3 + $0x1858] sm:$0xff]
    %v818 = vld [vmem:[#allocation3 + $0x1860] sm:$0xff]
    %v819 = vld [vmem:[#allocation3 + $0x1868] sm:$0xff]
    %v820 = vld [vmem:[#allocation3 + $0x1870] sm:$0xff]
    %v821 = vld [vmem:[#allocation3 + $0x1878] sm:$0xff]
    %v822 = vld [vmem:[#allocation3 + $0x1880] sm:$0xff]
    %v823 = vld [vmem:[#allocation3 + $0x1888] sm:$0xff]
    %v824 = vld [vmem:[#allocation3 + $0x1890] sm:$0xff]
    %v825 = vld [vmem:[#allocation3 + $0x1898] sm:$0xff]
    %v826 = vld [vmem:[#allocation3 + $0x18a0] sm:$0xff]
    %v827 = vld [vmem:[#allocation3 + $0x18a8] sm:$0xff]
    %v828 = vld [vmem:[#allocation3 + $0x18b0] sm:$0xff]
    %v829 = vld [vmem:[#allocation3 + $0x18b8] sm:$0xff]
    %v830 = vld [vmem:[#allocation3 + $0x18c0] sm:$0xff]
    %v831 = vld [vmem:[#allocation3 + $0x18c8] sm:$0xff]
    %v832 = vld [vmem:[#allocation3 + $0x18d0] sm:$0xff]
    %v833 = vld [vmem:[#allocation3 + $0x18d8] sm:$0xff]
    %v834 = vld [vmem:[#allocation3 + $0x18e0] sm:$0xff]
    %v835 = vld [vmem:[#allocation3 + $0x18e8] sm:$0xff]
    %v836 = vld [vmem:[#allocation3 + $0x18f0] sm:$0xff]
    %v837 = vld [vmem:[#allocation3 + $0x18f8] sm:$0xff]
    %v838 = vld [vmem:[#allocation3 + $0x1900] sm:$0xff]
    %v839 = vld [vmem:[#allocation3 + $0x1908] sm:$0xff]
    %v840 = vld [vmem:[#allocation3 + $0x1910] sm:$0xff]
    %v841 = vld [vmem:[#allocation3 + $0x1918] sm:$0xff]
    %v842 = vld [vmem:[#allocation3 + $0x1920] sm:$0xff]
    %v843 = vld [vmem:[#allocation3 + $0x1928] sm:$0xff]
    %v844 = vld [vmem:[#allocation3 + $0x1930] sm:$0xff]
    %v845 = vld [vmem:[#allocation3 + $0x1938] sm:$0xff]
    %v846 = vld [vmem:[#allocation3 + $0x1940] sm:$0xff]
    %v847 = vld [vmem:[#allocation3 + $0x1948] sm:$0xff]
    %v848 = vld [vmem:[#allocation3 + $0x1950] sm:$0xff]
    %v849 = vld [vmem:[#allocation3 + $0x1958] sm:$0xff]
    %v850 = vld [vmem:[#allocation3 + $0x1960] sm:$0xff]
    %v851 = vld [vmem:[#allocation3 + $0x1968] sm:$0xff]
    %v852 = vld [vmem:[#allocation3 + $0x1970] sm:$0xff]
    %v853 = vld [vmem:[#allocation3 + $0x1978] sm:$0xff]
    %v854 = vld [vmem:[#allocation3 + $0x1980] sm:$0xff]
    %v855 = vld [vmem:[#allocation3 + $0x1988] sm:$0xff]
    %v856 = vld [vmem:[#allocation3 + $0x1990] sm:$0xff]
    %v857 = vld [vmem:[#allocation3 + $0x1998] sm:$0xff]
    %v858 = vld [vmem:[#allocation3 + $0x19a0] sm:$0xff]
    %v859 = vld [vmem:[#allocation3 + $0x19a8] sm:$0xff]
    %v860 = vld [vmem:[#allocation3 + $0x19b0] sm:$0xff]
    %v861 = vld [vmem:[#allocation3 + $0x19b8] sm:$0xff]
    %v862 = vld [vmem:[#allocation3 + $0x19c0] sm:$0xff]
    %v863 = vld [vmem:[#allocation3 + $0x19c8] sm:$0xff]
    %v864 = vld [vmem:[#allocation3 + $0x19d0] sm:$0xff]
    %v865 = vld [vmem:[#allocation3 + $0x19d8] sm:$0xff]
    %v866 = vld [vmem:[#allocation3 + $0x19e0] sm:$0xff]
    %v867 = vld [vmem:[#allocation3 + $0x19e8] sm:$0xff]
    %v868 = vld [vmem:[#allocation3 + $0x19f0] sm:$0xff]
    %v869 = vld [vmem:[#allocation3 + $0x19f8] sm:$0xff]
    %v870 = vld [vmem:[#allocation3 + $0x1a00] sm:$0xff]
    %v871 = vld [vmem:[#allocation3 + $0x1a08] sm:$0xff]
    %v872 = vld [vmem:[#allocation3 + $0x1a10] sm:$0xff]
    %v873 = vld [vmem:[#allocation3 + $0x1a18] sm:$0xff]
    %v874 = vld [vmem:[#allocation3 + $0x1a20] sm:$0xff]
    %v875 = vld [vmem:[#allocation3 + $0x1a28] sm:$0xff]
    %v876 = vld [vmem:[#allocation3 + $0x1a30] sm:$0xff]
    %v877 = vld [vmem:[#allocation3 + $0x1a38] sm:$0xff]
    %v878 = vld [vmem:[#allocation3 + $0x1a40] sm:$0xff]
    %v879 = vld [vmem:[#allocation3 + $0x1a48] sm:$0xff]
    %v880 = vld [vmem:[#allocation3 + $0x1a50] sm:$0xff]
    %v881 = vld [vmem:[#allocation3 + $0x1a58] sm:$0xff]
    %v882 = vld [vmem:[#allocation3 + $0x1a60] sm:$0xff]
    %v883 = vld [vmem:[#allocation3 + $0x1a68] sm:$0xff]
    %v884 = vld [vmem:[#allocation3 + $0x1a70] sm:$0xff]
    %v885 = vld [vmem:[#allocation3 + $0x1a78] sm:$0xff]
    %v886 = vld [vmem:[#allocation3 + $0x1a80] sm:$0xff]
    %v887 = vld [vmem:[#allocation3 + $0x1a88] sm:$0xff]
    %v888 = vld [vmem:[#allocation3 + $0x1a90] sm:$0xff]
    %v889 = vld [vmem:[#allocation3 + $0x1a98] sm:$0xff]
    %v890 = vld [vmem:[#allocation3 + $0x1aa0] sm:$0xff]
    %v891 = vld [vmem:[#allocation3 + $0x1aa8] sm:$0xff]
    %v892 = vld [vmem:[#allocation3 + $0x1ab0] sm:$0xff]
    %v893 = vld [vmem:[#allocation3 + $0x1ab8] sm:$0xff]
    %v894 = vld [vmem:[#allocation3 + $0x1ac0] sm:$0xff]
    %v895 = vld [vmem:[#allocation3 + $0x1ac8] sm:$0xff]
    %v896 = vld [vmem:[#allocation3 + $0x1ad0] sm:$0xff]
    %v897 = vld [vmem:[#allocation3 + $0x1ad8] sm:$0xff]
    %v898 = vld [vmem:[#allocation3 + $0x1ae0] sm:$0xff]
    %v899 = vld [vmem:[#allocation3 + $0x1ae8] sm:$0xff]
    %v900 = vld [vmem:[#allocation3 + $0x1af0] sm:$0xff]
    %v901 = vld [vmem:[#allocation3 + $0x1af8] sm:$0xff]
    %v902 = vld [vmem:[#allocation3 + $0x1b00] sm:$0xff]
    %v903 = vld [vmem:[#allocation3 + $0x1b08] sm:$0xff]
    %v904 = vld [vmem:[#allocation3 + $0x1b10] sm:$0xff]
    %v905 = vld [vmem:[#allocation3 + $0x1b18] sm:$0xff]
    %v906 = vld [vmem:[#allocation3 + $0x1b20] sm:$0xff]
    %v907 = vld [vmem:[#allocation3 + $0x1b28] sm:$0xff]
    %v908 = vld [vmem:[#allocation3 + $0x1b30] sm:$0xff]
    %v909 = vld [vmem:[#allocation3 + $0x1b38] sm:$0xff]
    %v910 = vld [vmem:[#allocation3 + $0x1b40] sm:$0xff]
    %v911 = vld [vmem:[#allocation3 + $0x1b48] sm:$0xff]
    %v912 = vld [vmem:[#allocation3 + $0x1b50] sm:$0xff]
    %v913 = vld [vmem:[#allocation3 + $0x1b58] sm:$0xff]
    %v914 = vld [vmem:[#allocation3 + $0x1b60] sm:$0xff]
    %v915 = vld [vmem:[#allocation3 + $0x1b68] sm:$0xff]
    %v916 = vld [vmem:[#allocation3 + $0x1b70] sm:$0xff]
    %v917 = vld [vmem:[#allocation3 + $0x1b78] sm:$0xff]
    %v918 = vld [vmem:[#allocation3 + $0x1b80] sm:$0xff]
    %v919 = vld [vmem:[#allocation3 + $0x1b88] sm:$0xff]
    %v920 = vld [vmem:[#allocation3 + $0x1b90] sm:$0xff]
    %v921 = vld [vmem:[#allocation3 + $0x1b98] sm:$0xff]
    %v922 = vld [vmem:[#allocation3 + $0x1ba0] sm:$0xff]
    %v923 = vld [vmem:[#allocation3 + $0x1ba8] sm:$0xff]
    %v924 = vld [vmem:[#allocation3 + $0x1bb0] sm:$0xff]
    %v925 = vld [vmem:[#allocation3 + $0x1bb8] sm:$0xff]
    %v926 = vld [vmem:[#allocation3 + $0x1bc0] sm:$0xff]
    %v927 = vld [vmem:[#allocation3 + $0x1bc8] sm:$0xff]
    %v928 = vld [vmem:[#allocation3 + $0x1bd0] sm:$0xff]
    %v929 = vld [vmem:[#allocation3 + $0x1bd8] sm:$0xff]
    %v930 = vld [vmem:[#allocation3 + $0x1be0] sm:$0xff]
    %v931 = vld [vmem:[#allocation3 + $0x1be8] sm:$0xff]
    %v932 = vld [vmem:[#allocation3 + $0x1bf0] sm:$0xff]
    %v933 = vld [vmem:[#allocation3 + $0x1bf8] sm:$0xff]
    %v934 = vld [vmem:[#allocation3 + $0x1c00] sm:$0xff]
    %v935 = vld [vmem:[#allocation3 + $0x1c08] sm:$0xff]
    %v936 = vld [vmem:[#allocation3 + $0x1c10] sm:$0xff]
    %v937 = vld [vmem:[#allocation3 + $0x1c18] sm:$0xff]
    %v938 = vld [vmem:[#allocation3 + $0x1c20] sm:$0xff]
    %v939 = vld [vmem:[#allocation3 + $0x1c28] sm:$0xff]
    %v940 = vld [vmem:[#allocation3 + $0x1c30] sm:$0xff]
    %v941 = vld [vmem:[#allocation3 + $0x1c38] sm:$0xff]
    %v942 = vld [vmem:[#allocation3 + $0x1c40] sm:$0xff]
    %v943 = vld [vmem:[#allocation3 + $0x1c48] sm:$0xff]
    %v944 = vld [vmem:[#allocation3 + $0x1c50] sm:$0xff]
    %v945 = vld [vmem:[#allocation3 + $0x1c58] sm:$0xff]
    %v946 = vld [vmem:[#allocation3 + $0x1c60] sm:$0xff]
    %v947 = vld [vmem:[#allocation3 + $0x1c68] sm:$0xff]
    %v948 = vld [vmem:[#allocation3 + $0x1c70] sm:$0xff]
    %v949 = vld [vmem:[#allocation3 + $0x1c78] sm:$0xff]
    %v950 = vld [vmem:[#allocation3 + $0x1c80] sm:$0xff]
    %v951 = vld [vmem:[#allocation3 + $0x1c88] sm:$0xff]
    %v952 = vld [vmem:[#allocation3 + $0x1c90] sm:$0xff]
    %v953 = vld [vmem:[#allocation3 + $0x1c98] sm:$0xff]
    %v954 = vld [vmem:[#allocation3 + $0x1ca0] sm:$0xff]
    %v955 = vld [vmem:[#allocation3 + $0x1ca8] sm:$0xff]
    %v956 = vld [vmem:[#allocation3 + $0x1cb0] sm:$0xff]
    %v957 = vld [vmem:[#allocation3 + $0x1cb8] sm:$0xff]
    %v958 = vld [vmem:[#allocation3 + $0x1cc0] sm:$0xff]
    %v959 = vld [vmem:[#allocation3 + $0x1cc8] sm:$0xff]
    %v960 = vld [vmem:[#allocation3 + $0x1cd0] sm:$0xff]
    %v961 = vld [vmem:[#allocation3 + $0x1cd8] sm:$0xff]
    %v962 = vld [vmem:[#allocation3 + $0x1ce0] sm:$0xff]
    %v963 = vld [vmem:[#allocation3 + $0x1ce8] sm:$0xff]
    %v964 = vld [vmem:[#allocation3 + $0x1cf0] sm:$0xff]
    %v965 = vld [vmem:[#allocation3 + $0x1cf8] sm:$0xff]
    %v966 = vld [vmem:[#allocation3 + $0x1d00] sm:$0xff]
    %v967 = vld [vmem:[#allocation3 + $0x1d08] sm:$0xff]
    %v968 = vld [vmem:[#allocation3 + $0x1d10] sm:$0xff]
    %v969 = vld [vmem:[#allocation3 + $0x1d18] sm:$0xff]
    %v970 = vld [vmem:[#allocation3 + $0x1d20] sm:$0xff]
    %v971 = vld [vmem:[#allocation3 + $0x1d28] sm:$0xff]
    %v972 = vld [vmem:[#allocation3 + $0x1d30] sm:$0xff]
    %v973 = vld [vmem:[#allocation3 + $0x1d38] sm:$0xff]
    %v974 = vld [vmem:[#allocation3 + $0x1d40] sm:$0xff]
    %v975 = vld [vmem:[#allocation3 + $0x1d48] sm:$0xff]
    %v976 = vld [vmem:[#allocation3 + $0x1d50] sm:$0xff]
    %v977 = vld [vmem:[#allocation3 + $0x1d58] sm:$0xff]
    %v978 = vld [vmem:[#allocation3 + $0x1d60] sm:$0xff]
    %v979 = vld [vmem:[#allocation3 + $0x1d68] sm:$0xff]
    %v980 = vld [vmem:[#allocation3 + $0x1d70] sm:$0xff]
    %v981 = vld [vmem:[#allocation3 + $0x1d78] sm:$0xff]
    %v982 = vld [vmem:[#allocation3 + $0x1d80] sm:$0xff]
    %v983 = vld [vmem:[#allocation3 + $0x1d88] sm:$0xff]
    %v984 = vld [vmem:[#allocation3 + $0x1d90] sm:$0xff]
    %v985 = vld [vmem:[#allocation3 + $0x1d98] sm:$0xff]
    %v986 = vld [vmem:[#allocation3 + $0x1da0] sm:$0xff]
    %v987 = vld [vmem:[#allocation3 + $0x1da8] sm:$0xff]
    %v988 = vld [vmem:[#allocation3 + $0x1db0] sm:$0xff]
    %v989 = vld [vmem:[#allocation3 + $0x1db8] sm:$0xff]
    %v990 = vld [vmem:[#allocation3 + $0x1dc0] sm:$0xff]
    %v991 = vld [vmem:[#allocation3 + $0x1dc8] sm:$0xff]
    %v992 = vld [vmem:[#allocation3 + $0x1dd0] sm:$0xff]
    %v993 = vld [vmem:[#allocation3 + $0x1dd8] sm:$0xff]
    %v994 = vld [vmem:[#allocation3 + $0x1de0] sm:$0xff]
    %v995 = vld [vmem:[#allocation3 + $0x1de8] sm:$0xff]
    %v996 = vld [vmem:[#allocation3 + $0x1df0] sm:$0xff]
    %v997 = vld [vmem:[#allocation3 + $0x1df8] sm:$0xff]
    %v998 = vld [vmem:[#allocation3 + $0x1e00] sm:$0xff]
    %v999 = vld [vmem:[#allocation3 + $0x1e08] sm:$0xff]
    %v1000 = vld [vmem:[#allocation3 + $0x1e10] sm:$0xff]
    %v1001 = vld [vmem:[#allocation3 + $0x1e18] sm:$0xff]
    %v1002 = vld [vmem:[#allocation3 + $0x1e20] sm:$0xff]
    %v1003 = vld [vmem:[#allocation3 + $0x1e28] sm:$0xff]
    %v1004 = vld [vmem:[#allocation3 + $0x1e30] sm:$0xff]
    %v1005 = vld [vmem:[#allocation3 + $0x1e38] sm:$0xff]
    %v1006 = vld [vmem:[#allocation3 + $0x1e40] sm:$0xff]
    %v1007 = vld [vmem:[#allocation3 + $0x1e48] sm:$0xff]
    %v1008 = vld [vmem:[#allocation3 + $0x1e50] sm:$0xff]
    %v1009 = vld [vmem:[#allocation3 + $0x1e58] sm:$0xff]
    %v1010 = vld [vmem:[#allocation3 + $0x1e60] sm:$0xff]
    %v1011 = vld [vmem:[#allocation3 + $0x1e68] sm:$0xff]
    %v1012 = vld [vmem:[#allocation3 + $0x1e70] sm:$0xff]
    %v1013 = vld [vmem:[#allocation3 + $0x1e78] sm:$0xff]
    %v1014 = vld [vmem:[#allocation3 + $0x1e80] sm:$0xff]
    %v1015 = vld [vmem:[#allocation3 + $0x1e88] sm:$0xff]
    %v1016 = vld [vmem:[#allocation3 + $0x1e90] sm:$0xff]
    %v1017 = vld [vmem:[#allocation3 + $0x1e98] sm:$0xff]
    %v1018 = vld [vmem:[#allocation3 + $0x1ea0] sm:$0xff]
    %v1019 = vld [vmem:[#allocation3 + $0x1ea8] sm:$0xff]
    %v1020 = vld [vmem:[#allocation3 + $0x1eb0] sm:$0xff]
    %v1021 = vld [vmem:[#allocation3 + $0x1eb8] sm:$0xff]
    %v1022 = vld [vmem:[#allocation3 + $0x1ec0] sm:$0xff]
    %v1023 = vld [vmem:[#allocation3 + $0x1ec8] sm:$0xff]
    %v1024 = vld [vmem:[#allocation3 + $0x1ed0] sm:$0xff]
    %v1025 = vld [vmem:[#allocation3 + $0x1ed8] sm:$0xff]
    %v1026 = vld [vmem:[#allocation3 + $0x1ee0] sm:$0xff]
    %v1027 = vld [vmem:[#allocation3 + $0x1ee8] sm:$0xff]
    %v1028 = vld [vmem:[#allocation3 + $0x1ef0] sm:$0xff]
    %v1029 = vld [vmem:[#allocation3 + $0x1ef8] sm:$0xff]
    %v1030 = vld [vmem:[#allocation3 + $0x1f00] sm:$0xff]
    %v1031 = vld [vmem:[#allocation3 + $0x1f08] sm:$0xff]
    %v1032 = vld [vmem:[#allocation3 + $0x1f10] sm:$0xff]
    %v1033 = vld [vmem:[#allocation3 + $0x1f18] sm:$0xff]
    %v1034 = vld [vmem:[#allocation3 + $0x1f20] sm:$0xff]
    %v1035 = vld [vmem:[#allocation3 + $0x1f28] sm:$0xff]
    %v1036 = vld [vmem:[#allocation3 + $0x1f30] sm:$0xff]
    %v1037 = vld [vmem:[#allocation3 + $0x1f38] sm:$0xff]
    %v1038 = vld [vmem:[#allocation3 + $0x1f40] sm:$0xff]
    %v1039 = vld [vmem:[#allocation3 + $0x1f48] sm:$0xff]
    %v1040 = vld [vmem:[#allocation3 + $0x1f50] sm:$0xff]
    %v1041 = vld [vmem:[#allocation3 + $0x1f58] sm:$0xff]
    %v1042 = vld [vmem:[#allocation3 + $0x1f60] sm:$0xff]
    %v1043 = vld [vmem:[#allocation3 + $0x1f68] sm:$0xff]
    %v1044 = vld [vmem:[#allocation3 + $0x1f70] sm:$0xff]
    %v1045 = vld [vmem:[#allocation3 + $0x1f78] sm:$0xff]
    %v1046 = vld [vmem:[#allocation3 + $0x1f80] sm:$0xff]
    %v1047 = vld [vmem:[#allocation3 + $0x1f88] sm:$0xff]
    %v1048 = vld [vmem:[#allocation3 + $0x1f90] sm:$0xff]
    %v1049 = vld [vmem:[#allocation3 + $0x1f98] sm:$0xff]
    %v1050 = vld [vmem:[#allocation3 + $0x1fa0] sm:$0xff]
    %v1051 = vld [vmem:[#allocation3 + $0x1fa8] sm:$0xff]
    %v1052 = vld [vmem:[#allocation3 + $0x1fb0] sm:$0xff]
    %v1053 = vld [vmem:[#allocation3 + $0x1fb8] sm:$0xff]
    %v1054 = vld [vmem:[#allocation3 + $0x1fc0] sm:$0xff]
    %v1055 = vld [vmem:[#allocation3 + $0x1fc8] sm:$0xff]
    %v1056 = vld [vmem:[#allocation3 + $0x1fd0] sm:$0xff]
    %v1057 = vld [vmem:[#allocation3 + $0x1fd8] sm:$0xff]
    %v1058 = vld [vmem:[#allocation3 + $0x1fe0] sm:$0xff]
    %v1059 = vld [vmem:[#allocation3 + $0x1fe8] sm:$0xff]
    %v1060 = vld [vmem:[#allocation3 + $0x1ff0] sm:$0xff]
    %v1061 = vld [vmem:[#allocation3 + $0x1ff8] sm:$0xff]
    %v1062 = vld [vmem:[#allocation2] sm:$0xff]
    %v1063 = vmul.f32 %v38, %v38
    %v1064 = vmul.f32 %v39, %v39
    %v1065 = vmul.f32 %v40, %v40
    %v1066 = vmul.f32 %v41, %v41
    %v1067 = vmul.f32 %v42, %v42
    %v1068 = vmul.f32 %v43, %v43
    %v1069 = vmul.f32 %v44, %v44
    %v1070 = vmul.f32 %v45, %v45
    %v1071 = vmul.f32 %v46, %v46
    %v1072 = vmul.f32 %v47, %v47
    %v1073 = vmul.f32 %v48, %v48
    %v1074 = vmul.f32 %v49, %v49
    %v1075 = vmul.f32 %v50, %v50
    %v1076 = vmul.f32 %v51, %v51
    %v1077 = vmul.f32 %v52, %v52
    %v1078 = vmul.f32 %v53, %v53
    %v1079 = vmul.f32 %v54, %v54
    %v1080 = vmul.f32 %v55, %v55
    %v1081 = vmul.f32 %v56, %v56
    %v1082 = vmul.f32 %v57, %v57
    %v1083 = vmul.f32 %v58, %v58
    %v1084 = vmul.f32 %v59, %v59
    %v1085 = vmul.f32 %v60, %v60
    %v1086 = vmul.f32 %v61, %v61
    %v1087 = vmul.f32 %v62, %v62
    %v1088 = vmul.f32 %v63, %v63
    %v1089 = vmul.f32 %v64, %v64
    %v1090 = vmul.f32 %v65, %v65
    %v1091 = vmul.f32 %v66, %v66
    %v1092 = vmul.f32 %v67, %v67
    %v1093 = vmul.f32 %v68, %v68
    %v1094 = vmul.f32 %v69, %v69
    %v1095 = vmul.f32 %v70, %v70
    %v1096 = vmul.f32 %v71, %v71
    %v1097 = vmul.f32 %v72, %v72
    %v1098 = vmul.f32 %v73, %v73
    %v1099 = vmul.f32 %v74, %v74
    %v1100 = vmul.f32 %v75, %v75
    %v1101 = vmul.f32 %v76, %v76
    %v1102 = vmul.f32 %v77, %v77
    %v1103 = vmul.f32 %v78, %v78
    %v1104 = vmul.f32 %v79, %v79
    %v1105 = vmul.f32 %v80, %v80
    %v1106 = vmul.f32 %v81, %v81
    %v1107 = vmul.f32 %v82, %v82
    %v1108 = vmul.f32 %v83, %v83
    %v1109 = vmul.f32 %v84, %v84
    %v1110 = vmul.f32 %v85, %v85
    %v1111 = vmul.f32 %v86, %v86
    %v1112 = vmul.f32 %v87, %v87
    %v1113 = vmul.f32 %v88, %v88
    %v1114 = vmul.f32 %v89, %v89
    %v1115 = vmul.f32 %v90, %v90
    %v1116 = vmul.f32 %v91, %v91
    %v1117 = vmul.f32 %v92, %v92
    %v1118 = vmul.f32 %v93, %v93
    %v1119 = vmul.f32 %v94, %v94
    %v1120 = vmul.f32 %v95, %v95
    %v1121 = vmul.f32 %v96, %v96
    %v1122 = vmul.f32 %v97, %v97
    %v1123 = vmul.f32 %v98, %v98
    %v1124 = vmul.f32 %v99, %v99
    %v1125 = vmul.f32 %v100, %v100
    %v1126 = vmul.f32 %v101, %v101
    %v1127 = vmul.f32 %v102, %v102
    %v1128 = vmul.f32 %v103, %v103
    %v1129 = vmul.f32 %v104, %v104
    %v1130 = vmul.f32 %v105, %v105
    %v1131 = vmul.f32 %v106, %v106
    %v1132 = vmul.f32 %v107, %v107
    %v1133 = vmul.f32 %v108, %v108
    %v1134 = vmul.f32 %v109, %v109
    %v1135 = vmul.f32 %v110, %v110
    %v1136 = vmul.f32 %v111, %v111
    %v1137 = vmul.f32 %v112, %v112
    %v1138 = vmul.f32 %v113, %v113
    %v1139 = vmul.f32 %v114, %v114
    %v1140 = vmul.f32 %v115, %v115
    %v1141 = vmul.f32 %v116, %v116
    %v1142 = vmul.f32 %v117, %v117
    %v1143 = vmul.f32 %v118, %v118
    %v1144 = vmul.f32 %v119, %v119
    %v1145 = vmul.f32 %v120, %v120
    %v1146 = vmul.f32 %v121, %v121
    %v1147 = vmul.f32 %v122, %v122
    %v1148 = vmul.f32 %v123, %v123
    %v1149 = vmul.f32 %v124, %v124
    %v1150 = vmul.f32 %v125, %v125
    %v1151 = vmul.f32 %v126, %v126
    %v1152 = vmul.f32 %v127, %v127
    %v1153 = vmul.f32 %v128, %v128
    %v1154 = vmul.f32 %v129, %v129
    %v1155 = vmul.f32 %v130, %v130
    %v1156 = vmul.f32 %v131, %v131
    %v1157 = vmul.f32 %v132, %v132
    %v1158 = vmul.f32 %v133, %v133
    %v1159 = vmul.f32 %v134, %v134
    %v1160 = vmul.f32 %v135, %v135
    %v1161 = vmul.f32 %v136, %v136
    %v1162 = vmul.f32 %v137, %v137
    %v1163 = vmul.f32 %v138, %v138
    %v1164 = vmul.f32 %v139, %v139
    %v1165 = vmul.f32 %v140, %v140
    %v1166 = vmul.f32 %v141, %v141
    %v1167 = vmul.f32 %v142, %v142
    %v1168 = vmul.f32 %v143, %v143
    %v1169 = vmul.f32 %v144, %v144
    %v1170 = vmul.f32 %v145, %v145
    %v1171 = vmul.f32 %v146, %v146
    %v1172 = vmul.f32 %v147, %v147
    %v1173 = vmul.f32 %v148, %v148
    %v1174 = vmul.f32 %v149, %v149
    %v1175 = vmul.f32 %v150, %v150
    %v1176 = vmul.f32 %v151, %v151
    %v1177 = vmul.f32 %v152, %v152
    %v1178 = vmul.f32 %v153, %v153
    %v1179 = vmul.f32 %v154, %v154
    %v1180 = vmul.f32 %v155, %v155
    %v1181 = vmul.f32 %v156, %v156
    %v1182 = vmul.f32 %v157, %v157
    %v1183 = vmul.f32 %v158, %v158
    %v1184 = vmul.f32 %v159, %v159
    %v1185 = vmul.f32 %v160, %v160
    %v1186 = vmul.f32 %v161, %v161
    %v1187 = vmul.f32 %v162, %v162
    %v1188 = vmul.f32 %v163, %v163
    %v1189 = vmul.f32 %v164, %v164
    %v1190 = vmul.f32 %v165, %v165
    %v1191 = vmul.f32 %v166, %v166
    %v1192 = vmul.f32 %v167, %v167
    %v1193 = vmul.f32 %v168, %v168
    %v1194 = vmul.f32 %v169, %v169
    %v1195 = vmul.f32 %v170, %v170
    %v1196 = vmul.f32 %v171, %v171
    %v1197 = vmul.f32 %v172, %v172
    %v1198 = vmul.f32 %v173, %v173
    %v1199 = vmul.f32 %v174, %v174
    %v1200 = vmul.f32 %v175, %v175
    %v1201 = vmul.f32 %v176, %v176
    %v1202 = vmul.f32 %v177, %v177
    %v1203 = vmul.f32 %v178, %v178
    %v1204 = vmul.f32 %v179, %v179
    %v1205 = vmul.f32 %v180, %v180
    %v1206 = vmul.f32 %v181, %v181
    %v1207 = vmul.f32 %v182, %v182
    %v1208 = vmul.f32 %v183, %v183
    %v1209 = vmul.f32 %v184, %v184
    %v1210 = vmul.f32 %v185, %v185
    %v1211 = vmul.f32 %v186, %v186
    %v1212 = vmul.f32 %v187, %v187
    %v1213 = vmul.f32 %v188, %v188
    %v1214 = vmul.f32 %v189, %v189
    %v1215 = vmul.f32 %v190, %v190
    %v1216 = vmul.f32 %v191, %v191
    %v1217 = vmul.f32 %v192, %v192
    %v1218 = vmul.f32 %v193, %v193
    %v1219 = vmul.f32 %v194, %v194
    %v1220 = vmul.f32 %v195, %v195
    %v1221 = vmul.f32 %v196, %v196
    %v1222 = vmul.f32 %v197, %v197
    %v1223 = vmul.f32 %v198, %v198
    %v1224 = vmul.f32 %v199, %v199
    %v1225 = vmul.f32 %v200, %v200
    %v1226 = vmul.f32 %v201, %v201
    %v1227 = vmul.f32 %v202, %v202
    %v1228 = vmul.f32 %v203, %v203
    %v1229 = vmul.f32 %v204, %v204
    %v1230 = vmul.f32 %v205, %v205
    %v1231 = vmul.f32 %v206, %v206
    %v1232 = vmul.f32 %v207, %v207
    %v1233 = vmul.f32 %v208, %v208
    %v1234 = vmul.f32 %v209, %v209
    %v1235 = vmul.f32 %v210, %v210
    %v1236 = vmul.f32 %v211, %v211
    %v1237 = vmul.f32 %v212, %v212
    %v1238 = vmul.f32 %v213, %v213
    %v1239 = vmul.f32 %v214, %v214
    %v1240 = vmul.f32 %v215, %v215
    %v1241 = vmul.f32 %v216, %v216
    %v1242 = vmul.f32 %v217, %v217
    %v1243 = vmul.f32 %v218, %v218
    %v1244 = vmul.f32 %v219, %v219
    %v1245 = vmul.f32 %v220, %v220
    %v1246 = vmul.f32 %v221, %v221
    %v1247 = vmul.f32 %v222, %v222
    %v1248 = vmul.f32 %v223, %v223
    %v1249 = vmul.f32 %v224, %v224
    %v1250 = vmul.f32 %v225, %v225
    %v1251 = vmul.f32 %v226, %v226
    %v1252 = vmul.f32 %v227, %v227
    %v1253 = vmul.f32 %v228, %v228
    %v1254 = vmul.f32 %v229, %v229
    %v1255 = vmul.f32 %v230, %v230
    %v1256 = vmul.f32 %v231, %v231
    %v1257 = vmul.f32 %v232, %v232
    %v1258 = vmul.f32 %v233, %v233
    %v1259 = vmul.f32 %v234, %v234
    %v1260 = vmul.f32 %v235, %v235
    %v1261 = vmul.f32 %v236, %v236
    %v1262 = vmul.f32 %v237, %v237
    %v1263 = vmul.f32 %v238, %v238
    %v1264 = vmul.f32 %v239, %v239
    %v1265 = vmul.f32 %v240, %v240
    %v1266 = vmul.f32 %v241, %v241
    %v1267 = vmul.f32 %v242, %v242
    %v1268 = vmul.f32 %v243, %v243
    %v1269 = vmul.f32 %v244, %v244
    %v1270 = vmul.f32 %v245, %v245
    %v1271 = vmul.f32 %v246, %v246
    %v1272 = vmul.f32 %v247, %v247
    %v1273 = vmul.f32 %v248, %v248
    %v1274 = vmul.f32 %v249, %v249
    %v1275 = vmul.f32 %v250, %v250
    %v1276 = vmul.f32 %v251, %v251
    %v1277 = vmul.f32 %v252, %v252
    %v1278 = vmul.f32 %v253, %v253
    %v1279 = vmul.f32 %v254, %v254
    %v1280 = vmul.f32 %v255, %v255
    %v1281 = vmul.f32 %v256, %v256
    %v1282 = vmul.f32 %v257, %v257
    %v1283 = vmul.f32 %v258, %v258
    %v1284 = vmul.f32 %v259, %v259
    %v1285 = vmul.f32 %v260, %v260
    %v1286 = vmul.f32 %v261, %v261
    %v1287 = vmul.f32 %v262, %v262
    %v1288 = vmul.f32 %v263, %v263
    %v1289 = vmul.f32 %v264, %v264
    %v1290 = vmul.f32 %v265, %v265
    %v1291 = vmul.f32 %v266, %v266
    %v1292 = vmul.f32 %v267, %v267
    %v1293 = vmul.f32 %v268, %v268
    %v1294 = vmul.f32 %v269, %v269
    %v1295 = vmul.f32 %v270, %v270
    %v1296 = vmul.f32 %v271, %v271
    %v1297 = vmul.f32 %v272, %v272
    %v1298 = vmul.f32 %v273, %v273
    %v1299 = vmul.f32 %v274, %v274
    %v1300 = vmul.f32 %v275, %v275
    %v1301 = vmul.f32 %v276, %v276
    %v1302 = vmul.f32 %v277, %v277
    %v1303 = vmul.f32 %v278, %v278
    %v1304 = vmul.f32 %v279, %v279
    %v1305 = vmul.f32 %v280, %v280
    %v1306 = vmul.f32 %v281, %v281
    %v1307 = vmul.f32 %v282, %v282
    %v1308 = vmul.f32 %v283, %v283
    %v1309 = vmul.f32 %v284, %v284
    %v1310 = vmul.f32 %v285, %v285
    %v1311 = vmul.f32 %v286, %v286
    %v1312 = vmul.f32 %v287, %v287
    %v1313 = vmul.f32 %v288, %v288
    %v1314 = vmul.f32 %v289, %v289
    %v1315 = vmul.f32 %v290, %v290
    %v1316 = vmul.f32 %v291, %v291
    %v1317 = vmul.f32 %v292, %v292
    %v1318 = vmul.f32 %v293, %v293
    %v1319 = vmul.f32 %v294, %v294
    %v1320 = vmul.f32 %v295, %v295
    %v1321 = vmul.f32 %v296, %v296
    %v1322 = vmul.f32 %v297, %v297
    %v1323 = vmul.f32 %v298, %v298
    %v1324 = vmul.f32 %v299, %v299
    %v1325 = vmul.f32 %v300, %v300
    %v1326 = vmul.f32 %v301, %v301
    %v1327 = vmul.f32 %v302, %v302
    %v1328 = vmul.f32 %v303, %v303
    %v1329 = vmul.f32 %v304, %v304
    %v1330 = vmul.f32 %v305, %v305
    %v1331 = vmul.f32 %v306, %v306
    %v1332 = vmul.f32 %v307, %v307
    %v1333 = vmul.f32 %v308, %v308
    %v1334 = vmul.f32 %v309, %v309
    %v1335 = vmul.f32 %v310, %v310
    %v1336 = vmul.f32 %v311, %v311
    %v1337 = vmul.f32 %v312, %v312
    %v1338 = vmul.f32 %v313, %v313
    %v1339 = vmul.f32 %v314, %v314
    %v1340 = vmul.f32 %v315, %v315
    %v1341 = vmul.f32 %v316, %v316
    %v1342 = vmul.f32 %v317, %v317
    %v1343 = vmul.f32 %v318, %v318
    %v1344 = vmul.f32 %v319, %v319
    %v1345 = vmul.f32 %v320, %v320
    %v1346 = vmul.f32 %v321, %v321
    %v1347 = vmul.f32 %v322, %v322
    %v1348 = vmul.f32 %v323, %v323
    %v1349 = vmul.f32 %v324, %v324
    %v1350 = vmul.f32 %v325, %v325
    %v1351 = vmul.f32 %v326, %v326
    %v1352 = vmul.f32 %v327, %v327
    %v1353 = vmul.f32 %v328, %v328
    %v1354 = vmul.f32 %v329, %v329
    %v1355 = vmul.f32 %v330, %v330
    %v1356 = vmul.f32 %v331, %v331
    %v1357 = vmul.f32 %v332, %v332
    %v1358 = vmul.f32 %v333, %v333
    %v1359 = vmul.f32 %v334, %v334
    %v1360 = vmul.f32 %v335, %v335
    %v1361 = vmul.f32 %v336, %v336
    %v1362 = vmul.f32 %v337, %v337
    %v1363 = vmul.f32 %v338, %v338
    %v1364 = vmul.f32 %v339, %v339
    %v1365 = vmul.f32 %v340, %v340
    %v1366 = vmul.f32 %v341, %v341
    %v1367 = vmul.f32 %v342, %v342
    %v1368 = vmul.f32 %v343, %v343
    %v1369 = vmul.f32 %v344, %v344
    %v1370 = vmul.f32 %v345, %v345
    %v1371 = vmul.f32 %v346, %v346
    %v1372 = vmul.f32 %v347, %v347
    %v1373 = vmul.f32 %v348, %v348
    %v1374 = vmul.f32 %v349, %v349
    %v1375 = vmul.f32 %v350, %v350
    %v1376 = vmul.f32 %v351, %v351
    %v1377 = vmul.f32 %v352, %v352
    %v1378 = vmul.f32 %v353, %v353
    %v1379 = vmul.f32 %v354, %v354
    %v1380 = vmul.f32 %v355, %v355
    %v1381 = vmul.f32 %v356, %v356
    %v1382 = vmul.f32 %v357, %v357
    %v1383 = vmul.f32 %v358, %v358
    %v1384 = vmul.f32 %v359, %v359
    %v1385 = vmul.f32 %v360, %v360
    %v1386 = vmul.f32 %v361, %v361
    %v1387 = vmul.f32 %v362, %v362
    %v1388 = vmul.f32 %v363, %v363
    %v1389 = vmul.f32 %v364, %v364
    %v1390 = vmul.f32 %v365, %v365
    %v1391 = vmul.f32 %v366, %v366
    %v1392 = vmul.f32 %v367, %v367
    %v1393 = vmul.f32 %v368, %v368
    %v1394 = vmul.f32 %v369, %v369
    %v1395 = vmul.f32 %v370, %v370
    %v1396 = vmul.f32 %v371, %v371
    %v1397 = vmul.f32 %v372, %v372
    %v1398 = vmul.f32 %v373, %v373
    %v1399 = vmul.f32 %v374, %v374
    %v1400 = vmul.f32 %v375, %v375
    %v1401 = vmul.f32 %v376, %v376
    %v1402 = vmul.f32 %v377, %v377
    %v1403 = vmul.f32 %v378, %v378
    %v1404 = vmul.f32 %v379, %v379
    %v1405 = vmul.f32 %v380, %v380
    %v1406 = vmul.f32 %v381, %v381
    %v1407 = vmul.f32 %v382, %v382
    %v1408 = vmul.f32 %v383, %v383
    %v1409 = vmul.f32 %v384, %v384
    %v1410 = vmul.f32 %v385, %v385
    %v1411 = vmul.f32 %v386, %v386
    %v1412 = vmul.f32 %v387, %v387
    %v1413 = vmul.f32 %v388, %v388
    %v1414 = vmul.f32 %v389, %v389
    %v1415 = vmul.f32 %v390, %v390
    %v1416 = vmul.f32 %v391, %v391
    %v1417 = vmul.f32 %v392, %v392
    %v1418 = vmul.f32 %v393, %v393
    %v1419 = vmul.f32 %v394, %v394
    %v1420 = vmul.f32 %v395, %v395
    %v1421 = vmul.f32 %v396, %v396
    %v1422 = vmul.f32 %v397, %v397
    %v1423 = vmul.f32 %v398, %v398
    %v1424 = vmul.f32 %v399, %v399
    %v1425 = vmul.f32 %v400, %v400
    %v1426 = vmul.f32 %v401, %v401
    %v1427 = vmul.f32 %v402, %v402
    %v1428 = vmul.f32 %v403, %v403
    %v1429 = vmul.f32 %v404, %v404
    %v1430 = vmul.f32 %v405, %v405
    %v1431 = vmul.f32 %v406, %v406
    %v1432 = vmul.f32 %v407, %v407
    %v1433 = vmul.f32 %v408, %v408
    %v1434 = vmul.f32 %v409, %v409
    %v1435 = vmul.f32 %v410, %v410
    %v1436 = vmul.f32 %v411, %v411
    %v1437 = vmul.f32 %v412, %v412
    %v1438 = vmul.f32 %v413, %v413
    %v1439 = vmul.f32 %v414, %v414
    %v1440 = vmul.f32 %v415, %v415
    %v1441 = vmul.f32 %v416, %v416
    %v1442 = vmul.f32 %v417, %v417
    %v1443 = vmul.f32 %v418, %v418
    %v1444 = vmul.f32 %v419, %v419
    %v1445 = vmul.f32 %v420, %v420
    %v1446 = vmul.f32 %v421, %v421
    %v1447 = vmul.f32 %v422, %v422
    %v1448 = vmul.f32 %v423, %v423
    %v1449 = vmul.f32 %v424, %v424
    %v1450 = vmul.f32 %v425, %v425
    %v1451 = vmul.f32 %v426, %v426
    %v1452 = vmul.f32 %v427, %v427
    %v1453 = vmul.f32 %v428, %v428
    %v1454 = vmul.f32 %v429, %v429
    %v1455 = vmul.f32 %v430, %v430
    %v1456 = vmul.f32 %v431, %v431
    %v1457 = vmul.f32 %v432, %v432
    %v1458 = vmul.f32 %v433, %v433
    %v1459 = vmul.f32 %v434, %v434
    %v1460 = vmul.f32 %v435, %v435
    %v1461 = vmul.f32 %v436, %v436
    %v1462 = vmul.f32 %v437, %v437
    %v1463 = vmul.f32 %v438, %v438
    %v1464 = vmul.f32 %v439, %v439
    %v1465 = vmul.f32 %v440, %v440
    %v1466 = vmul.f32 %v441, %v441
    %v1467 = vmul.f32 %v442, %v442
    %v1468 = vmul.f32 %v443, %v443
    %v1469 = vmul.f32 %v444, %v444
    %v1470 = vmul.f32 %v445, %v445
    %v1471 = vmul.f32 %v446, %v446
    %v1472 = vmul.f32 %v447, %v447
    %v1473 = vmul.f32 %v448, %v448
    %v1474 = vmul.f32 %v449, %v449
    %v1475 = vmul.f32 %v450, %v450
    %v1476 = vmul.f32 %v451, %v451
    %v1477 = vmul.f32 %v452, %v452
    %v1478 = vmul.f32 %v453, %v453
    %v1479 = vmul.f32 %v454, %v454
    %v1480 = vmul.f32 %v455, %v455
    %v1481 = vmul.f32 %v456, %v456
    %v1482 = vmul.f32 %v457, %v457
    %v1483 = vmul.f32 %v458, %v458
    %v1484 = vmul.f32 %v459, %v459
    %v1485 = vmul.f32 %v460, %v460
    %v1486 = vmul.f32 %v461, %v461
    %v1487 = vmul.f32 %v462, %v462
    %v1488 = vmul.f32 %v463, %v463
    %v1489 = vmul.f32 %v464, %v464
    %v1490 = vmul.f32 %v465, %v465
    %v1491 = vmul.f32 %v466, %v466
    %v1492 = vmul.f32 %v467, %v467
    %v1493 = vmul.f32 %v468, %v468
    %v1494 = vmul.f32 %v469, %v469
    %v1495 = vmul.f32 %v470, %v470
    %v1496 = vmul.f32 %v471, %v471
    %v1497 = vmul.f32 %v472, %v472
    %v1498 = vmul.f32 %v473, %v473
    %v1499 = vmul.f32 %v474, %v474
    %v1500 = vmul.f32 %v475, %v475
    %v1501 = vmul.f32 %v476, %v476
    %v1502 = vmul.f32 %v477, %v477
    %v1503 = vmul.f32 %v478, %v478
    %v1504 = vmul.f32 %v479, %v479
    %v1505 = vmul.f32 %v480, %v480
    %v1506 = vmul.f32 %v481, %v481
    %v1507 = vmul.f32 %v482, %v482
    %v1508 = vmul.f32 %v483, %v483
    %v1509 = vmul.f32 %v484, %v484
    %v1510 = vmul.f32 %v485, %v485
    %v1511 = vmul.f32 %v486, %v486
    %v1512 = vmul.f32 %v487, %v487
    %v1513 = vmul.f32 %v488, %v488
    %v1514 = vmul.f32 %v489, %v489
    %v1515 = vmul.f32 %v490, %v490
    %v1516 = vmul.f32 %v491, %v491
    %v1517 = vmul.f32 %v492, %v492
    %v1518 = vmul.f32 %v493, %v493
    %v1519 = vmul.f32 %v494, %v494
    %v1520 = vmul.f32 %v495, %v495
    %v1521 = vmul.f32 %v496, %v496
    %v1522 = vmul.f32 %v497, %v497
    %v1523 = vmul.f32 %v498, %v498
    %v1524 = vmul.f32 %v499, %v499
    %v1525 = vmul.f32 %v500, %v500
    %v1526 = vmul.f32 %v501, %v501
    %v1527 = vmul.f32 %v502, %v502
    %v1528 = vmul.f32 %v503, %v503
    %v1529 = vmul.f32 %v504, %v504
    %v1530 = vmul.f32 %v505, %v505
    %v1531 = vmul.f32 %v506, %v506
    %v1532 = vmul.f32 %v507, %v507
    %v1533 = vmul.f32 %v508, %v508
    %v1534 = vmul.f32 %v509, %v509
    %v1535 = vmul.f32 %v510, %v510
    %v1536 = vmul.f32 %v511, %v511
    %v1537 = vmul.f32 %v512, %v512
    %v1538 = vmul.f32 %v513, %v513
    %v1539 = vmul.f32 %v514, %v514
    %v1540 = vmul.f32 %v515, %v515
    %v1541 = vmul.f32 %v516, %v516
    %v1542 = vmul.f32 %v517, %v517
    %v1543 = vmul.f32 %v518, %v518
    %v1544 = vmul.f32 %v519, %v519
    %v1545 = vmul.f32 %v520, %v520
    %v1546 = vmul.f32 %v521, %v521
    %v1547 = vmul.f32 %v522, %v522
    %v1548 = vmul.f32 %v523, %v523
    %v1549 = vmul.f32 %v524, %v524
    %v1550 = vmul.f32 %v525, %v525
    %v1551 = vmul.f32 %v526, %v526
    %v1552 = vmul.f32 %v527, %v527
    %v1553 = vmul.f32 %v528, %v528
    %v1554 = vmul.f32 %v529, %v529
    %v1555 = vmul.f32 %v530, %v530
    %v1556 = vmul.f32 %v531, %v531
    %v1557 = vmul.f32 %v532, %v532
    %v1558 = vmul.f32 %v533, %v533
    %v1559 = vmul.f32 %v534, %v534
    %v1560 = vmul.f32 %v535, %v535
    %v1561 = vmul.f32 %v536, %v536
    %v1562 = vmul.f32 %v537, %v537
    %v1563 = vmul.f32 %v538, %v538
    %v1564 = vmul.f32 %v539, %v539
    %v1565 = vmul.f32 %v540, %v540
    %v1566 = vmul.f32 %v541, %v541
    %v1567 = vmul.f32 %v542, %v542
    %v1568 = vmul.f32 %v543, %v543
    %v1569 = vmul.f32 %v544, %v544
    %v1570 = vmul.f32 %v545, %v545
    %v1571 = vmul.f32 %v546, %v546
    %v1572 = vmul.f32 %v547, %v547
    %v1573 = vmul.f32 %v548, %v548
    %v1574 = vmul.f32 %v549, %v549
    %v1575 = vmul.f32 %v550, %v550
    %v1576 = vmul.f32 %v551, %v551
    %v1577 = vmul.f32 %v552, %v552
    %v1578 = vmul.f32 %v553, %v553
    %v1579 = vmul.f32 %v554, %v554
    %v1580 = vmul.f32 %v555, %v555
    %v1581 = vmul.f32 %v556, %v556
    %v1582 = vmul.f32 %v557, %v557
    %v1583 = vmul.f32 %v558, %v558
    %v1584 = vmul.f32 %v559, %v559
    %v1585 = vmul.f32 %v560, %v560
    %v1586 = vmul.f32 %v561, %v561
    %v1587 = vmul.f32 %v562, %v562
    %v1588 = vmul.f32 %v563, %v563
    %v1589 = vmul.f32 %v564, %v564
    %v1590 = vmul.f32 %v565, %v565
    %v1591 = vmul.f32 %v566, %v566
    %v1592 = vmul.f32 %v567, %v567
    %v1593 = vmul.f32 %v568, %v568
    %v1594 = vmul.f32 %v569, %v569
    %v1595 = vmul.f32 %v570, %v570
    %v1596 = vmul.f32 %v571, %v571
    %v1597 = vmul.f32 %v572, %v572
    %v1598 = vmul.f32 %v573, %v573
    %v1599 = vmul.f32 %v574, %v574
    %v1600 = vmul.f32 %v575, %v575
    %v1601 = vmul.f32 %v576, %v576
    %v1602 = vmul.f32 %v577, %v577
    %v1603 = vmul.f32 %v578, %v578
    %v1604 = vmul.f32 %v579, %v579
    %v1605 = vmul.f32 %v580, %v580
    %v1606 = vmul.f32 %v581, %v581
    %v1607 = vmul.f32 %v582, %v582
    %v1608 = vmul.f32 %v583, %v583
    %v1609 = vmul.f32 %v584, %v584
    %v1610 = vmul.f32 %v585, %v585
    %v1611 = vmul.f32 %v586, %v586
    %v1612 = vmul.f32 %v587, %v587
    %v1613 = vmul.f32 %v588, %v588
    %v1614 = vmul.f32 %v589, %v589
    %v1615 = vmul.f32 %v590, %v590
    %v1616 = vmul.f32 %v591, %v591
    %v1617 = vmul.f32 %v592, %v592
    %v1618 = vmul.f32 %v593, %v593
    %v1619 = vmul.f32 %v594, %v594
    %v1620 = vmul.f32 %v595, %v595
    %v1621 = vmul.f32 %v596, %v596
    %v1622 = vmul.f32 %v597, %v597
    %v1623 = vmul.f32 %v598, %v598
    %v1624 = vmul.f32 %v599, %v599
    %v1625 = vmul.f32 %v600, %v600
    %v1626 = vmul.f32 %v601, %v601
    %v1627 = vmul.f32 %v602, %v602
    %v1628 = vmul.f32 %v603, %v603
    %v1629 = vmul.f32 %v604, %v604
    %v1630 = vmul.f32 %v605, %v605
    %v1631 = vmul.f32 %v606, %v606
    %v1632 = vmul.f32 %v607, %v607
    %v1633 = vmul.f32 %v608, %v608
    %v1634 = vmul.f32 %v609, %v609
    %v1635 = vmul.f32 %v610, %v610
    %v1636 = vmul.f32 %v611, %v611
    %v1637 = vmul.f32 %v612, %v612
    %v1638 = vmul.f32 %v613, %v613
    %v1639 = vmul.f32 %v614, %v614
    %v1640 = vmul.f32 %v615, %v615
    %v1641 = vmul.f32 %v616, %v616
    %v1642 = vmul.f32 %v617, %v617
    %v1643 = vmul.f32 %v618, %v618
    %v1644 = vmul.f32 %v619, %v619
    %v1645 = vmul.f32 %v620, %v620
    %v1646 = vmul.f32 %v621, %v621
    %v1647 = vmul.f32 %v622, %v622
    %v1648 = vmul.f32 %v623, %v623
    %v1649 = vmul.f32 %v624, %v624
    %v1650 = vmul.f32 %v625, %v625
    %v1651 = vmul.f32 %v626, %v626
    %v1652 = vmul.f32 %v627, %v627
    %v1653 = vmul.f32 %v628, %v628
    %v1654 = vmul.f32 %v629, %v629
    %v1655 = vmul.f32 %v630, %v630
    %v1656 = vmul.f32 %v631, %v631
    %v1657 = vmul.f32 %v632, %v632
    %v1658 = vmul.f32 %v633, %v633
    %v1659 = vmul.f32 %v634, %v634
    %v1660 = vmul.f32 %v635, %v635
    %v1661 = vmul.f32 %v636, %v636
    %v1662 = vmul.f32 %v637, %v637
    %v1663 = vmul.f32 %v638, %v638
    %v1664 = vmul.f32 %v639, %v639
    %v1665 = vmul.f32 %v640, %v640
    %v1666 = vmul.f32 %v641, %v641
    %v1667 = vmul.f32 %v642, %v642
    %v1668 = vmul.f32 %v643, %v643
    %v1669 = vmul.f32 %v644, %v644
    %v1670 = vmul.f32 %v645, %v645
    %v1671 = vmul.f32 %v646, %v646
    %v1672 = vmul.f32 %v647, %v647
    %v1673 = vmul.f32 %v648, %v648
    %v1674 = vmul.f32 %v649, %v649
    %v1675 = vmul.f32 %v650, %v650
    %v1676 = vmul.f32 %v651, %v651
    %v1677 = vmul.f32 %v652, %v652
    %v1678 = vmul.f32 %v653, %v653
    %v1679 = vmul.f32 %v654, %v654
    %v1680 = vmul.f32 %v655, %v655
    %v1681 = vmul.f32 %v656, %v656
    %v1682 = vmul.f32 %v657, %v657
    %v1683 = vmul.f32 %v658, %v658
    %v1684 = vmul.f32 %v659, %v659
    %v1685 = vmul.f32 %v660, %v660
    %v1686 = vmul.f32 %v661, %v661
    %v1687 = vmul.f32 %v662, %v662
    %v1688 = vmul.f32 %v663, %v663
    %v1689 = vmul.f32 %v664, %v664
    %v1690 = vmul.f32 %v665, %v665
    %v1691 = vmul.f32 %v666, %v666
    %v1692 = vmul.f32 %v667, %v667
    %v1693 = vmul.f32 %v668, %v668
    %v1694 = vmul.f32 %v669, %v669
    %v1695 = vmul.f32 %v670, %v670
    %v1696 = vmul.f32 %v671, %v671
    %v1697 = vmul.f32 %v672, %v672
    %v1698 = vmul.f32 %v673, %v673
    %v1699 = vmul.f32 %v674, %v674
    %v1700 = vmul.f32 %v675, %v675
    %v1701 = vmul.f32 %v676, %v676
    %v1702 = vmul.f32 %v677, %v677
    %v1703 = vmul.f32 %v678, %v678
    %v1704 = vmul.f32 %v679, %v679
    %v1705 = vmul.f32 %v680, %v680
    %v1706 = vmul.f32 %v681, %v681
    %v1707 = vmul.f32 %v682, %v682
    %v1708 = vmul.f32 %v683, %v683
    %v1709 = vmul.f32 %v684, %v684
    %v1710 = vmul.f32 %v685, %v685
    %v1711 = vmul.f32 %v686, %v686
    %v1712 = vmul.f32 %v687, %v687
    %v1713 = vmul.f32 %v688, %v688
    %v1714 = vmul.f32 %v689, %v689
    %v1715 = vmul.f32 %v690, %v690
    %v1716 = vmul.f32 %v691, %v691
    %v1717 = vmul.f32 %v692, %v692
    %v1718 = vmul.f32 %v693, %v693
    %v1719 = vmul.f32 %v694, %v694
    %v1720 = vmul.f32 %v695, %v695
    %v1721 = vmul.f32 %v696, %v696
    %v1722 = vmul.f32 %v697, %v697
    %v1723 = vmul.f32 %v698, %v698
    %v1724 = vmul.f32 %v699, %v699
    %v1725 = vmul.f32 %v700, %v700
    %v1726 = vmul.f32 %v701, %v701
    %v1727 = vmul.f32 %v702, %v702
    %v1728 = vmul.f32 %v703, %v703
    %v1729 = vmul.f32 %v704, %v704
    %v1730 = vmul.f32 %v705, %v705
    %v1731 = vmul.f32 %v706, %v706
    %v1732 = vmul.f32 %v707, %v707
    %v1733 = vmul.f32 %v708, %v708
    %v1734 = vmul.f32 %v709, %v709
    %v1735 = vmul.f32 %v710, %v710
    %v1736 = vmul.f32 %v711, %v711
    %v1737 = vmul.f32 %v712, %v712
    %v1738 = vmul.f32 %v713, %v713
    %v1739 = vmul.f32 %v714, %v714
    %v1740 = vmul.f32 %v715, %v715
    %v1741 = vmul.f32 %v716, %v716
    %v1742 = vmul.f32 %v717, %v717
    %v1743 = vmul.f32 %v718, %v718
    %v1744 = vmul.f32 %v719, %v719
    %v1745 = vmul.f32 %v720, %v720
    %v1746 = vmul.f32 %v721, %v721
    %v1747 = vmul.f32 %v722, %v722
    %v1748 = vmul.f32 %v723, %v723
    %v1749 = vmul.f32 %v724, %v724
    %v1750 = vmul.f32 %v725, %v725
    %v1751 = vmul.f32 %v726, %v726
    %v1752 = vmul.f32 %v727, %v727
    %v1753 = vmul.f32 %v728, %v728
    %v1754 = vmul.f32 %v729, %v729
    %v1755 = vmul.f32 %v730, %v730
    %v1756 = vmul.f32 %v731, %v731
    %v1757 = vmul.f32 %v732, %v732
    %v1758 = vmul.f32 %v733, %v733
    %v1759 = vmul.f32 %v734, %v734
    %v1760 = vmul.f32 %v735, %v735
    %v1761 = vmul.f32 %v736, %v736
    %v1762 = vmul.f32 %v737, %v737
    %v1763 = vmul.f32 %v738, %v738
    %v1764 = vmul.f32 %v739, %v739
    %v1765 = vmul.f32 %v740, %v740
    %v1766 = vmul.f32 %v741, %v741
    %v1767 = vmul.f32 %v742, %v742
    %v1768 = vmul.f32 %v743, %v743
    %v1769 = vmul.f32 %v744, %v744
    %v1770 = vmul.f32 %v745, %v745
    %v1771 = vmul.f32 %v746, %v746
    %v1772 = vmul.f32 %v747, %v747
    %v1773 = vmul.f32 %v748, %v748
    %v1774 = vmul.f32 %v749, %v749
    %v1775 = vmul.f32 %v750, %v750
    %v1776 = vmul.f32 %v751, %v751
    %v1777 = vmul.f32 %v752, %v752
    %v1778 = vmul.f32 %v753, %v753
    %v1779 = vmul.f32 %v754, %v754
    %v1780 = vmul.f32 %v755, %v755
    %v1781 = vmul.f32 %v756, %v756
    %v1782 = vmul.f32 %v757, %v757
    %v1783 = vmul.f32 %v758, %v758
    %v1784 = vmul.f32 %v759, %v759
    %v1785 = vmul.f32 %v760, %v760
    %v1786 = vmul.f32 %v761, %v761
    %v1787 = vmul.f32 %v762, %v762
    %v1788 = vmul.f32 %v763, %v763
    %v1789 = vmul.f32 %v764, %v764
    %v1790 = vmul.f32 %v765, %v765
    %v1791 = vmul.f32 %v766, %v766
    %v1792 = vmul.f32 %v767, %v767
    %v1793 = vmul.f32 %v768, %v768
    %v1794 = vmul.f32 %v769, %v769
    %v1795 = vmul.f32 %v770, %v770
    %v1796 = vmul.f32 %v771, %v771
    %v1797 = vmul.f32 %v772, %v772
    %v1798 = vmul.f32 %v773, %v773
    %v1799 = vmul.f32 %v774, %v774
    %v1800 = vmul.f32 %v775, %v775
    %v1801 = vmul.f32 %v776, %v776
    %v1802 = vmul.f32 %v777, %v777
    %v1803 = vmul.f32 %v778, %v778
    %v1804 = vmul.f32 %v779, %v779
    %v1805 = vmul.f32 %v780, %v780
    %v1806 = vmul.f32 %v781, %v781
    %v1807 = vmul.f32 %v782, %v782
    %v1808 = vmul.f32 %v783, %v783
    %v1809 = vmul.f32 %v784, %v784
    %v1810 = vmul.f32 %v785, %v785
    %v1811 = vmul.f32 %v786, %v786
    %v1812 = vmul.f32 %v787, %v787
    %v1813 = vmul.f32 %v788, %v788
    %v1814 = vmul.f32 %v789, %v789
    %v1815 = vmul.f32 %v790, %v790
    %v1816 = vmul.f32 %v791, %v791
    %v1817 = vmul.f32 %v792, %v792
    %v1818 = vmul.f32 %v793, %v793
    %v1819 = vmul.f32 %v794, %v794
    %v1820 = vmul.f32 %v795, %v795
    %v1821 = vmul.f32 %v796, %v796
    %v1822 = vmul.f32 %v797, %v797
    %v1823 = vmul.f32 %v798, %v798
    %v1824 = vmul.f32 %v799, %v799
    %v1825 = vmul.f32 %v800, %v800
    %v1826 = vmul.f32 %v801, %v801
    %v1827 = vmul.f32 %v802, %v802
    %v1828 = vmul.f32 %v803, %v803
    %v1829 = vmul.f32 %v804, %v804
    %v1830 = vmul.f32 %v805, %v805
    %v1831 = vmul.f32 %v806, %v806
    %v1832 = vmul.f32 %v807, %v807
    %v1833 = vmul.f32 %v808, %v808
    %v1834 = vmul.f32 %v809, %v809
    %v1835 = vmul.f32 %v810, %v810
    %v1836 = vmul.f32 %v811, %v811
    %v1837 = vmul.f32 %v812, %v812
    %v1838 = vmul.f32 %v813, %v813
    %v1839 = vmul.f32 %v814, %v814
    %v1840 = vmul.f32 %v815, %v815
    %v1841 = vmul.f32 %v816, %v816
    %v1842 = vmul.f32 %v817, %v817
    %v1843 = vmul.f32 %v818, %v818
    %v1844 = vmul.f32 %v819, %v819
    %v1845 = vmul.f32 %v820, %v820
    %v1846 = vmul.f32 %v821, %v821
    %v1847 = vmul.f32 %v822, %v822
    %v1848 = vmul.f32 %v823, %v823
    %v1849 = vmul.f32 %v824, %v824
    %v1850 = vmul.f32 %v825, %v825
    %v1851 = vmul.f32 %v826, %v826
    %v1852 = vmul.f32 %v827, %v827
    %v1853 = vmul.f32 %v828, %v828
    %v1854 = vmul.f32 %v829, %v829
    %v1855 = vmul.f32 %v830, %v830
    %v1856 = vmul.f32 %v831, %v831
    %v1857 = vmul.f32 %v832, %v832
    %v1858 = vmul.f32 %v833, %v833
    %v1859 = vmul.f32 %v834, %v834
    %v1860 = vmul.f32 %v835, %v835
    %v1861 = vmul.f32 %v836, %v836
    %v1862 = vmul.f32 %v837, %v837
    %v1863 = vmul.f32 %v838, %v838
    %v1864 = vmul.f32 %v839, %v839
    %v1865 = vmul.f32 %v840, %v840
    %v1866 = vmul.f32 %v841, %v841
    %v1867 = vmul.f32 %v842, %v842
    %v1868 = vmul.f32 %v843, %v843
    %v1869 = vmul.f32 %v844, %v844
    %v1870 = vmul.f32 %v845, %v845
    %v1871 = vmul.f32 %v846, %v846
    %v1872 = vmul.f32 %v847, %v847
    %v1873 = vmul.f32 %v848, %v848
    %v1874 = vmul.f32 %v849, %v849
    %v1875 = vmul.f32 %v850, %v850
    %v1876 = vmul.f32 %v851, %v851
    %v1877 = vmul.f32 %v852, %v852
    %v1878 = vmul.f32 %v853, %v853
    %v1879 = vmul.f32 %v854, %v854
    %v1880 = vmul.f32 %v855, %v855
    %v1881 = vmul.f32 %v856, %v856
    %v1882 = vmul.f32 %v857, %v857
    %v1883 = vmul.f32 %v858, %v858
    %v1884 = vmul.f32 %v859, %v859
    %v1885 = vmul.f32 %v860, %v860
    %v1886 = vmul.f32 %v861, %v861
    %v1887 = vmul.f32 %v862, %v862
    %v1888 = vmul.f32 %v863, %v863
    %v1889 = vmul.f32 %v864, %v864
    %v1890 = vmul.f32 %v865, %v865
    %v1891 = vmul.f32 %v866, %v866
    %v1892 = vmul.f32 %v867, %v867
    %v1893 = vmul.f32 %v868, %v868
    %v1894 = vmul.f32 %v869, %v869
    %v1895 = vmul.f32 %v870, %v870
    %v1896 = vmul.f32 %v871, %v871
    %v1897 = vmul.f32 %v872, %v872
    %v1898 = vmul.f32 %v873, %v873
    %v1899 = vmul.f32 %v874, %v874
    %v1900 = vmul.f32 %v875, %v875
    %v1901 = vmul.f32 %v876, %v876
    %v1902 = vmul.f32 %v877, %v877
    %v1903 = vmul.f32 %v878, %v878
    %v1904 = vmul.f32 %v879, %v879
    %v1905 = vmul.f32 %v880, %v880
    %v1906 = vmul.f32 %v881, %v881
    %v1907 = vmul.f32 %v882, %v882
    %v1908 = vmul.f32 %v883, %v883
    %v1909 = vmul.f32 %v884, %v884
    %v1910 = vmul.f32 %v885, %v885
    %v1911 = vmul.f32 %v886, %v886
    %v1912 = vmul.f32 %v887, %v887
    %v1913 = vmul.f32 %v888, %v888
    %v1914 = vmul.f32 %v889, %v889
    %v1915 = vmul.f32 %v890, %v890
    %v1916 = vmul.f32 %v891, %v891
    %v1917 = vmul.f32 %v892, %v892
    %v1918 = vmul.f32 %v893, %v893
    %v1919 = vmul.f32 %v894, %v894
    %v1920 = vmul.f32 %v895, %v895
    %v1921 = vmul.f32 %v896, %v896
    %v1922 = vmul.f32 %v897, %v897
    %v1923 = vmul.f32 %v898, %v898
    %v1924 = vmul.f32 %v899, %v899
    %v1925 = vmul.f32 %v900, %v900
    %v1926 = vmul.f32 %v901, %v901
    %v1927 = vmul.f32 %v902, %v902
    %v1928 = vmul.f32 %v903, %v903
    %v1929 = vmul.f32 %v904, %v904
    %v1930 = vmul.f32 %v905, %v905
    %v1931 = vmul.f32 %v906, %v906
    %v1932 = vmul.f32 %v907, %v907
    %v1933 = vmul.f32 %v908, %v908
    %v1934 = vmul.f32 %v909, %v909
    %v1935 = vmul.f32 %v910, %v910
    %v1936 = vmul.f32 %v911, %v911
    %v1937 = vmul.f32 %v912, %v912
    %v1938 = vmul.f32 %v913, %v913
    %v1939 = vmul.f32 %v914, %v914
    %v1940 = vmul.f32 %v915, %v915
    %v1941 = vmul.f32 %v916, %v916
    %v1942 = vmul.f32 %v917, %v917
    %v1943 = vmul.f32 %v918, %v918
    %v1944 = vmul.f32 %v919, %v919
    %v1945 = vmul.f32 %v920, %v920
    %v1946 = vmul.f32 %v921, %v921
    %v1947 = vmul.f32 %v922, %v922
    %v1948 = vmul.f32 %v923, %v923
    %v1949 = vmul.f32 %v924, %v924
    %v1950 = vmul.f32 %v925, %v925
    %v1951 = vmul.f32 %v926, %v926
    %v1952 = vmul.f32 %v927, %v927
    %v1953 = vmul.f32 %v928, %v928
    %v1954 = vmul.f32 %v929, %v929
    %v1955 = vmul.f32 %v930, %v930
    %v1956 = vmul.f32 %v931, %v931
    %v1957 = vmul.f32 %v932, %v932
    %v1958 = vmul.f32 %v933, %v933
    %v1959 = vmul.f32 %v934, %v934
    %v1960 = vmul.f32 %v935, %v935
    %v1961 = vmul.f32 %v936, %v936
    %v1962 = vmul.f32 %v937, %v937
    %v1963 = vmul.f32 %v938, %v938
    %v1964 = vmul.f32 %v939, %v939
    %v1965 = vmul.f32 %v940, %v940
    %v1966 = vmul.f32 %v941, %v941
    %v1967 = vmul.f32 %v942, %v942
    %v1968 = vmul.f32 %v943, %v943
    %v1969 = vmul.f32 %v944, %v944
    %v1970 = vmul.f32 %v945, %v945
    %v1971 = vmul.f32 %v946, %v946
    %v1972 = vmul.f32 %v947, %v947
    %v1973 = vmul.f32 %v948, %v948
    %v1974 = vmul.f32 %v949, %v949
    %v1975 = vmul.f32 %v950, %v950
    %v1976 = vmul.f32 %v951, %v951
    %v1977 = vmul.f32 %v952, %v952
    %v1978 = vmul.f32 %v953, %v953
    %v1979 = vmul.f32 %v954, %v954
    %v1980 = vmul.f32 %v955, %v955
    %v1981 = vmul.f32 %v956, %v956
    %v1982 = vmul.f32 %v957, %v957
    %v1983 = vmul.f32 %v958, %v958
    %v1984 = vmul.f32 %v959, %v959
    %v1985 = vmul.f32 %v960, %v960
    %v1986 = vmul.f32 %v961, %v961
    %v1987 = vmul.f32 %v962, %v962
    %v1988 = vmul.f32 %v963, %v963
    %v1989 = vmul.f32 %v964, %v964
    %v1990 = vmul.f32 %v965, %v965
    %v1991 = vmul.f32 %v966, %v966
    %v1992 = vmul.f32 %v967, %v967
    %v1993 = vmul.f32 %v968, %v968
    %v1994 = vmul.f32 %v969, %v969
    %v1995 = vmul.f32 %v970, %v970
    %v1996 = vmul.f32 %v971, %v971
    %v1997 = vmul.f32 %v972, %v972
    %v1998 = vmul.f32 %v973, %v973
    %v1999 = vmul.f32 %v974, %v974
    %v2000 = vmul.f32 %v975, %v975
    %v2001 = vmul.f32 %v976, %v976
    %v2002 = vmul.f32 %v977, %v977
    %v2003 = vmul.f32 %v978, %v978
    %v2004 = vmul.f32 %v979, %v979
    %v2005 = vmul.f32 %v980, %v980
    %v2006 = vmul.f32 %v981, %v981
    %v2007 = vmul.f32 %v982, %v982
    %v2008 = vmul.f32 %v983, %v983
    %v2009 = vmul.f32 %v984, %v984
    %v2010 = vmul.f32 %v985, %v985
    %v2011 = vmul.f32 %v986, %v986
    %v2012 = vmul.f32 %v987, %v987
    %v2013 = vmul.f32 %v988, %v988
    %v2014 = vmul.f32 %v989, %v989
    %v2015 = vmul.f32 %v990, %v990
    %v2016 = vmul.f32 %v991, %v991
    %v2017 = vmul.f32 %v992, %v992
    %v2018 = vmul.f32 %v993, %v993
    %v2019 = vmul.f32 %v994, %v994
    %v2020 = vmul.f32 %v995, %v995
    %v2021 = vmul.f32 %v996, %v996
    %v2022 = vmul.f32 %v997, %v997
    %v2023 = vmul.f32 %v998, %v998
    %v2024 = vmul.f32 %v999, %v999
    %v2025 = vmul.f32 %v1000, %v1000
    %v2026 = vmul.f32 %v1001, %v1001
    %v2027 = vmul.f32 %v1002, %v1002
    %v2028 = vmul.f32 %v1003, %v1003
    %v2029 = vmul.f32 %v1004, %v1004
    %v2030 = vmul.f32 %v1005, %v1005
    %v2031 = vmul.f32 %v1006, %v1006
    %v2032 = vmul.f32 %v1007, %v1007
    %v2033 = vmul.f32 %v1008, %v1008
    %v2034 = vmul.f32 %v1009, %v1009
    %v2035 = vmul.f32 %v1010, %v1010
    %v2036 = vmul.f32 %v1011, %v1011
    %v2037 = vmul.f32 %v1012, %v1012
    %v2038 = vmul.f32 %v1013, %v1013
    %v2039 = vmul.f32 %v1014, %v1014
    %v2040 = vmul.f32 %v1015, %v1015
    %v2041 = vmul.f32 %v1016, %v1016
    %v2042 = vmul.f32 %v1017, %v1017
    %v2043 = vmul.f32 %v1018, %v1018
    %v2044 = vmul.f32 %v1019, %v1019
    %v2045 = vmul.f32 %v1020, %v1020
    %v2046 = vmul.f32 %v1021, %v1021
    %v2047 = vmul.f32 %v1022, %v1022
    %v2048 = vmul.f32 %v1023, %v1023
    %v2049 = vmul.f32 %v1024, %v1024
    %v2050 = vmul.f32 %v1025, %v1025
    %v2051 = vmul.f32 %v1026, %v1026
    %v2052 = vmul.f32 %v1027, %v1027
    %v2053 = vmul.f32 %v1028, %v1028
    %v2054 = vmul.f32 %v1029, %v1029
    %v2055 = vmul.f32 %v1030, %v1030
    %v2056 = vmul.f32 %v1031, %v1031
    %v2057 = vmul.f32 %v1032, %v1032
    %v2058 = vmul.f32 %v1033, %v1033
    %v2059 = vmul.f32 %v1034, %v1034
    %v2060 = vmul.f32 %v1035, %v1035
    %v2061 = vmul.f32 %v1036, %v1036
    %v2062 = vmul.f32 %v1037, %v1037
    %v2063 = vmul.f32 %v1038, %v1038
    %v2064 = vmul.f32 %v1039, %v1039
    %v2065 = vmul.f32 %v1040, %v1040
    %v2066 = vmul.f32 %v1041, %v1041
    %v2067 = vmul.f32 %v1042, %v1042
    %v2068 = vmul.f32 %v1043, %v1043
    %v2069 = vmul.f32 %v1044, %v1044
    %v2070 = vmul.f32 %v1045, %v1045
    %v2071 = vmul.f32 %v1046, %v1046
    %v2072 = vmul.f32 %v1047, %v1047
    %v2073 = vmul.f32 %v1048, %v1048
    %v2074 = vmul.f32 %v1049, %v1049
    %v2075 = vmul.f32 %v1050, %v1050
    %v2076 = vmul.f32 %v1051, %v1051
    %v2077 = vmul.f32 %v1052, %v1052
    %v2078 = vmul.f32 %v1053, %v1053
    %v2079 = vmul.f32 %v1054, %v1054
    %v2080 = vmul.f32 %v1055, %v1055
    %v2081 = vmul.f32 %v1056, %v1056
    %v2082 = vmul.f32 %v1057, %v1057
    %v2083 = vmul.f32 %v1058, %v1058
    %v2084 = vmul.f32 %v1059, %v1059
    %v2085 = vmul.f32 %v1060, %v1060
    %v2086 = vmul.f32 %v1061, %v1061
    %v2087 = vadd.f32 %v1063, %v1064
    %v2088 = vadd.f32 %v2087, %v1065
    %v2089 = vadd.f32 %v2088, %v1066
    %v2090 = vadd.f32 %v2089, %v1067
    %v2091 = vadd.f32 %v2090, %v1068
    %v2092 = vadd.f32 %v2091, %v1069
    %v2093 = vadd.f32 %v2092, %v1070
    %v2094 = vadd.f32 %v2093, %v1071
    %v2095 = vadd.f32 %v2094, %v1072
    %v2096 = vadd.f32 %v2095, %v1073
    %v2097 = vadd.f32 %v2096, %v1074
    %v2098 = vadd.f32 %v2097, %v1075
    %v2099 = vadd.f32 %v2098, %v1076
    %v2100 = vadd.f32 %v2099, %v1077
    %v2101 = vadd.f32 %v2100, %v1078
    %v2102 = vadd.f32 %v2101, %v1079
    %v2103 = vadd.f32 %v2102, %v1080
    %v2104 = vadd.f32 %v2103, %v1081
    %v2105 = vadd.f32 %v2104, %v1082
    %v2106 = vadd.f32 %v2105, %v1083
    %v2107 = vadd.f32 %v2106, %v1084
    %v2108 = vadd.f32 %v2107, %v1085
    %v2109 = vadd.f32 %v2108, %v1086
    %v2110 = vadd.f32 %v2109, %v1087
    %v2111 = vadd.f32 %v2110, %v1088
    %v2112 = vadd.f32 %v2111, %v1089
    %v2113 = vadd.f32 %v2112, %v1090
    %v2114 = vadd.f32 %v2113, %v1091
    %v2115 = vadd.f32 %v2114, %v1092
    %v2116 = vadd.f32 %v2115, %v1093
    %v2117 = vadd.f32 %v2116, %v1094
    %v2118 = vadd.f32 %v2117, %v1095
    %v2119 = vadd.f32 %v2118, %v1096
    %v2120 = vadd.f32 %v2119, %v1097
    %v2121 = vadd.f32 %v2120, %v1098
    %v2122 = vadd.f32 %v2121, %v1099
    %v2123 = vadd.f32 %v2122, %v1100
    %v2124 = vadd.f32 %v2123, %v1101
    %v2125 = vadd.f32 %v2124, %v1102
    %v2126 = vadd.f32 %v2125, %v1103
    %v2127 = vadd.f32 %v2126, %v1104
    %v2128 = vadd.f32 %v2127, %v1105
    %v2129 = vadd.f32 %v2128, %v1106
    %v2130 = vadd.f32 %v2129, %v1107
    %v2131 = vadd.f32 %v2130, %v1108
    %v2132 = vadd.f32 %v2131, %v1109
    %v2133 = vadd.f32 %v2132, %v1110
    %v2134 = vadd.f32 %v2133, %v1111
    %v2135 = vadd.f32 %v2134, %v1112
    %v2136 = vadd.f32 %v2135, %v1113
    %v2137 = vadd.f32 %v2136, %v1114
    %v2138 = vadd.f32 %v2137, %v1115
    %v2139 = vadd.f32 %v2138, %v1116
    %v2140 = vadd.f32 %v2139, %v1117
    %v2141 = vadd.f32 %v2140, %v1118
    %v2142 = vadd.f32 %v2141, %v1119
    %v2143 = vadd.f32 %v2142, %v1120
    %v2144 = vadd.f32 %v2143, %v1121
    %v2145 = vadd.f32 %v2144, %v1122
    %v2146 = vadd.f32 %v2145, %v1123
    %v2147 = vadd.f32 %v2146, %v1124
    %v2148 = vadd.f32 %v2147, %v1125
    %v2149 = vadd.f32 %v2148, %v1126
    %v2150 = vadd.f32 %v2149, %v1127
    %v2151 = vadd.f32 %v2150, %v1128
    %v2152 = vadd.f32 %v2151, %v1129
    %v2153 = vadd.f32 %v2152, %v1130
    %v2154 = vadd.f32 %v2153, %v1131
    %v2155 = vadd.f32 %v2154, %v1132
    %v2156 = vadd.f32 %v2155, %v1133
    %v2157 = vadd.f32 %v2156, %v1134
    %v2158 = vadd.f32 %v2157, %v1135
    %v2159 = vadd.f32 %v2158, %v1136
    %v2160 = vadd.f32 %v2159, %v1137
    %v2161 = vadd.f32 %v2160, %v1138
    %v2162 = vadd.f32 %v2161, %v1139
    %v2163 = vadd.f32 %v2162, %v1140
    %v2164 = vadd.f32 %v2163, %v1141
    %v2165 = vadd.f32 %v2164, %v1142
    %v2166 = vadd.f32 %v2165, %v1143
    %v2167 = vadd.f32 %v2166, %v1144
    %v2168 = vadd.f32 %v2167, %v1145
    %v2169 = vadd.f32 %v2168, %v1146
    %v2170 = vadd.f32 %v2169, %v1147
    %v2171 = vadd.f32 %v2170, %v1148
    %v2172 = vadd.f32 %v2171, %v1149
    %v2173 = vadd.f32 %v2172, %v1150
    %v2174 = vadd.f32 %v2173, %v1151
    %v2175 = vadd.f32 %v2174, %v1152
    %v2176 = vadd.f32 %v2175, %v1153
    %v2177 = vadd.f32 %v2176, %v1154
    %v2178 = vadd.f32 %v2177, %v1155
    %v2179 = vadd.f32 %v2178, %v1156
    %v2180 = vadd.f32 %v2179, %v1157
    %v2181 = vadd.f32 %v2180, %v1158
    %v2182 = vadd.f32 %v2181, %v1159
    %v2183 = vadd.f32 %v2182, %v1160
    %v2184 = vadd.f32 %v2183, %v1161
    %v2185 = vadd.f32 %v2184, %v1162
    %v2186 = vadd.f32 %v2185, %v1163
    %v2187 = vadd.f32 %v2186, %v1164
    %v2188 = vadd.f32 %v2187, %v1165
    %v2189 = vadd.f32 %v2188, %v1166
    %v2190 = vadd.f32 %v2189, %v1167
    %v2191 = vadd.f32 %v2190, %v1168
    %v2192 = vadd.f32 %v2191, %v1169
    %v2193 = vadd.f32 %v2192, %v1170
    %v2194 = vadd.f32 %v2193, %v1171
    %v2195 = vadd.f32 %v2194, %v1172
    %v2196 = vadd.f32 %v2195, %v1173
    %v2197 = vadd.f32 %v2196, %v1174
    %v2198 = vadd.f32 %v2197, %v1175
    %v2199 = vadd.f32 %v2198, %v1176
    %v2200 = vadd.f32 %v2199, %v1177
    %v2201 = vadd.f32 %v2200, %v1178
    %v2202 = vadd.f32 %v2201, %v1179
    %v2203 = vadd.f32 %v2202, %v1180
    %v2204 = vadd.f32 %v2203, %v1181
    %v2205 = vadd.f32 %v2204, %v1182
    %v2206 = vadd.f32 %v2205, %v1183
    %v2207 = vadd.f32 %v2206, %v1184
    %v2208 = vadd.f32 %v2207, %v1185
    %v2209 = vadd.f32 %v2208, %v1186
    %v2210 = vadd.f32 %v2209, %v1187
    %v2211 = vadd.f32 %v2210, %v1188
    %v2212 = vadd.f32 %v2211, %v1189
    %v2213 = vadd.f32 %v2212, %v1190
    %v2214 = vadd.f32 %v2213, %v1191
    %v2215 = vadd.f32 %v2214, %v1192
    %v2216 = vadd.f32 %v2215, %v1193
    %v2217 = vadd.f32 %v2216, %v1194
    %v2218 = vadd.f32 %v2217, %v1195
    %v2219 = vadd.f32 %v2218, %v1196
    %v2220 = vadd.f32 %v2219, %v1197
    %v2221 = vadd.f32 %v2220, %v1198
    %v2222 = vadd.f32 %v2221, %v1199
    %v2223 = vadd.f32 %v2222, %v1200
    %v2224 = vadd.f32 %v2223, %v1201
    %v2225 = vadd.f32 %v2224, %v1202
    %v2226 = vadd.f32 %v2225, %v1203
    %v2227 = vadd.f32 %v2226, %v1204
    %v2228 = vadd.f32 %v2227, %v1205
    %v2229 = vadd.f32 %v2228, %v1206
    %v2230 = vadd.f32 %v2229, %v1207
    %v2231 = vadd.f32 %v2230, %v1208
    %v2232 = vadd.f32 %v2231, %v1209
    %v2233 = vadd.f32 %v2232, %v1210
    %v2234 = vadd.f32 %v2233, %v1211
    %v2235 = vadd.f32 %v2234, %v1212
    %v2236 = vadd.f32 %v2235, %v1213
    %v2237 = vadd.f32 %v2236, %v1214
    %v2238 = vadd.f32 %v2237, %v1215
    %v2239 = vadd.f32 %v2238, %v1216
    %v2240 = vadd.f32 %v2239, %v1217
    %v2241 = vadd.f32 %v2240, %v1218
    %v2242 = vadd.f32 %v2241, %v1219
    %v2243 = vadd.f32 %v2242, %v1220
    %v2244 = vadd.f32 %v2243, %v1221
    %v2245 = vadd.f32 %v2244, %v1222
    %v2246 = vadd.f32 %v2245, %v1223
    %v2247 = vadd.f32 %v2246, %v1224
    %v2248 = vadd.f32 %v2247, %v1225
    %v2249 = vadd.f32 %v2248, %v1226
    %v2250 = vadd.f32 %v2249, %v1227
    %v2251 = vadd.f32 %v2250, %v1228
    %v2252 = vadd.f32 %v2251, %v1229
    %v2253 = vadd.f32 %v2252, %v1230
    %v2254 = vadd.f32 %v2253, %v1231
    %v2255 = vadd.f32 %v2254, %v1232
    %v2256 = vadd.f32 %v2255, %v1233
    %v2257 = vadd.f32 %v2256, %v1234
    %v2258 = vadd.f32 %v2257, %v1235
    %v2259 = vadd.f32 %v2258, %v1236
    %v2260 = vadd.f32 %v2259, %v1237
    %v2261 = vadd.f32 %v2260, %v1238
    %v2262 = vadd.f32 %v2261, %v1239
    %v2263 = vadd.f32 %v2262, %v1240
    %v2264 = vadd.f32 %v2263, %v1241
    %v2265 = vadd.f32 %v2264, %v1242
    %v2266 = vadd.f32 %v2265, %v1243
    %v2267 = vadd.f32 %v2266, %v1244
    %v2268 = vadd.f32 %v2267, %v1245
    %v2269 = vadd.f32 %v2268, %v1246
    %v2270 = vadd.f32 %v2269, %v1247
    %v2271 = vadd.f32 %v2270, %v1248
    %v2272 = vadd.f32 %v2271, %v1249
    %v2273 = vadd.f32 %v2272, %v1250
    %v2274 = vadd.f32 %v2273, %v1251
    %v2275 = vadd.f32 %v2274, %v1252
    %v2276 = vadd.f32 %v2275, %v1253
    %v2277 = vadd.f32 %v2276, %v1254
    %v2278 = vadd.f32 %v2277, %v1255
    %v2279 = vadd.f32 %v2278, %v1256
    %v2280 = vadd.f32 %v2279, %v1257
    %v2281 = vadd.f32 %v2280, %v1258
    %v2282 = vadd.f32 %v2281, %v1259
    %v2283 = vadd.f32 %v2282, %v1260
    %v2284 = vadd.f32 %v2283, %v1261
    %v2285 = vadd.f32 %v2284, %v1262
    %v2286 = vadd.f32 %v2285, %v1263
    %v2287 = vadd.f32 %v2286, %v1264
    %v2288 = vadd.f32 %v2287, %v1265
    %v2289 = vadd.f32 %v2288, %v1266
    %v2290 = vadd.f32 %v2289, %v1267
    %v2291 = vadd.f32 %v2290, %v1268
    %v2292 = vadd.f32 %v2291, %v1269
    %v2293 = vadd.f32 %v2292, %v1270
    %v2294 = vadd.f32 %v2293, %v1271
    %v2295 = vadd.f32 %v2294, %v1272
    %v2296 = vadd.f32 %v2295, %v1273
    %v2297 = vadd.f32 %v2296, %v1274
    %v2298 = vadd.f32 %v2297, %v1275
    %v2299 = vadd.f32 %v2298, %v1276
    %v2300 = vadd.f32 %v2299, %v1277
    %v2301 = vadd.f32 %v2300, %v1278
    %v2302 = vadd.f32 %v2301, %v1279
    %v2303 = vadd.f32 %v2302, %v1280
    %v2304 = vadd.f32 %v2303, %v1281
    %v2305 = vadd.f32 %v2304, %v1282
    %v2306 = vadd.f32 %v2305, %v1283
    %v2307 = vadd.f32 %v2306, %v1284
    %v2308 = vadd.f32 %v2307, %v1285
    %v2309 = vadd.f32 %v2308, %v1286
    %v2310 = vadd.f32 %v2309, %v1287
    %v2311 = vadd.f32 %v2310, %v1288
    %v2312 = vadd.f32 %v2311, %v1289
    %v2313 = vadd.f32 %v2312, %v1290
    %v2314 = vadd.f32 %v2313, %v1291
    %v2315 = vadd.f32 %v2314, %v1292
    %v2316 = vadd.f32 %v2315, %v1293
    %v2317 = vadd.f32 %v2316, %v1294
    %v2318 = vadd.f32 %v2317, %v1295
    %v2319 = vadd.f32 %v2318, %v1296
    %v2320 = vadd.f32 %v2319, %v1297
    %v2321 = vadd.f32 %v2320, %v1298
    %v2322 = vadd.f32 %v2321, %v1299
    %v2323 = vadd.f32 %v2322, %v1300
    %v2324 = vadd.f32 %v2323, %v1301
    %v2325 = vadd.f32 %v2324, %v1302
    %v2326 = vadd.f32 %v2325, %v1303
    %v2327 = vadd.f32 %v2326, %v1304
    %v2328 = vadd.f32 %v2327, %v1305
    %v2329 = vadd.f32 %v2328, %v1306
    %v2330 = vadd.f32 %v2329, %v1307
    %v2331 = vadd.f32 %v2330, %v1308
    %v2332 = vadd.f32 %v2331, %v1309
    %v2333 = vadd.f32 %v2332, %v1310
    %v2334 = vadd.f32 %v2333, %v1311
    %v2335 = vadd.f32 %v2334, %v1312
    %v2336 = vadd.f32 %v2335, %v1313
    %v2337 = vadd.f32 %v2336, %v1314
    %v2338 = vadd.f32 %v2337, %v1315
    %v2339 = vadd.f32 %v2338, %v1316
    %v2340 = vadd.f32 %v2339, %v1317
    %v2341 = vadd.f32 %v2340, %v1318
    %v2342 = vadd.f32 %v2341, %v1319
    %v2343 = vadd.f32 %v2342, %v1320
    %v2344 = vadd.f32 %v2343, %v1321
    %v2345 = vadd.f32 %v2344, %v1322
    %v2346 = vadd.f32 %v2345, %v1323
    %v2347 = vadd.f32 %v2346, %v1324
    %v2348 = vadd.f32 %v2347, %v1325
    %v2349 = vadd.f32 %v2348, %v1326
    %v2350 = vadd.f32 %v2349, %v1327
    %v2351 = vadd.f32 %v2350, %v1328
    %v2352 = vadd.f32 %v2351, %v1329
    %v2353 = vadd.f32 %v2352, %v1330
    %v2354 = vadd.f32 %v2353, %v1331
    %v2355 = vadd.f32 %v2354, %v1332
    %v2356 = vadd.f32 %v2355, %v1333
    %v2357 = vadd.f32 %v2356, %v1334
    %v2358 = vadd.f32 %v2357, %v1335
    %v2359 = vadd.f32 %v2358, %v1336
    %v2360 = vadd.f32 %v2359, %v1337
    %v2361 = vadd.f32 %v2360, %v1338
    %v2362 = vadd.f32 %v2361, %v1339
    %v2363 = vadd.f32 %v2362, %v1340
    %v2364 = vadd.f32 %v2363, %v1341
    %v2365 = vadd.f32 %v2364, %v1342
    %v2366 = vadd.f32 %v2365, %v1343
    %v2367 = vadd.f32 %v2366, %v1344
    %v2368 = vadd.f32 %v2367, %v1345
    %v2369 = vadd.f32 %v2368, %v1346
    %v2370 = vadd.f32 %v2369, %v1347
    %v2371 = vadd.f32 %v2370, %v1348
    %v2372 = vadd.f32 %v2371, %v1349
    %v2373 = vadd.f32 %v2372, %v1350
    %v2374 = vadd.f32 %v2373, %v1351
    %v2375 = vadd.f32 %v2374, %v1352
    %v2376 = vadd.f32 %v2375, %v1353
    %v2377 = vadd.f32 %v2376, %v1354
    %v2378 = vadd.f32 %v2377, %v1355
    %v2379 = vadd.f32 %v2378, %v1356
    %v2380 = vadd.f32 %v2379, %v1357
    %v2381 = vadd.f32 %v2380, %v1358
    %v2382 = vadd.f32 %v2381, %v1359
    %v2383 = vadd.f32 %v2382, %v1360
    %v2384 = vadd.f32 %v2383, %v1361
    %v2385 = vadd.f32 %v2384, %v1362
    %v2386 = vadd.f32 %v2385, %v1363
    %v2387 = vadd.f32 %v2386, %v1364
    %v2388 = vadd.f32 %v2387, %v1365
    %v2389 = vadd.f32 %v2388, %v1366
    %v2390 = vadd.f32 %v2389, %v1367
    %v2391 = vadd.f32 %v2390, %v1368
    %v2392 = vadd.f32 %v2391, %v1369
    %v2393 = vadd.f32 %v2392, %v1370
    %v2394 = vadd.f32 %v2393, %v1371
    %v2395 = vadd.f32 %v2394, %v1372
    %v2396 = vadd.f32 %v2395, %v1373
    %v2397 = vadd.f32 %v2396, %v1374
    %v2398 = vadd.f32 %v2397, %v1375
    %v2399 = vadd.f32 %v2398, %v1376
    %v2400 = vadd.f32 %v2399, %v1377
    %v2401 = vadd.f32 %v2400, %v1378
    %v2402 = vadd.f32 %v2401, %v1379
    %v2403 = vadd.f32 %v2402, %v1380
    %v2404 = vadd.f32 %v2403, %v1381
    %v2405 = vadd.f32 %v2404, %v1382
    %v2406 = vadd.f32 %v2405, %v1383
    %v2407 = vadd.f32 %v2406, %v1384
    %v2408 = vadd.f32 %v2407, %v1385
    %v2409 = vadd.f32 %v2408, %v1386
    %v2410 = vadd.f32 %v2409, %v1387
    %v2411 = vadd.f32 %v2410, %v1388
    %v2412 = vadd.f32 %v2411, %v1389
    %v2413 = vadd.f32 %v2412, %v1390
    %v2414 = vadd.f32 %v2413, %v1391
    %v2415 = vadd.f32 %v2414, %v1392
    %v2416 = vadd.f32 %v2415, %v1393
    %v2417 = vadd.f32 %v2416, %v1394
    %v2418 = vadd.f32 %v2417, %v1395
    %v2419 = vadd.f32 %v2418, %v1396
    %v2420 = vadd.f32 %v2419, %v1397
    %v2421 = vadd.f32 %v2420, %v1398
    %v2422 = vadd.f32 %v2421, %v1399
    %v2423 = vadd.f32 %v2422, %v1400
    %v2424 = vadd.f32 %v2423, %v1401
    %v2425 = vadd.f32 %v2424, %v1402
    %v2426 = vadd.f32 %v2425, %v1403
    %v2427 = vadd.f32 %v2426, %v1404
    %v2428 = vadd.f32 %v2427, %v1405
    %v2429 = vadd.f32 %v2428, %v1406
    %v2430 = vadd.f32 %v2429, %v1407
    %v2431 = vadd.f32 %v2430, %v1408
    %v2432 = vadd.f32 %v2431, %v1409
    %v2433 = vadd.f32 %v2432, %v1410
    %v2434 = vadd.f32 %v2433, %v1411
    %v2435 = vadd.f32 %v2434, %v1412
    %v2436 = vadd.f32 %v2435, %v1413
    %v2437 = vadd.f32 %v2436, %v1414
    %v2438 = vadd.f32 %v2437, %v1415
    %v2439 = vadd.f32 %v2438, %v1416
    %v2440 = vadd.f32 %v2439, %v1417
    %v2441 = vadd.f32 %v2440, %v1418
    %v2442 = vadd.f32 %v2441, %v1419
    %v2443 = vadd.f32 %v2442, %v1420
    %v2444 = vadd.f32 %v2443, %v1421
    %v2445 = vadd.f32 %v2444, %v1422
    %v2446 = vadd.f32 %v2445, %v1423
    %v2447 = vadd.f32 %v2446, %v1424
    %v2448 = vadd.f32 %v2447, %v1425
    %v2449 = vadd.f32 %v2448, %v1426
    %v2450 = vadd.f32 %v2449, %v1427
    %v2451 = vadd.f32 %v2450, %v1428
    %v2452 = vadd.f32 %v2451, %v1429
    %v2453 = vadd.f32 %v2452, %v1430
    %v2454 = vadd.f32 %v2453, %v1431
    %v2455 = vadd.f32 %v2454, %v1432
    %v2456 = vadd.f32 %v2455, %v1433
    %v2457 = vadd.f32 %v2456, %v1434
    %v2458 = vadd.f32 %v2457, %v1435
    %v2459 = vadd.f32 %v2458, %v1436
    %v2460 = vadd.f32 %v2459, %v1437
    %v2461 = vadd.f32 %v2460, %v1438
    %v2462 = vadd.f32 %v2461, %v1439
    %v2463 = vadd.f32 %v2462, %v1440
    %v2464 = vadd.f32 %v2463, %v1441
    %v2465 = vadd.f32 %v2464, %v1442
    %v2466 = vadd.f32 %v2465, %v1443
    %v2467 = vadd.f32 %v2466, %v1444
    %v2468 = vadd.f32 %v2467, %v1445
    %v2469 = vadd.f32 %v2468, %v1446
    %v2470 = vadd.f32 %v2469, %v1447
    %v2471 = vadd.f32 %v2470, %v1448
    %v2472 = vadd.f32 %v2471, %v1449
    %v2473 = vadd.f32 %v2472, %v1450
    %v2474 = vadd.f32 %v2473, %v1451
    %v2475 = vadd.f32 %v2474, %v1452
    %v2476 = vadd.f32 %v2475, %v1453
    %v2477 = vadd.f32 %v2476, %v1454
    %v2478 = vadd.f32 %v2477, %v1455
    %v2479 = vadd.f32 %v2478, %v1456
    %v2480 = vadd.f32 %v2479, %v1457
    %v2481 = vadd.f32 %v2480, %v1458
    %v2482 = vadd.f32 %v2481, %v1459
    %v2483 = vadd.f32 %v2482, %v1460
    %v2484 = vadd.f32 %v2483, %v1461
    %v2485 = vadd.f32 %v2484, %v1462
    %v2486 = vadd.f32 %v2485, %v1463
    %v2487 = vadd.f32 %v2486, %v1464
    %v2488 = vadd.f32 %v2487, %v1465
    %v2489 = vadd.f32 %v2488, %v1466
    %v2490 = vadd.f32 %v2489, %v1467
    %v2491 = vadd.f32 %v2490, %v1468
    %v2492 = vadd.f32 %v2491, %v1469
    %v2493 = vadd.f32 %v2492, %v1470
    %v2494 = vadd.f32 %v2493, %v1471
    %v2495 = vadd.f32 %v2494, %v1472
    %v2496 = vadd.f32 %v2495, %v1473
    %v2497 = vadd.f32 %v2496, %v1474
    %v2498 = vadd.f32 %v2497, %v1475
    %v2499 = vadd.f32 %v2498, %v1476
    %v2500 = vadd.f32 %v2499, %v1477
    %v2501 = vadd.f32 %v2500, %v1478
    %v2502 = vadd.f32 %v2501, %v1479
    %v2503 = vadd.f32 %v2502, %v1480
    %v2504 = vadd.f32 %v2503, %v1481
    %v2505 = vadd.f32 %v2504, %v1482
    %v2506 = vadd.f32 %v2505, %v1483
    %v2507 = vadd.f32 %v2506, %v1484
    %v2508 = vadd.f32 %v2507, %v1485
    %v2509 = vadd.f32 %v2508, %v1486
    %v2510 = vadd.f32 %v2509, %v1487
    %v2511 = vadd.f32 %v2510, %v1488
    %v2512 = vadd.f32 %v2511, %v1489
    %v2513 = vadd.f32 %v2512, %v1490
    %v2514 = vadd.f32 %v2513, %v1491
    %v2515 = vadd.f32 %v2514, %v1492
    %v2516 = vadd.f32 %v2515, %v1493
    %v2517 = vadd.f32 %v2516, %v1494
    %v2518 = vadd.f32 %v2517, %v1495
    %v2519 = vadd.f32 %v2518, %v1496
    %v2520 = vadd.f32 %v2519, %v1497
    %v2521 = vadd.f32 %v2520, %v1498
    %v2522 = vadd.f32 %v2521, %v1499
    %v2523 = vadd.f32 %v2522, %v1500
    %v2524 = vadd.f32 %v2523, %v1501
    %v2525 = vadd.f32 %v2524, %v1502
    %v2526 = vadd.f32 %v2525, %v1503
    %v2527 = vadd.f32 %v2526, %v1504
    %v2528 = vadd.f32 %v2527, %v1505
    %v2529 = vadd.f32 %v2528, %v1506
    %v2530 = vadd.f32 %v2529, %v1507
    %v2531 = vadd.f32 %v2530, %v1508
    %v2532 = vadd.f32 %v2531, %v1509
    %v2533 = vadd.f32 %v2532, %v1510
    %v2534 = vadd.f32 %v2533, %v1511
    %v2535 = vadd.f32 %v2534, %v1512
    %v2536 = vadd.f32 %v2535, %v1513
    %v2537 = vadd.f32 %v2536, %v1514
    %v2538 = vadd.f32 %v2537, %v1515
    %v2539 = vadd.f32 %v2538, %v1516
    %v2540 = vadd.f32 %v2539, %v1517
    %v2541 = vadd.f32 %v2540, %v1518
    %v2542 = vadd.f32 %v2541, %v1519
    %v2543 = vadd.f32 %v2542, %v1520
    %v2544 = vadd.f32 %v2543, %v1521
    %v2545 = vadd.f32 %v2544, %v1522
    %v2546 = vadd.f32 %v2545, %v1523
    %v2547 = vadd.f32 %v2546, %v1524
    %v2548 = vadd.f32 %v2547, %v1525
    %v2549 = vadd.f32 %v2548, %v1526
    %v2550 = vadd.f32 %v2549, %v1527
    %v2551 = vadd.f32 %v2550, %v1528
    %v2552 = vadd.f32 %v2551, %v1529
    %v2553 = vadd.f32 %v2552, %v1530
    %v2554 = vadd.f32 %v2553, %v1531
    %v2555 = vadd.f32 %v2554, %v1532
    %v2556 = vadd.f32 %v2555, %v1533
    %v2557 = vadd.f32 %v2556, %v1534
    %v2558 = vadd.f32 %v2557, %v1535
    %v2559 = vadd.f32 %v2558, %v1536
    %v2560 = vadd.f32 %v2559, %v1537
    %v2561 = vadd.f32 %v2560, %v1538
    %v2562 = vadd.f32 %v2561, %v1539
    %v2563 = vadd.f32 %v2562, %v1540
    %v2564 = vadd.f32 %v2563, %v1541
    %v2565 = vadd.f32 %v2564, %v1542
    %v2566 = vadd.f32 %v2565, %v1543
    %v2567 = vadd.f32 %v2566, %v1544
    %v2568 = vadd.f32 %v2567, %v1545
    %v2569 = vadd.f32 %v2568, %v1546
    %v2570 = vadd.f32 %v2569, %v1547
    %v2571 = vadd.f32 %v2570, %v1548
    %v2572 = vadd.f32 %v2571, %v1549
    %v2573 = vadd.f32 %v2572, %v1550
    %v2574 = vadd.f32 %v2573, %v1551
    %v2575 = vadd.f32 %v2574, %v1552
    %v2576 = vadd.f32 %v2575, %v1553
    %v2577 = vadd.f32 %v2576, %v1554
    %v2578 = vadd.f32 %v2577, %v1555
    %v2579 = vadd.f32 %v2578, %v1556
    %v2580 = vadd.f32 %v2579, %v1557
    %v2581 = vadd.f32 %v2580, %v1558
    %v2582 = vadd.f32 %v2581, %v1559
    %v2583 = vadd.f32 %v2582, %v1560
    %v2584 = vadd.f32 %v2583, %v1561
    %v2585 = vadd.f32 %v2584, %v1562
    %v2586 = vadd.f32 %v2585, %v1563
    %v2587 = vadd.f32 %v2586, %v1564
    %v2588 = vadd.f32 %v2587, %v1565
    %v2589 = vadd.f32 %v2588, %v1566
    %v2590 = vadd.f32 %v2589, %v1567
    %v2591 = vadd.f32 %v2590, %v1568
    %v2592 = vadd.f32 %v2591, %v1569
    %v2593 = vadd.f32 %v2592, %v1570
    %v2594 = vadd.f32 %v2593, %v1571
    %v2595 = vadd.f32 %v2594, %v1572
    %v2596 = vadd.f32 %v2595, %v1573
    %v2597 = vadd.f32 %v2596, %v1574
    %v2598 = vadd.f32 %v2597, %v1575
    %v2599 = vadd.f32 %v2598, %v1576
    %v2600 = vadd.f32 %v2599, %v1577
    %v2601 = vadd.f32 %v2600, %v1578
    %v2602 = vadd.f32 %v2601, %v1579
    %v2603 = vadd.f32 %v2602, %v1580
    %v2604 = vadd.f32 %v2603, %v1581
    %v2605 = vadd.f32 %v2604, %v1582
    %v2606 = vadd.f32 %v2605, %v1583
    %v2607 = vadd.f32 %v2606, %v1584
    %v2608 = vadd.f32 %v2607, %v1585
    %v2609 = vadd.f32 %v2608, %v1586
    %v2610 = vadd.f32 %v2609, %v1587
    %v2611 = vadd.f32 %v2610, %v1588
    %v2612 = vadd.f32 %v2611, %v1589
    %v2613 = vadd.f32 %v2612, %v1590
    %v2614 = vadd.f32 %v2613, %v1591
    %v2615 = vadd.f32 %v2614, %v1592
    %v2616 = vadd.f32 %v2615, %v1593
    %v2617 = vadd.f32 %v2616, %v1594
    %v2618 = vadd.f32 %v2617, %v1595
    %v2619 = vadd.f32 %v2618, %v1596
    %v2620 = vadd.f32 %v2619, %v1597
    %v2621 = vadd.f32 %v2620, %v1598
    %v2622 = vadd.f32 %v2621, %v1599
    %v2623 = vadd.f32 %v2622, %v1600
    %v2624 = vadd.f32 %v2623, %v1601
    %v2625 = vadd.f32 %v2624, %v1602
    %v2626 = vadd.f32 %v2625, %v1603
    %v2627 = vadd.f32 %v2626, %v1604
    %v2628 = vadd.f32 %v2627, %v1605
    %v2629 = vadd.f32 %v2628, %v1606
    %v2630 = vadd.f32 %v2629, %v1607
    %v2631 = vadd.f32 %v2630, %v1608
    %v2632 = vadd.f32 %v2631, %v1609
    %v2633 = vadd.f32 %v2632, %v1610
    %v2634 = vadd.f32 %v2633, %v1611
    %v2635 = vadd.f32 %v2634, %v1612
    %v2636 = vadd.f32 %v2635, %v1613
    %v2637 = vadd.f32 %v2636, %v1614
    %v2638 = vadd.f32 %v2637, %v1615
    %v2639 = vadd.f32 %v2638, %v1616
    %v2640 = vadd.f32 %v2639, %v1617
    %v2641 = vadd.f32 %v2640, %v1618
    %v2642 = vadd.f32 %v2641, %v1619
    %v2643 = vadd.f32 %v2642, %v1620
    %v2644 = vadd.f32 %v2643, %v1621
    %v2645 = vadd.f32 %v2644, %v1622
    %v2646 = vadd.f32 %v2645, %v1623
    %v2647 = vadd.f32 %v2646, %v1624
    %v2648 = vadd.f32 %v2647, %v1625
    %v2649 = vadd.f32 %v2648, %v1626
    %v2650 = vadd.f32 %v2649, %v1627
    %v2651 = vadd.f32 %v2650, %v1628
    %v2652 = vadd.f32 %v2651, %v1629
    %v2653 = vadd.f32 %v2652, %v1630
    %v2654 = vadd.f32 %v2653, %v1631
    %v2655 = vadd.f32 %v2654, %v1632
    %v2656 = vadd.f32 %v2655, %v1633
    %v2657 = vadd.f32 %v2656, %v1634
    %v2658 = vadd.f32 %v2657, %v1635
    %v2659 = vadd.f32 %v2658, %v1636
    %v2660 = vadd.f32 %v2659, %v1637
    %v2661 = vadd.f32 %v2660, %v1638
    %v2662 = vadd.f32 %v2661, %v1639
    %v2663 = vadd.f32 %v2662, %v1640
    %v2664 = vadd.f32 %v2663, %v1641
    %v2665 = vadd.f32 %v2664, %v1642
    %v2666 = vadd.f32 %v2665, %v1643
    %v2667 = vadd.f32 %v2666, %v1644
    %v2668 = vadd.f32 %v2667, %v1645
    %v2669 = vadd.f32 %v2668, %v1646
    %v2670 = vadd.f32 %v2669, %v1647
    %v2671 = vadd.f32 %v2670, %v1648
    %v2672 = vadd.f32 %v2671, %v1649
    %v2673 = vadd.f32 %v2672, %v1650
    %v2674 = vadd.f32 %v2673, %v1651
    %v2675 = vadd.f32 %v2674, %v1652
    %v2676 = vadd.f32 %v2675, %v1653
    %v2677 = vadd.f32 %v2676, %v1654
    %v2678 = vadd.f32 %v2677, %v1655
    %v2679 = vadd.f32 %v2678, %v1656
    %v2680 = vadd.f32 %v2679, %v1657
    %v2681 = vadd.f32 %v2680, %v1658
    %v2682 = vadd.f32 %v2681, %v1659
    %v2683 = vadd.f32 %v2682, %v1660
    %v2684 = vadd.f32 %v2683, %v1661
    %v2685 = vadd.f32 %v2684, %v1662
    %v2686 = vadd.f32 %v2685, %v1663
    %v2687 = vadd.f32 %v2686, %v1664
    %v2688 = vadd.f32 %v2687, %v1665
    %v2689 = vadd.f32 %v2688, %v1666
    %v2690 = vadd.f32 %v2689, %v1667
    %v2691 = vadd.f32 %v2690, %v1668
    %v2692 = vadd.f32 %v2691, %v1669
    %v2693 = vadd.f32 %v2692, %v1670
    %v2694 = vadd.f32 %v2693, %v1671
    %v2695 = vadd.f32 %v2694, %v1672
    %v2696 = vadd.f32 %v2695, %v1673
    %v2697 = vadd.f32 %v2696, %v1674
    %v2698 = vadd.f32 %v2697, %v1675
    %v2699 = vadd.f32 %v2698, %v1676
    %v2700 = vadd.f32 %v2699, %v1677
    %v2701 = vadd.f32 %v2700, %v1678
    %v2702 = vadd.f32 %v2701, %v1679
    %v2703 = vadd.f32 %v2702, %v1680
    %v2704 = vadd.f32 %v2703, %v1681
    %v2705 = vadd.f32 %v2704, %v1682
    %v2706 = vadd.f32 %v2705, %v1683
    %v2707 = vadd.f32 %v2706, %v1684
    %v2708 = vadd.f32 %v2707, %v1685
    %v2709 = vadd.f32 %v2708, %v1686
    %v2710 = vadd.f32 %v2709, %v1687
    %v2711 = vadd.f32 %v2710, %v1688
    %v2712 = vadd.f32 %v2711, %v1689
    %v2713 = vadd.f32 %v2712, %v1690
    %v2714 = vadd.f32 %v2713, %v1691
    %v2715 = vadd.f32 %v2714, %v1692
    %v2716 = vadd.f32 %v2715, %v1693
    %v2717 = vadd.f32 %v2716, %v1694
    %v2718 = vadd.f32 %v2717, %v1695
    %v2719 = vadd.f32 %v2718, %v1696
    %v2720 = vadd.f32 %v2719, %v1697
    %v2721 = vadd.f32 %v2720, %v1698
    %v2722 = vadd.f32 %v2721, %v1699
    %v2723 = vadd.f32 %v2722, %v1700
    %v2724 = vadd.f32 %v2723, %v1701
    %v2725 = vadd.f32 %v2724, %v1702
    %v2726 = vadd.f32 %v2725, %v1703
    %v2727 = vadd.f32 %v2726, %v1704
    %v2728 = vadd.f32 %v2727, %v1705
    %v2729 = vadd.f32 %v2728, %v1706
    %v2730 = vadd.f32 %v2729, %v1707
    %v2731 = vadd.f32 %v2730, %v1708
    %v2732 = vadd.f32 %v2731, %v1709
    %v2733 = vadd.f32 %v2732, %v1710
    %v2734 = vadd.f32 %v2733, %v1711
    %v2735 = vadd.f32 %v2734, %v1712
    %v2736 = vadd.f32 %v2735, %v1713
    %v2737 = vadd.f32 %v2736, %v1714
    %v2738 = vadd.f32 %v2737, %v1715
    %v2739 = vadd.f32 %v2738, %v1716
    %v2740 = vadd.f32 %v2739, %v1717
    %v2741 = vadd.f32 %v2740, %v1718
    %v2742 = vadd.f32 %v2741, %v1719
    %v2743 = vadd.f32 %v2742, %v1720
    %v2744 = vadd.f32 %v2743, %v1721
    %v2745 = vadd.f32 %v2744, %v1722
    %v2746 = vadd.f32 %v2745, %v1723
    %v2747 = vadd.f32 %v2746, %v1724
    %v2748 = vadd.f32 %v2747, %v1725
    %v2749 = vadd.f32 %v2748, %v1726
    %v2750 = vadd.f32 %v2749, %v1727
    %v2751 = vadd.f32 %v2750, %v1728
    %v2752 = vadd.f32 %v2751, %v1729
    %v2753 = vadd.f32 %v2752, %v1730
    %v2754 = vadd.f32 %v2753, %v1731
    %v2755 = vadd.f32 %v2754, %v1732
    %v2756 = vadd.f32 %v2755, %v1733
    %v2757 = vadd.f32 %v2756, %v1734
    %v2758 = vadd.f32 %v2757, %v1735
    %v2759 = vadd.f32 %v2758, %v1736
    %v2760 = vadd.f32 %v2759, %v1737
    %v2761 = vadd.f32 %v2760, %v1738
    %v2762 = vadd.f32 %v2761, %v1739
    %v2763 = vadd.f32 %v2762, %v1740
    %v2764 = vadd.f32 %v2763, %v1741
    %v2765 = vadd.f32 %v2764, %v1742
    %v2766 = vadd.f32 %v2765, %v1743
    %v2767 = vadd.f32 %v2766, %v1744
    %v2768 = vadd.f32 %v2767, %v1745
    %v2769 = vadd.f32 %v2768, %v1746
    %v2770 = vadd.f32 %v2769, %v1747
    %v2771 = vadd.f32 %v2770, %v1748
    %v2772 = vadd.f32 %v2771, %v1749
    %v2773 = vadd.f32 %v2772, %v1750
    %v2774 = vadd.f32 %v2773, %v1751
    %v2775 = vadd.f32 %v2774, %v1752
    %v2776 = vadd.f32 %v2775, %v1753
    %v2777 = vadd.f32 %v2776, %v1754
    %v2778 = vadd.f32 %v2777, %v1755
    %v2779 = vadd.f32 %v2778, %v1756
    %v2780 = vadd.f32 %v2779, %v1757
    %v2781 = vadd.f32 %v2780, %v1758
    %v2782 = vadd.f32 %v2781, %v1759
    %v2783 = vadd.f32 %v2782, %v1760
    %v2784 = vadd.f32 %v2783, %v1761
    %v2785 = vadd.f32 %v2784, %v1762
    %v2786 = vadd.f32 %v2785, %v1763
    %v2787 = vadd.f32 %v2786, %v1764
    %v2788 = vadd.f32 %v2787, %v1765
    %v2789 = vadd.f32 %v2788, %v1766
    %v2790 = vadd.f32 %v2789, %v1767
    %v2791 = vadd.f32 %v2790, %v1768
    %v2792 = vadd.f32 %v2791, %v1769
    %v2793 = vadd.f32 %v2792, %v1770
    %v2794 = vadd.f32 %v2793, %v1771
    %v2795 = vadd.f32 %v2794, %v1772
    %v2796 = vadd.f32 %v2795, %v1773
    %v2797 = vadd.f32 %v2796, %v1774
    %v2798 = vadd.f32 %v2797, %v1775
    %v2799 = vadd.f32 %v2798, %v1776
    %v2800 = vadd.f32 %v2799, %v1777
    %v2801 = vadd.f32 %v2800, %v1778
    %v2802 = vadd.f32 %v2801, %v1779
    %v2803 = vadd.f32 %v2802, %v1780
    %v2804 = vadd.f32 %v2803, %v1781
    %v2805 = vadd.f32 %v2804, %v1782
    %v2806 = vadd.f32 %v2805, %v1783
    %v2807 = vadd.f32 %v2806, %v1784
    %v2808 = vadd.f32 %v2807, %v1785
    %v2809 = vadd.f32 %v2808, %v1786
    %v2810 = vadd.f32 %v2809, %v1787
    %v2811 = vadd.f32 %v2810, %v1788
    %v2812 = vadd.f32 %v2811, %v1789
    %v2813 = vadd.f32 %v2812, %v1790
    %v2814 = vadd.f32 %v2813, %v1791
    %v2815 = vadd.f32 %v2814, %v1792
    %v2816 = vadd.f32 %v2815, %v1793
    %v2817 = vadd.f32 %v2816, %v1794
    %v2818 = vadd.f32 %v2817, %v1795
    %v2819 = vadd.f32 %v2818, %v1796
    %v2820 = vadd.f32 %v2819, %v1797
    %v2821 = vadd.f32 %v2820, %v1798
    %v2822 = vadd.f32 %v2821, %v1799
    %v2823 = vadd.f32 %v2822, %v1800
    %v2824 = vadd.f32 %v2823, %v1801
    %v2825 = vadd.f32 %v2824, %v1802
    %v2826 = vadd.f32 %v2825, %v1803
    %v2827 = vadd.f32 %v2826, %v1804
    %v2828 = vadd.f32 %v2827, %v1805
    %v2829 = vadd.f32 %v2828, %v1806
    %v2830 = vadd.f32 %v2829, %v1807
    %v2831 = vadd.f32 %v2830, %v1808
    %v2832 = vadd.f32 %v2831, %v1809
    %v2833 = vadd.f32 %v2832, %v1810
    %v2834 = vadd.f32 %v2833, %v1811
    %v2835 = vadd.f32 %v2834, %v1812
    %v2836 = vadd.f32 %v2835, %v1813
    %v2837 = vadd.f32 %v2836, %v1814
    %v2838 = vadd.f32 %v2837, %v1815
    %v2839 = vadd.f32 %v2838, %v1816
    %v2840 = vadd.f32 %v2839, %v1817
    %v2841 = vadd.f32 %v2840, %v1818
    %v2842 = vadd.f32 %v2841, %v1819
    %v2843 = vadd.f32 %v2842, %v1820
    %v2844 = vadd.f32 %v2843, %v1821
    %v2845 = vadd.f32 %v2844, %v1822
    %v2846 = vadd.f32 %v2845, %v1823
    %v2847 = vadd.f32 %v2846, %v1824
    %v2848 = vadd.f32 %v2847, %v1825
    %v2849 = vadd.f32 %v2848, %v1826
    %v2850 = vadd.f32 %v2849, %v1827
    %v2851 = vadd.f32 %v2850, %v1828
    %v2852 = vadd.f32 %v2851, %v1829
    %v2853 = vadd.f32 %v2852, %v1830
    %v2854 = vadd.f32 %v2853, %v1831
    %v2855 = vadd.f32 %v2854, %v1832
    %v2856 = vadd.f32 %v2855, %v1833
    %v2857 = vadd.f32 %v2856, %v1834
    %v2858 = vadd.f32 %v2857, %v1835
    %v2859 = vadd.f32 %v2858, %v1836
    %v2860 = vadd.f32 %v2859, %v1837
    %v2861 = vadd.f32 %v2860, %v1838
    %v2862 = vadd.f32 %v2861, %v1839
    %v2863 = vadd.f32 %v2862, %v1840
    %v2864 = vadd.f32 %v2863, %v1841
    %v2865 = vadd.f32 %v2864, %v1842
    %v2866 = vadd.f32 %v2865, %v1843
    %v2867 = vadd.f32 %v2866, %v1844
    %v2868 = vadd.f32 %v2867, %v1845
    %v2869 = vadd.f32 %v2868, %v1846
    %v2870 = vadd.f32 %v2869, %v1847
    %v2871 = vadd.f32 %v2870, %v1848
    %v2872 = vadd.f32 %v2871, %v1849
    %v2873 = vadd.f32 %v2872, %v1850
    %v2874 = vadd.f32 %v2873, %v1851
    %v2875 = vadd.f32 %v2874, %v1852
    %v2876 = vadd.f32 %v2875, %v1853
    %v2877 = vadd.f32 %v2876, %v1854
    %v2878 = vadd.f32 %v2877, %v1855
    %v2879 = vadd.f32 %v2878, %v1856
    %v2880 = vadd.f32 %v2879, %v1857
    %v2881 = vadd.f32 %v2880, %v1858
    %v2882 = vadd.f32 %v2881, %v1859
    %v2883 = vadd.f32 %v2882, %v1860
    %v2884 = vadd.f32 %v2883, %v1861
    %v2885 = vadd.f32 %v2884, %v1862
    %v2886 = vadd.f32 %v2885, %v1863
    %v2887 = vadd.f32 %v2886, %v1864
    %v2888 = vadd.f32 %v2887, %v1865
    %v2889 = vadd.f32 %v2888, %v1866
    %v2890 = vadd.f32 %v2889, %v1867
    %v2891 = vadd.f32 %v2890, %v1868
    %v2892 = vadd.f32 %v2891, %v1869
    %v2893 = vadd.f32 %v2892, %v1870
    %v2894 = vadd.f32 %v2893, %v1871
    %v2895 = vadd.f32 %v2894, %v1872
    %v2896 = vadd.f32 %v2895, %v1873
    %v2897 = vadd.f32 %v2896, %v1874
    %v2898 = vadd.f32 %v2897, %v1875
    %v2899 = vadd.f32 %v2898, %v1876
    %v2900 = vadd.f32 %v2899, %v1877
    %v2901 = vadd.f32 %v2900, %v1878
    %v2902 = vadd.f32 %v2901, %v1879
    %v2903 = vadd.f32 %v2902, %v1880
    %v2904 = vadd.f32 %v2903, %v1881
    %v2905 = vadd.f32 %v2904, %v1882
    %v2906 = vadd.f32 %v2905, %v1883
    %v2907 = vadd.f32 %v2906, %v1884
    %v2908 = vadd.f32 %v2907, %v1885
    %v2909 = vadd.f32 %v2908, %v1886
    %v2910 = vadd.f32 %v2909, %v1887
    %v2911 = vadd.f32 %v2910, %v1888
    %v2912 = vadd.f32 %v2911, %v1889
    %v2913 = vadd.f32 %v2912, %v1890
    %v2914 = vadd.f32 %v2913, %v1891
    %v2915 = vadd.f32 %v2914, %v1892
    %v2916 = vadd.f32 %v2915, %v1893
    %v2917 = vadd.f32 %v2916, %v1894
    %v2918 = vadd.f32 %v2917, %v1895
    %v2919 = vadd.f32 %v2918, %v1896
    %v2920 = vadd.f32 %v2919, %v1897
    %v2921 = vadd.f32 %v2920, %v1898
    %v2922 = vadd.f32 %v2921, %v1899
    %v2923 = vadd.f32 %v2922, %v1900
    %v2924 = vadd.f32 %v2923, %v1901
    %v2925 = vadd.f32 %v2924, %v1902
    %v2926 = vadd.f32 %v2925, %v1903
    %v2927 = vadd.f32 %v2926, %v1904
    %v2928 = vadd.f32 %v2927, %v1905
    %v2929 = vadd.f32 %v2928, %v1906
    %v2930 = vadd.f32 %v2929, %v1907
    %v2931 = vadd.f32 %v2930, %v1908
    %v2932 = vadd.f32 %v2931, %v1909
    %v2933 = vadd.f32 %v2932, %v1910
    %v2934 = vadd.f32 %v2933, %v1911
    %v2935 = vadd.f32 %v2934, %v1912
    %v2936 = vadd.f32 %v2935, %v1913
    %v2937 = vadd.f32 %v2936, %v1914
    %v2938 = vadd.f32 %v2937, %v1915
    %v2939 = vadd.f32 %v2938, %v1916
    %v2940 = vadd.f32 %v2939, %v1917
    %v2941 = vadd.f32 %v2940, %v1918
    %v2942 = vadd.f32 %v2941, %v1919
    %v2943 = vadd.f32 %v2942, %v1920
    %v2944 = vadd.f32 %v2943, %v1921
    %v2945 = vadd.f32 %v2944, %v1922
    %v2946 = vadd.f32 %v2945, %v1923
    %v2947 = vadd.f32 %v2946, %v1924
    %v2948 = vadd.f32 %v2947, %v1925
    %v2949 = vadd.f32 %v2948, %v1926
    %v2950 = vadd.f32 %v2949, %v1927
    %v2951 = vadd.f32 %v2950, %v1928
    %v2952 = vadd.f32 %v2951, %v1929
    %v2953 = vadd.f32 %v2952, %v1930
    %v2954 = vadd.f32 %v2953, %v1931
    %v2955 = vadd.f32 %v2954, %v1932
    %v2956 = vadd.f32 %v2955, %v1933
    %v2957 = vadd.f32 %v2956, %v1934
    %v2958 = vadd.f32 %v2957, %v1935
    %v2959 = vadd.f32 %v2958, %v1936
    %v2960 = vadd.f32 %v2959, %v1937
    %v2961 = vadd.f32 %v2960, %v1938
    %v2962 = vadd.f32 %v2961, %v1939
    %v2963 = vadd.f32 %v2962, %v1940
    %v2964 = vadd.f32 %v2963, %v1941
    %v2965 = vadd.f32 %v2964, %v1942
    %v2966 = vadd.f32 %v2965, %v1943
    %v2967 = vadd.f32 %v2966, %v1944
    %v2968 = vadd.f32 %v2967, %v1945
    %v2969 = vadd.f32 %v2968, %v1946
    %v2970 = vadd.f32 %v2969, %v1947
    %v2971 = vadd.f32 %v2970, %v1948
    %v2972 = vadd.f32 %v2971, %v1949
    %v2973 = vadd.f32 %v2972, %v1950
    %v2974 = vadd.f32 %v2973, %v1951
    %v2975 = vadd.f32 %v2974, %v1952
    %v2976 = vadd.f32 %v2975, %v1953
    %v2977 = vadd.f32 %v2976, %v1954
    %v2978 = vadd.f32 %v2977, %v1955
    %v2979 = vadd.f32 %v2978, %v1956
    %v2980 = vadd.f32 %v2979, %v1957
    %v2981 = vadd.f32 %v2980, %v1958
    %v2982 = vadd.f32 %v2981, %v1959
    %v2983 = vadd.f32 %v2982, %v1960
    %v2984 = vadd.f32 %v2983, %v1961
    %v2985 = vadd.f32 %v2984, %v1962
    %v2986 = vadd.f32 %v2985, %v1963
    %v2987 = vadd.f32 %v2986, %v1964
    %v2988 = vadd.f32 %v2987, %v1965
    %v2989 = vadd.f32 %v2988, %v1966
    %v2990 = vadd.f32 %v2989, %v1967
    %v2991 = vadd.f32 %v2990, %v1968
    %v2992 = vadd.f32 %v2991, %v1969
    %v2993 = vadd.f32 %v2992, %v1970
    %v2994 = vadd.f32 %v2993, %v1971
    %v2995 = vadd.f32 %v2994, %v1972
    %v2996 = vadd.f32 %v2995, %v1973
    %v2997 = vadd.f32 %v2996, %v1974
    %v2998 = vadd.f32 %v2997, %v1975
    %v2999 = vadd.f32 %v2998, %v1976
    %v3000 = vadd.f32 %v2999, %v1977
    %v3001 = vadd.f32 %v3000, %v1978
    %v3002 = vadd.f32 %v3001, %v1979
    %v3003 = vadd.f32 %v3002, %v1980
    %v3004 = vadd.f32 %v3003, %v1981
    %v3005 = vadd.f32 %v3004, %v1982
    %v3006 = vadd.f32 %v3005, %v1983
    %v3007 = vadd.f32 %v3006, %v1984
    %v3008 = vadd.f32 %v3007, %v1985
    %v3009 = vadd.f32 %v3008, %v1986
    %v3010 = vadd.f32 %v3009, %v1987
    %v3011 = vadd.f32 %v3010, %v1988
    %v3012 = vadd.f32 %v3011, %v1989
    %v3013 = vadd.f32 %v3012, %v1990
    %v3014 = vadd.f32 %v3013, %v1991
    %v3015 = vadd.f32 %v3014, %v1992
    %v3016 = vadd.f32 %v3015, %v1993
    %v3017 = vadd.f32 %v3016, %v1994
    %v3018 = vadd.f32 %v3017, %v1995
    %v3019 = vadd.f32 %v3018, %v1996
    %v3020 = vadd.f32 %v3019, %v1997
    %v3021 = vadd.f32 %v3020, %v1998
    %v3022 = vadd.f32 %v3021, %v1999
    %v3023 = vadd.f32 %v3022, %v2000
    %v3024 = vadd.f32 %v3023, %v2001
    %v3025 = vadd.f32 %v3024, %v2002
    %v3026 = vadd.f32 %v3025, %v2003
    %v3027 = vadd.f32 %v3026, %v2004
    %v3028 = vadd.f32 %v3027, %v2005
    %v3029 = vadd.f32 %v3028, %v2006
    %v3030 = vadd.f32 %v3029, %v2007
    %v3031 = vadd.f32 %v3030, %v2008
    %v3032 = vadd.f32 %v3031, %v2009
    %v3033 = vadd.f32 %v3032, %v2010
    %v3034 = vadd.f32 %v3033, %v2011
    %v3035 = vadd.f32 %v3034, %v2012
    %v3036 = vadd.f32 %v3035, %v2013
    %v3037 = vadd.f32 %v3036, %v2014
    %v3038 = vadd.f32 %v3037, %v2015
    %v3039 = vadd.f32 %v3038, %v2016
    %v3040 = vadd.f32 %v3039, %v2017
    %v3041 = vadd.f32 %v3040, %v2018
    %v3042 = vadd.f32 %v3041, %v2019
    %v3043 = vadd.f32 %v3042, %v2020
    %v3044 = vadd.f32 %v3043, %v2021
    %v3045 = vadd.f32 %v3044, %v2022
    %v3046 = vadd.f32 %v3045, %v2023
    %v3047 = vadd.f32 %v3046, %v2024
    %v3048 = vadd.f32 %v3047, %v2025
    %v3049 = vadd.f32 %v3048, %v2026
    %v3050 = vadd.f32 %v3049, %v2027
    %v3051 = vadd.f32 %v3050, %v2028
    %v3052 = vadd.f32 %v3051, %v2029
    %v3053 = vadd.f32 %v3052, %v2030
    %v3054 = vadd.f32 %v3053, %v2031
    %v3055 = vadd.f32 %v3054, %v2032
    %v3056 = vadd.f32 %v3055, %v2033
    %v3057 = vadd.f32 %v3056, %v2034
    %v3058 = vadd.f32 %v3057, %v2035
    %v3059 = vadd.f32 %v3058, %v2036
    %v3060 = vadd.f32 %v3059, %v2037
    %v3061 = vadd.f32 %v3060, %v2038
    %v3062 = vadd.f32 %v3061, %v2039
    %v3063 = vadd.f32 %v3062, %v2040
    %v3064 = vadd.f32 %v3063, %v2041
    %v3065 = vadd.f32 %v3064, %v2042
    %v3066 = vadd.f32 %v3065, %v2043
    %v3067 = vadd.f32 %v3066, %v2044
    %v3068 = vadd.f32 %v3067, %v2045
    %v3069 = vadd.f32 %v3068, %v2046
    %v3070 = vadd.f32 %v3069, %v2047
    %v3071 = vadd.f32 %v3070, %v2048
    %v3072 = vadd.f32 %v3071, %v2049
    %v3073 = vadd.f32 %v3072, %v2050
    %v3074 = vadd.f32 %v3073, %v2051
    %v3075 = vadd.f32 %v3074, %v2052
    %v3076 = vadd.f32 %v3075, %v2053
    %v3077 = vadd.f32 %v3076, %v2054
    %v3078 = vadd.f32 %v3077, %v2055
    %v3079 = vadd.f32 %v3078, %v2056
    %v3080 = vadd.f32 %v3079, %v2057
    %v3081 = vadd.f32 %v3080, %v2058
    %v3082 = vadd.f32 %v3081, %v2059
    %v3083 = vadd.f32 %v3082, %v2060
    %v3084 = vadd.f32 %v3083, %v2061
    %v3085 = vadd.f32 %v3084, %v2062
    %v3086 = vadd.f32 %v3085, %v2063
    %v3087 = vadd.f32 %v3086, %v2064
    %v3088 = vadd.f32 %v3087, %v2065
    %v3089 = vadd.f32 %v3088, %v2066
    %v3090 = vadd.f32 %v3089, %v2067
    %v3091 = vadd.f32 %v3090, %v2068
    %v3092 = vadd.f32 %v3091, %v2069
    %v3093 = vadd.f32 %v3092, %v2070
    %v3094 = vadd.f32 %v3093, %v2071
    %v3095 = vadd.f32 %v3094, %v2072
    %v3096 = vadd.f32 %v3095, %v2073
    %v3097 = vadd.f32 %v3096, %v2074
    %v3098 = vadd.f32 %v3097, %v2075
    %v3099 = vadd.f32 %v3098, %v2076
    %v3100 = vadd.f32 %v3099, %v2077
    %v3101 = vadd.f32 %v3100, %v2078
    %v3102 = vadd.f32 %v3101, %v2079
    %v3103 = vadd.f32 %v3102, %v2080
    %v3104 = vadd.f32 %v3103, %v2081
    %v3105 = vadd.f32 %v3104, %v2082
    %v3106 = vadd.f32 %v3105, %v2083
    %v3107 = vadd.f32 %v3106, %v2084
    %v3108 = vadd.f32 %v3107, %v2085
    %v3109 = vadd.f32 %v3108, %v2086
    %v3110 = vadd.f32 %v1062, %v3109
    %3111 = vst [vmem:[#allocation2] sm:$0xff] %v3110
    // Predicated region
    $region14: #{tpu_custom_call.1} parent=1 // pred_check
      %p3112 = pneg %p33
    $region15: #{tpu_custom_call.1} parent=1 // pred_check_branch
      %3114 = sbr.rel (%p3112) target = $region17
    $region16: #{tpu_custom_call.1} parent=1 // pred_region
      %v3115 = vld [vmem:[#allocation2] sm:$0xff]
      %3116 = vadd.xlane.f32.xlu0 %v3115
      %v3117 = vpop.xlane.xlu0 %3116
      %v3118 = vrot.slane %v3117, 4
      %v3119 = vadd.f32 %v3117, %v3118
      %v3120 = vrot.slane %v3119, 2
      %v3121 = vadd.f32 %v3119, %v3120
      %v3122 = vrot.slane %v3121, 1
      %v3123 = vadd.f32 %v3121, %v3122
      %s3124 = vtos %v3123
      %s3125 = scalar_lea.smem [#allocation6], 0
      %3126 = sst [smem:[%s3125]] %s3124
    $region17: #{tpu_custom_call.1} parent=1 // pred_fallthru
      _
    // Predicated region
    $region18: #{tpu_custom_call.1} parent=1 // pred_check
      _
    $region19: #{tpu_custom_call.1} parent=1 // pred_check_branch
      %3128 = sbr.rel (0) target = $region21
    $region20: #{tpu_custom_call.1} parent=1 // pred_region
      %s3130 = ssub.s32 16, 16
      %3131 = vsyncadd [#allocation5], %s3130
      %3134 = dma.smem_to_hbm [#allocation6], 16, %s1, [#allocation5]
    $region21: #{tpu_custom_call.1} parent=1 // pred_fallthru
      _
    // Predicated region
    $region22: #{tpu_custom_call.1} parent=1 // pred_check
      _
    $region23: #{tpu_custom_call.1} parent=1 // pred_check_branch
      %3136 = sbr.rel (0) target = $region25
    $region24: #{tpu_custom_call.1} parent=1 // pred_region
      %3137 = dma.done [#allocation5], 16
    $region25: #{tpu_custom_call.1} parent=1 // pred_fallthru
      _
    %3138 = sfence
    %3139 = vsyncpa [#allocation4], 1
    %3140 = vsyncpa [#allocation5], 1

</llo_original>
